<compile_context>
chip_gen: v7x
topology: tpu7x:2x2x1
jax: 0.10.0
libtpu: 0.0.40
codegen_flags: <defaults>
</compile_context>

<pallas_src>
import numpy as np
import jax
import jax.numpy as jnp
from jax.experimental import pallas as pl
from jax.experimental.pallas import tpu as pltpu


# ------------------------- weight preprocessing (wrapper, weights-only) ------

def _pool_band_selector(K, w_cols, pooled_w, parity):
    """A[kw, w, pw] = 1 iff w == 2*pw + parity + kw (0/1 indicator, numpy)."""
    A = np.zeros((K, w_cols, pooled_w), np.float32)
    for kw in range(K):
        for pw in range(pooled_w):
            w = 2 * pw + parity + kw
            if w < w_cols:
                A[kw, w, pw] = 1.0
    return A


def _conv_pool_weights(w_hwio, w_cols, pooled_w):
    """Banded matmul weights with the column half of the 2x2 pool folded in.

    Returns (T_e, T_o), each [K, Cin*w_cols, Cout*pooled_w] with
      T_e[kh, ci*w_cols + w, co*pooled_w + pw] = w[kh, w - 2*pw,     ci, co]
      T_o[kh, ci*w_cols + w, co*pooled_w + pw] = w[kh, w - 2*pw - 1, ci, co]
    (zero outside the band)."""
    K, _, Cin, Cout = w_hwio.shape

    def mk(parity):
        A = jnp.asarray(_pool_band_selector(K, w_cols, pooled_w, parity))
        T = jnp.einsum('kwp,hkio->hiwop', A, w_hwio)     # [K,Cin,w_cols,Cout,pw]
        return T.reshape(K, Cin * w_cols, Cout * pooled_w)

    return mk(0), mk(1)


def _row_pool_selectors_conv1(BB, PH1, PH1P, OH1):
    """Block-diagonal even/odd row selectors producing a PADDED per-image
    layout: R[p, b*PH1P + u, b*OH1 + 2u + p] = 1 for u < PH1."""
    R = np.zeros((2, BB * PH1P, BB * OH1), np.float32)
    for b in range(BB):
        for u in range(PH1):
            R[0, b * PH1P + u, b * OH1 + 2 * u] = 1.0
            R[1, b * PH1P + u, b * OH1 + 2 * u + 1] = 1.0
    return jnp.asarray(R)


def _row_pool_selectors_conv2(BB, PH2, OH2):
    """Per-pooled-row selectors: R[p, u, b, b*OH2 + 2u + p] = 1."""
    R = np.zeros((2, PH2, BB, BB * OH2), np.float32)
    for b in range(BB):
        for u in range(PH2):
            R[0, u, b, b * OH2 + 2 * u] = 1.0
            R[1, u, b, b * OH2 + 2 * u + 1] = 1.0
    return jnp.asarray(R)


# ------------------------------- fused kernel --------------------------------

def _make_convnet_kernel(K, OH1, OH2, PH1P, PH2, BB, W, activation_layer):
    """Whole-network kernel for BB images per grid step."""

    def kernel(x_ref, t1e_ref, t1o_ref, r1_ref, b1_ref,
               t2e_ref, t2o_ref, r2_ref, b2_ref,
               w1blk_ref, bf1_ref, wf2_ref, bf2_ref, wf3_ref, bf3_ref,
               out_ref):
        # ---- conv1: sum over filter rows; even/odd pooled columns ------------
        acc_e = acc_o = None
        for kh in range(K):
            xs = x_ref[:, kh:kh + OH1, :].reshape(BB * OH1, W)    # [BB*OH1, W]
            pe = jnp.dot(xs, t1e_ref[kh], preferred_element_type=jnp.float32)
            po = jnp.dot(xs, t1o_ref[kh], preferred_element_type=jnp.float32)
            acc_e = pe if acc_e is None else acc_e + pe
            acc_o = po if acc_o is None else acc_o + po
        cmax1 = jnp.maximum(acc_e, acc_o)                         # [BB*OH1, C0*PW1]
        # row half of the 2x2 max-pool (block-diag 0/1 matmuls, padded rows)
        p1 = jnp.maximum(
            jnp.dot(r1_ref[0], cmax1, preferred_element_type=jnp.float32),
            jnp.dot(r1_ref[1], cmax1, preferred_element_type=jnp.float32))
        y1 = jnp.maximum(p1 + b1_ref[...], 0.0)                   # [BB*PH1P, C0*PW1]
        L1 = y1.shape[-1]
        y1_3d = y1.reshape(BB, PH1P, L1)

        # ---- conv2 (same structure; input columns are ci-blocked) ------------
        acc2_e = acc2_o = None
        for kh in range(K):
            ys = y1_3d[:, kh:kh + OH2, :].reshape(BB * OH2, L1)   # [BB*OH2, C0*PW1]
            pe = jnp.dot(ys, t2e_ref[kh], preferred_element_type=jnp.float32)
            po = jnp.dot(ys, t2o_ref[kh], preferred_element_type=jnp.float32)
            acc2_e = pe if acc2_e is None else acc2_e + pe
            acc2_o = po if acc2_o is None else acc2_o + po
        cmax2 = jnp.maximum(acc2_e, acc2_o)                       # [BB*OH2, C1*PW2]

        # ---- conv2 row-pool fused into fc1 accumulation ----------------------
        h1 = None
        for u in range(PH2):
            xu = jnp.maximum(
                jnp.maximum(
                    jnp.dot(r2_ref[0, u], cmax2, preferred_element_type=jnp.float32),
                    jnp.dot(r2_ref[1, u], cmax2, preferred_element_type=jnp.float32))
                + b2_ref[...], 0.0)                               # [BB, C1*PW2]
            c = jnp.dot(xu, w1blk_ref[u], preferred_element_type=jnp.float32)
            h1 = c if h1 is None else h1 + c
        h1 = jnp.maximum(h1 + bf1_ref[...], 0.0)                  # [BB, D1]
        if activation_layer == 'fc1':
            out_ref[...] = h1
            return

        h2 = jnp.maximum(
            jnp.dot(h1, wf2_ref[...], preferred_element_type=jnp.float32)
            + bf2_ref[...], 0.0)
        if activation_layer == 'fc2':
            out_ref[...] = h2
            return

        z = jnp.dot(h2, wf3_ref[...], preferred_element_type=jnp.float32) + bf3_ref[...]
        if activation_layer == 'fc3':
            out_ref[...] = z
            return

        m = jnp.max(z, axis=-1, keepdims=True)
        e = jnp.exp(z - m)
        lse = jnp.log(jnp.sum(e, axis=-1, keepdims=True)) + m
        out_ref[...] = z - lse                                    # log_softmax

    return kernel


# --------------------------------- forward -----------------------------------

def convnet_forward(x_nchw, params, filter_size, activation_layer=None):
    B, Cin, H, W = x_nchw.shape
    assert Cin == 1, "conv1 expects a single input channel"
    K = filter_size
    C0 = params['w_conv1'].shape[-1]
    C1 = params['w_conv2'].shape[-1]
    D1 = params['w_fc1'].shape[-1]
    D2 = params['w_fc2'].shape[-1]
    NC = params['w_fc3'].shape[-1]

    OH1, OW1 = H - K + 1, W - K + 1
    PH1, PW1 = OH1 // 2, OW1 // 2
    OH2, OW2 = PH1 - K + 1, PW1 - K + 1
    PH2, PW2 = OH2 // 2, OW2 // 2
    assert OH1 % 2 == 0 and OW1 % 2 == 0 and OH2 % 2 == 0 and OW2 % 2 == 0
    assert params['w_fc1'].shape[0] == C1 * PH2 * PW2

    # batch-blocking: BB images per grid step; pad batch & image rows.
    BB = int(min(8, B))
    B_pad = ((B + BB - 1) // BB) * BB
    HP = ((H + 7) // 8) * 8                  # sublane-aligned padded image rows
    PH1P = ((PH1 + 7) // 8) * 8              # sublane-aligned padded pool-1 rows

    x = x_nchw.reshape(B, H, W).astype(jnp.float32)
    x = jnp.pad(x, ((0, B_pad - B), (0, HP - H), (0, 0)))

    # ---- weight-only preprocessing (batch-independent) ----
    T1e, T1o = _conv_pool_weights(params['w_conv1'].astype(jnp.float32), W, PW1)
    T2e, T2o = _conv_pool_weights(params['w_conv2'].astype(jnp.float32), PW1, PW2)
    b1rep = jnp.repeat(params['b_conv1'].reshape(-1).astype(jnp.float32), PW1)[None, :]
    b2rep = jnp.repeat(params['b_conv2'].reshape(-1).astype(jnp.float32), PW2)[None, :]
    # fc1 rows arrive in PyTorch's NCHW .view() flatten order (c, h, w); regroup
    # to the kernel's (pooled-row u, channel-major column c*PW2+w) layout.
    W1blk = (params['w_fc1'].astype(jnp.float32)
             .reshape(C1, PH2, PW2, D1).transpose(1, 0, 2, 3)
             .reshape(PH2, C1 * PW2, D1))
    bf1 = params['b_fc1'].reshape(1, D1).astype(jnp.float32)
    Wf2 = params['w_fc2'].astype(jnp.float32)
    bf2 = params['b_fc2'].reshape(1, D2).astype(jnp.float32)
    Wf3 = params['w_fc3'].astype(jnp.float32)
    bf3 = params['b_fc3'].reshape(1, NC).astype(jnp.float32)

    # 0/1 pool-row selectors (depend only on the static batch block size BB)
    R1 = _row_pool_selectors_conv1(BB, PH1, PH1P, OH1)   # [2, BB*PH1P, BB*OH1]
    R2 = _row_pool_selectors_conv2(BB, PH2, OH2)         # [2, PH2, BB, BB*OH2]

    out_dim = {None: NC, 'fc1': D1, 'fc2': D2, 'fc3': NC}[activation_layer]
    kernel = _make_convnet_kernel(K, OH1, OH2, PH1P, PH2, BB, W, activation_layer)

    def _full(a):
        shp = tuple(a.shape)
        return pl.BlockSpec(shp, lambda b, _n=len(shp): (0,) * _n)

    out = pl.pallas_call(
        kernel,
        out_shape=jax.ShapeDtypeStruct((B_pad, out_dim), jnp.float32),
        grid=(B_pad // BB,),
        in_specs=[pl.BlockSpec((BB, HP, W), lambda b: (b, 0, 0)),
                  _full(T1e), _full(T1o), _full(R1), _full(b1rep),
                  _full(T2e), _full(T2o), _full(R2), _full(b2rep),
                  _full(W1blk), _full(bf1),
                  _full(Wf2), _full(bf2), _full(Wf3), _full(bf3)],
        out_specs=pl.BlockSpec((BB, out_dim), lambda b: (b, 0)),
        compiler_params=pltpu.CompilerParams(
            dimension_semantics=("parallel",)),
    )(x, T1e, T1o, R1, b1rep, T2e, T2o, R2, b2rep,
      W1blk, bf1, Wf2, bf2, Wf3, bf3)
    return out[:B]


# --------------------------- Parameter init ----------------------------------

def init_params(key, num_classes, num_channels, dim_hidden, filter_size):
    c0, c1 = num_channels
    d0, d1 = dim_hidden
    K = filter_size
    ks = jax.random.split(key, 5)

    def w(k, shape, fan_in):
        return jax.random.normal(k, shape, jnp.float32) / np.sqrt(fan_in)

    return {
        'w_conv1': w(ks[0], (K, K, 1, c0), K * K * 1),
        'b_conv1': jnp.full((c0,), 0.01, jnp.float32),
        'w_conv2': w(ks[1], (K, K, c0, c1), K * K * c0),
        'b_conv2': jnp.full((c1,), 0.01, jnp.float32),
        'w_fc1':   w(ks[2], (c1 * 4 * 4, d0), c1 * 4 * 4),
        'b_fc1':   jnp.full((d0,), 0.01, jnp.float32),
        'w_fc2':   w(ks[3], (d0, d1), d0),
        'b_fc2':   jnp.full((d1,), 0.01, jnp.float32),
        'w_fc3':   w(ks[4], (d1, num_classes), d1),
        'b_fc3':   jnp.full((num_classes,), 0.01, jnp.float32),
    }


# ------------------------- Pure-JAX reference ---------------------------------

def reference_forward(x_nchw, params):
    x = jnp.transpose(x_nchw, (0, 2, 3, 1)).astype(jnp.float32)

    def conv_block(x, w, b):
        y = jax.lax.conv_general_dilated(
            x, w, (1, 1), 'VALID',
            dimension_numbers=('NHWC', 'HWIO', 'NHWC')) + b.reshape(1, 1, 1, -1)
        y = jnp.maximum(y, 0.0)
        return jax.lax.reduce_window(y, -jnp.inf, jax.lax.max,
                                     (1, 2, 2, 1), (1, 2, 2, 1), 'VALID')

    x = conv_block(x, params['w_conv1'], params['b_conv1'])
    x = conv_block(x, params['w_conv2'], params['b_conv2'])
    # PyTorch x.view(-1, C*H*W) flattens in NCHW (c, h, w) order.
    xf = jnp.transpose(x, (0, 3, 1, 2)).reshape(x.shape[0], -1)
    h1 = jnp.maximum(xf @ params['w_fc1'] + params['b_fc1'], 0.0)
    h2 = jnp.maximum(h1 @ params['w_fc2'] + params['b_fc2'], 0.0)
    z = h2 @ params['w_fc3'] + params['b_fc3']
    return jax.nn.log_softmax(z, axis=-1)


# ---------------------------------- Main --------------------------------------

if __name__ == "__main__":
    NUM_CLASSES = 10
    NUM_CHANNELS = (4, 8)
    DIM_HIDDEN = (32, 16)
    FILTER_SIZE = 5
    BATCH = 2

    key = jax.random.PRNGKey(0)
    pk, xk = jax.random.split(key)
    params = init_params(pk, NUM_CLASSES, NUM_CHANNELS, DIM_HIDDEN, FILTER_SIZE)

    # MNIST-like input: NCHW, 1 channel, 28x28 (implied by fc1 = C1*4*4, K=5).
    x = jax.random.normal(xk, (BATCH, 1, 28, 28), jnp.float32)

    fwd = jax.jit(convnet_forward,
                  static_argnames=('filter_size', 'activation_layer'))
    out = fwd(x, params, filter_size=FILTER_SIZE, activation_layer=None)
    out = jax.block_until_ready(out)

    assert out.shape == (BATCH, NUM_CLASSES) and out.dtype == jnp.float32

    ref = reference_forward(x, params)
    np.testing.assert_allclose(np.asarray(out), np.asarray(ref),
                               atol=1e-4, rtol=1e-4)
    print("KERNEL_OK")
</pallas_src>

<mosaic_0001>
module attributes {stable_mosaic.version = 11 : i64} {
  func.func @kernel(%arg0: i32, %arg1: memref<2x32x28xf32, #tpu.memory_space<vmem>>, %arg2: memref<5x28x48xf32, #tpu.memory_space<vmem>>, %arg3: memref<5x28x48xf32, #tpu.memory_space<vmem>>, %arg4: memref<2x32x48xf32, #tpu.memory_space<vmem>>, %arg5: memref<1x48xf32, #tpu.memory_space<vmem>>, %arg6: memref<5x48x32xf32, #tpu.memory_space<vmem>>, %arg7: memref<5x48x32xf32, #tpu.memory_space<vmem>>, %arg8: memref<2x4x2x16xf32, #tpu.memory_space<vmem>>, %arg9: memref<1x32xf32, #tpu.memory_space<vmem>>, %arg10: memref<4x32x32xf32, #tpu.memory_space<vmem>>, %arg11: memref<1x32xf32, #tpu.memory_space<vmem>>, %arg12: memref<32x16xf32, #tpu.memory_space<vmem>>, %arg13: memref<1x16xf32, #tpu.memory_space<vmem>>, %arg14: memref<16x10xf32, #tpu.memory_space<vmem>>, %arg15: memref<1x10xf32, #tpu.memory_space<vmem>>, %arg16: memref<2x10xf32, #tpu.memory_space<vmem>>) attributes {dimension_semantics = [#tpu.dimension_semantics<parallel>], iteration_bounds = array<i64: 1>, scalar_prefetch = 0 : i64, scratch_operands = 0 : i64, tpu.core_type = #tpu.core_type<tc>, window_params = [{transform_indices = @transform_0, window_bounds = array<i64: 2, 32, 28>}, {pipeline_mode = #tpu.pipeline_mode<synchronous>, transform_indices = @transform_1, window_bounds = array<i64: 5, 28, 48>}, {pipeline_mode = #tpu.pipeline_mode<synchronous>, transform_indices = @transform_2, window_bounds = array<i64: 5, 28, 48>}, {pipeline_mode = #tpu.pipeline_mode<synchronous>, transform_indices = @transform_3, window_bounds = array<i64: 2, 32, 48>}, {pipeline_mode = #tpu.pipeline_mode<synchronous>, transform_indices = @transform_4, window_bounds = array<i64: 1, 48>}, {pipeline_mode = #tpu.pipeline_mode<synchronous>, transform_indices = @transform_5, window_bounds = array<i64: 5, 48, 32>}, {pipeline_mode = #tpu.pipeline_mode<synchronous>, transform_indices = @transform_6, window_bounds = array<i64: 5, 48, 32>}, {pipeline_mode = #tpu.pipeline_mode<synchronous>, transform_indices = @transform_7, window_bounds = array<i64: 2, 4, 2, 16>}, {pipeline_mode = #tpu.pipeline_mode<synchronous>, transform_indices = @transform_8, window_bounds = array<i64: 1, 32>}, {pipeline_mode = #tpu.pipeline_mode<synchronous>, transform_indices = @transform_9, window_bounds = array<i64: 4, 32, 32>}, {pipeline_mode = #tpu.pipeline_mode<synchronous>, transform_indices = @transform_10, window_bounds = array<i64: 1, 32>}, {pipeline_mode = #tpu.pipeline_mode<synchronous>, transform_indices = @transform_11, window_bounds = array<i64: 32, 16>}, {pipeline_mode = #tpu.pipeline_mode<synchronous>, transform_indices = @transform_12, window_bounds = array<i64: 1, 16>}, {pipeline_mode = #tpu.pipeline_mode<synchronous>, transform_indices = @transform_13, window_bounds = array<i64: 16, 10>}, {pipeline_mode = #tpu.pipeline_mode<synchronous>, transform_indices = @transform_14, window_bounds = array<i64: 1, 10>}, {transform_indices = @transform_15, window_bounds = array<i64: 2, 10>}]} {
    %c0 = arith.constant 0 : index
    %c0_0 = arith.constant 0 : index
    %c0_1 = arith.constant 0 : index
    %0 = vector.load %arg1[%c0, %c0_0, %c0_1] : memref<2x32x28xf32, #tpu.memory_space<vmem>>, vector<2x24x28xf32>
    %1 = vector.shape_cast %0 : vector<2x24x28xf32> to vector<48x28xf32>
    %c0_2 = arith.constant 0 : index
    %c0_3 = arith.constant 0 : index
    %c0_4 = arith.constant 0 : index
    %2 = vector.load %arg2[%c0_2, %c0_3, %c0_4] : memref<5x28x48xf32, #tpu.memory_space<vmem>>, vector<1x28x48xf32>
    %3 = vector.shape_cast %2 : vector<1x28x48xf32> to vector<28x48xf32>
    %cst = arith.constant dense<0.000000e+00> : vector<48x48xf32>
    %4 = tpu.matmul %1, %3, %cst {dimension_numbers = #tpu.dot_dimension_numbers<[1], [0], [0], [1], [0, 0, 1, 1], [], []>} : vector<48x28xf32>, vector<28x48xf32>, vector<48x48xf32> -> vector<48x48xf32>
    %c0_5 = arith.constant 0 : index
    %c0_6 = arith.constant 0 : index
    %c0_7 = arith.constant 0 : index
    %5 = vector.load %arg3[%c0_5, %c0_6, %c0_7] : memref<5x28x48xf32, #tpu.memory_space<vmem>>, vector<1x28x48xf32>
    %6 = vector.shape_cast %5 : vector<1x28x48xf32> to vector<28x48xf32>
    %cst_8 = arith.constant dense<0.000000e+00> : vector<48x48xf32>
    %7 = tpu.matmul %1, %6, %cst_8 {dimension_numbers = #tpu.dot_dimension_numbers<[1], [0], [0], [1], [0, 0, 1, 1], [], []>} : vector<48x28xf32>, vector<28x48xf32>, vector<48x48xf32> -> vector<48x48xf32>
    %c0_9 = arith.constant 0 : index
    %c1 = arith.constant 1 : index
    %c0_10 = arith.constant 0 : index
    %8 = vector.load %arg1[%c0_9, %c1, %c0_10] : memref<2x32x28xf32, #tpu.memory_space<vmem>>, vector<2x24x28xf32>
    %9 = vector.shape_cast %8 : vector<2x24x28xf32> to vector<48x28xf32>
    %c1_11 = arith.constant 1 : index
    %c0_12 = arith.constant 0 : index
    %c0_13 = arith.constant 0 : index
    %10 = vector.load %arg2[%c1_11, %c0_12, %c0_13] : memref<5x28x48xf32, #tpu.memory_space<vmem>>, vector<1x28x48xf32>
    %11 = vector.shape_cast %10 : vector<1x28x48xf32> to vector<28x48xf32>
    %cst_14 = arith.constant dense<0.000000e+00> : vector<48x48xf32>
    %12 = tpu.matmul %9, %11, %cst_14 {dimension_numbers = #tpu.dot_dimension_numbers<[1], [0], [0], [1], [0, 0, 1, 1], [], []>} : vector<48x28xf32>, vector<28x48xf32>, vector<48x48xf32> -> vector<48x48xf32>
    %c1_15 = arith.constant 1 : index
    %c0_16 = arith.constant 0 : index
    %c0_17 = arith.constant 0 : index
    %13 = vector.load %arg3[%c1_15, %c0_16, %c0_17] : memref<5x28x48xf32, #tpu.memory_space<vmem>>, vector<1x28x48xf32>
    %14 = vector.shape_cast %13 : vector<1x28x48xf32> to vector<28x48xf32>
    %cst_18 = arith.constant dense<0.000000e+00> : vector<48x48xf32>
    %15 = tpu.matmul %9, %14, %cst_18 {dimension_numbers = #tpu.dot_dimension_numbers<[1], [0], [0], [1], [0, 0, 1, 1], [], []>} : vector<48x28xf32>, vector<28x48xf32>, vector<48x48xf32> -> vector<48x48xf32>
    %16 = arith.addf %4, %12 : vector<48x48xf32>
    %17 = arith.addf %7, %15 : vector<48x48xf32>
    %c0_19 = arith.constant 0 : index
    %c2 = arith.constant 2 : index
    %c0_20 = arith.constant 0 : index
    %18 = vector.load %arg1[%c0_19, %c2, %c0_20] : memref<2x32x28xf32, #tpu.memory_space<vmem>>, vector<2x24x28xf32>
    %19 = vector.shape_cast %18 : vector<2x24x28xf32> to vector<48x28xf32>
    %c2_21 = arith.constant 2 : index
    %c0_22 = arith.constant 0 : index
    %c0_23 = arith.constant 0 : index
    %20 = vector.load %arg2[%c2_21, %c0_22, %c0_23] : memref<5x28x48xf32, #tpu.memory_space<vmem>>, vector<1x28x48xf32>
    %21 = vector.shape_cast %20 : vector<1x28x48xf32> to vector<28x48xf32>
    %cst_24 = arith.constant dense<0.000000e+00> : vector<48x48xf32>
    %22 = tpu.matmul %19, %21, %cst_24 {dimension_numbers = #tpu.dot_dimension_numbers<[1], [0], [0], [1], [0, 0, 1, 1], [], []>} : vector<48x28xf32>, vector<28x48xf32>, vector<48x48xf32> -> vector<48x48xf32>
    %c2_25 = arith.constant 2 : index
    %c0_26 = arith.constant 0 : index
    %c0_27 = arith.constant 0 : index
    %23 = vector.load %arg3[%c2_25, %c0_26, %c0_27] : memref<5x28x48xf32, #tpu.memory_space<vmem>>, vector<1x28x48xf32>
    %24 = vector.shape_cast %23 : vector<1x28x48xf32> to vector<28x48xf32>
    %cst_28 = arith.constant dense<0.000000e+00> : vector<48x48xf32>
    %25 = tpu.matmul %19, %24, %cst_28 {dimension_numbers = #tpu.dot_dimension_numbers<[1], [0], [0], [1], [0, 0, 1, 1], [], []>} : vector<48x28xf32>, vector<28x48xf32>, vector<48x48xf32> -> vector<48x48xf32>
    %26 = arith.addf %16, %22 : vector<48x48xf32>
    %27 = arith.addf %17, %25 : vector<48x48xf32>
    %c0_29 = arith.constant 0 : index
    %c3 = arith.constant 3 : index
    %c0_30 = arith.constant 0 : index
    %28 = vector.load %arg1[%c0_29, %c3, %c0_30] : memref<2x32x28xf32, #tpu.memory_space<vmem>>, vector<2x24x28xf32>
    %29 = vector.shape_cast %28 : vector<2x24x28xf32> to vector<48x28xf32>
    %c3_31 = arith.constant 3 : index
    %c0_32 = arith.constant 0 : index
    %c0_33 = arith.constant 0 : index
    %30 = vector.load %arg2[%c3_31, %c0_32, %c0_33] : memref<5x28x48xf32, #tpu.memory_space<vmem>>, vector<1x28x48xf32>
    %31 = vector.shape_cast %30 : vector<1x28x48xf32> to vector<28x48xf32>
    %cst_34 = arith.constant dense<0.000000e+00> : vector<48x48xf32>
    %32 = tpu.matmul %29, %31, %cst_34 {dimension_numbers = #tpu.dot_dimension_numbers<[1], [0], [0], [1], [0, 0, 1, 1], [], []>} : vector<48x28xf32>, vector<28x48xf32>, vector<48x48xf32> -> vector<48x48xf32>
    %c3_35 = arith.constant 3 : index
    %c0_36 = arith.constant 0 : index
    %c0_37 = arith.constant 0 : index
    %33 = vector.load %arg3[%c3_35, %c0_36, %c0_37] : memref<5x28x48xf32, #tpu.memory_space<vmem>>, vector<1x28x48xf32>
    %34 = vector.shape_cast %33 : vector<1x28x48xf32> to vector<28x48xf32>
    %cst_38 = arith.constant dense<0.000000e+00> : vector<48x48xf32>
    %35 = tpu.matmul %29, %34, %cst_38 {dimension_numbers = #tpu.dot_dimension_numbers<[1], [0], [0], [1], [0, 0, 1, 1], [], []>} : vector<48x28xf32>, vector<28x48xf32>, vector<48x48xf32> -> vector<48x48xf32>
    %36 = arith.addf %26, %32 : vector<48x48xf32>
    %37 = arith.addf %27, %35 : vector<48x48xf32>
    %c0_39 = arith.constant 0 : index
    %c4 = arith.constant 4 : index
    %c0_40 = arith.constant 0 : index
    %38 = vector.load %arg1[%c0_39, %c4, %c0_40] : memref<2x32x28xf32, #tpu.memory_space<vmem>>, vector<2x24x28xf32>
    %39 = vector.shape_cast %38 : vector<2x24x28xf32> to vector<48x28xf32>
    %c4_41 = arith.constant 4 : index
    %c0_42 = arith.constant 0 : index
    %c0_43 = arith.constant 0 : index
    %40 = vector.load %arg2[%c4_41, %c0_42, %c0_43] : memref<5x28x48xf32, #tpu.memory_space<vmem>>, vector<1x28x48xf32>
    %41 = vector.shape_cast %40 : vector<1x28x48xf32> to vector<28x48xf32>
    %cst_44 = arith.constant dense<0.000000e+00> : vector<48x48xf32>
    %42 = tpu.matmul %39, %41, %cst_44 {dimension_numbers = #tpu.dot_dimension_numbers<[1], [0], [0], [1], [0, 0, 1, 1], [], []>} : vector<48x28xf32>, vector<28x48xf32>, vector<48x48xf32> -> vector<48x48xf32>
    %c4_45 = arith.constant 4 : index
    %c0_46 = arith.constant 0 : index
    %c0_47 = arith.constant 0 : index
    %43 = vector.load %arg3[%c4_45, %c0_46, %c0_47] : memref<5x28x48xf32, #tpu.memory_space<vmem>>, vector<1x28x48xf32>
    %44 = vector.shape_cast %43 : vector<1x28x48xf32> to vector<28x48xf32>
    %cst_48 = arith.constant dense<0.000000e+00> : vector<48x48xf32>
    %45 = tpu.matmul %39, %44, %cst_48 {dimension_numbers = #tpu.dot_dimension_numbers<[1], [0], [0], [1], [0, 0, 1, 1], [], []>} : vector<48x28xf32>, vector<28x48xf32>, vector<48x48xf32> -> vector<48x48xf32>
    %46 = arith.addf %36, %42 : vector<48x48xf32>
    %47 = arith.addf %37, %45 : vector<48x48xf32>
    %48 = arith.maximumf %46, %47 : vector<48x48xf32>
    %c0_49 = arith.constant 0 : index
    %c0_50 = arith.constant 0 : index
    %c0_51 = arith.constant 0 : index
    %49 = vector.load %arg4[%c0_49, %c0_50, %c0_51] : memref<2x32x48xf32, #tpu.memory_space<vmem>>, vector<1x32x48xf32>
    %50 = vector.shape_cast %49 : vector<1x32x48xf32> to vector<32x48xf32>
    %cst_52 = arith.constant dense<0.000000e+00> : vector<32x48xf32>
    %51 = tpu.matmul %50, %48, %cst_52 {dimension_numbers = #tpu.dot_dimension_numbers<[1], [0], [0], [1], [0, 0, 1, 1], [], []>} : vector<32x48xf32>, vector<48x48xf32>, vector<32x48xf32> -> vector<32x48xf32>
    %c1_53 = arith.constant 1 : index
    %c0_54 = arith.constant 0 : index
    %c0_55 = arith.constant 0 : index
    %52 = vector.load %arg4[%c1_53, %c0_54, %c0_55] : memref<2x32x48xf32, #tpu.memory_space<vmem>>, vector<1x32x48xf32>
    %53 = vector.shape_cast %52 : vector<1x32x48xf32> to vector<32x48xf32>
    %cst_56 = arith.constant dense<0.000000e+00> : vector<32x48xf32>
    %54 = tpu.matmul %53, %48, %cst_56 {dimension_numbers = #tpu.dot_dimension_numbers<[1], [0], [0], [1], [0, 0, 1, 1], [], []>} : vector<32x48xf32>, vector<48x48xf32>, vector<32x48xf32> -> vector<32x48xf32>
    %55 = arith.maximumf %51, %54 : vector<32x48xf32>
    %c0_57 = arith.constant 0 : index
    %c0_58 = arith.constant 0 : index
    %56 = vector.load %arg5[%c0_57, %c0_58] : memref<1x48xf32, #tpu.memory_space<vmem>>, vector<1x48xf32>
    %57 = vector.broadcast %56 : vector<1x48xf32> to vector<32x48xf32>
    %58 = arith.addf %55, %57 : vector<32x48xf32>
    %cst_59 = arith.constant 0.000000e+00 : f32
    %59 = vector.broadcast %cst_59 : f32 to vector<32x48xf32>
    %60 = arith.maximumf %58, %59 : vector<32x48xf32>
    %61 = vector.shape_cast %60 : vector<32x48xf32> to vector<2x16x48xf32>
    %62 = vector.extract_strided_slice %61 {offsets = [0, 0, 0], sizes = [2, 8, 48], strides = [1, 1, 1]} : vector<2x16x48xf32> to vector<2x8x48xf32>
    %63 = vector.shape_cast %62 : vector<2x8x48xf32> to vector<16x48xf32>
    %c0_60 = arith.constant 0 : index
    %c0_61 = arith.constant 0 : index
    %c0_62 = arith.constant 0 : index
    %64 = vector.load %arg6[%c0_60, %c0_61, %c0_62] : memref<5x48x32xf32, #tpu.memory_space<vmem>>, vector<1x48x32xf32>
    %65 = vector.shape_cast %64 : vector<1x48x32xf32> to vector<48x32xf32>
    %cst_63 = arith.constant dense<0.000000e+00> : vector<16x32xf32>
    %66 = tpu.matmul %63, %65, %cst_63 {dimension_numbers = #tpu.dot_dimension_numbers<[1], [0], [0], [1], [0, 0, 1, 1], [], []>} : vector<16x48xf32>, vector<48x32xf32>, vector<16x32xf32> -> vector<16x32xf32>
    %c0_64 = arith.constant 0 : index
    %c0_65 = arith.constant 0 : index
    %c0_66 = arith.constant 0 : index
    %67 = vector.load %arg7[%c0_64, %c0_65, %c0_66] : memref<5x48x32xf32, #tpu.memory_space<vmem>>, vector<1x48x32xf32>
    %68 = vector.shape_cast %67 : vector<1x48x32xf32> to vector<48x32xf32>
    %cst_67 = arith.constant dense<0.000000e+00> : vector<16x32xf32>
    %69 = tpu.matmul %63, %68, %cst_67 {dimension_numbers = #tpu.dot_dimension_numbers<[1], [0], [0], [1], [0, 0, 1, 1], [], []>} : vector<16x48xf32>, vector<48x32xf32>, vector<16x32xf32> -> vector<16x32xf32>
    %70 = vector.extract_strided_slice %61 {offsets = [0, 1, 0], sizes = [2, 8, 48], strides = [1, 1, 1]} : vector<2x16x48xf32> to vector<2x8x48xf32>
    %71 = vector.shape_cast %70 : vector<2x8x48xf32> to vector<16x48xf32>
    %c1_68 = arith.constant 1 : index
    %c0_69 = arith.constant 0 : index
    %c0_70 = arith.constant 0 : index
    %72 = vector.load %arg6[%c1_68, %c0_69, %c0_70] : memref<5x48x32xf32, #tpu.memory_space<vmem>>, vector<1x48x32xf32>
    %73 = vector.shape_cast %72 : vector<1x48x32xf32> to vector<48x32xf32>
    %cst_71 = arith.constant dense<0.000000e+00> : vector<16x32xf32>
    %74 = tpu.matmul %71, %73, %cst_71 {dimension_numbers = #tpu.dot_dimension_numbers<[1], [0], [0], [1], [0, 0, 1, 1], [], []>} : vector<16x48xf32>, vector<48x32xf32>, vector<16x32xf32> -> vector<16x32xf32>
    %c1_72 = arith.constant 1 : index
    %c0_73 = arith.constant 0 : index
    %c0_74 = arith.constant 0 : index
    %75 = vector.load %arg7[%c1_72, %c0_73, %c0_74] : memref<5x48x32xf32, #tpu.memory_space<vmem>>, vector<1x48x32xf32>
    %76 = vector.shape_cast %75 : vector<1x48x32xf32> to vector<48x32xf32>
    %cst_75 = arith.constant dense<0.000000e+00> : vector<16x32xf32>
    %77 = tpu.matmul %71, %76, %cst_75 {dimension_numbers = #tpu.dot_dimension_numbers<[1], [0], [0], [1], [0, 0, 1, 1], [], []>} : vector<16x48xf32>, vector<48x32xf32>, vector<16x32xf32> -> vector<16x32xf32>
    %78 = arith.addf %66, %74 : vector<16x32xf32>
    %79 = arith.addf %69, %77 : vector<16x32xf32>
    %80 = vector.extract_strided_slice %61 {offsets = [0, 2, 0], sizes = [2, 8, 48], strides = [1, 1, 1]} : vector<2x16x48xf32> to vector<2x8x48xf32>
    %81 = vector.shape_cast %80 : vector<2x8x48xf32> to vector<16x48xf32>
    %c2_76 = arith.constant 2 : index
    %c0_77 = arith.constant 0 : index
    %c0_78 = arith.constant 0 : index
    %82 = vector.load %arg6[%c2_76, %c0_77, %c0_78] : memref<5x48x32xf32, #tpu.memory_space<vmem>>, vector<1x48x32xf32>
    %83 = vector.shape_cast %82 : vector<1x48x32xf32> to vector<48x32xf32>
    %cst_79 = arith.constant dense<0.000000e+00> : vector<16x32xf32>
    %84 = tpu.matmul %81, %83, %cst_79 {dimension_numbers = #tpu.dot_dimension_numbers<[1], [0], [0], [1], [0, 0, 1, 1], [], []>} : vector<16x48xf32>, vector<48x32xf32>, vector<16x32xf32> -> vector<16x32xf32>
    %c2_80 = arith.constant 2 : index
    %c0_81 = arith.constant 0 : index
    %c0_82 = arith.constant 0 : index
    %85 = vector.load %arg7[%c2_80, %c0_81, %c0_82] : memref<5x48x32xf32, #tpu.memory_space<vmem>>, vector<1x48x32xf32>
    %86 = vector.shape_cast %85 : vector<1x48x32xf32> to vector<48x32xf32>
    %cst_83 = arith.constant dense<0.000000e+00> : vector<16x32xf32>
    %87 = tpu.matmul %81, %86, %cst_83 {dimension_numbers = #tpu.dot_dimension_numbers<[1], [0], [0], [1], [0, 0, 1, 1], [], []>} : vector<16x48xf32>, vector<48x32xf32>, vector<16x32xf32> -> vector<16x32xf32>
    %88 = arith.addf %78, %84 : vector<16x32xf32>
    %89 = arith.addf %79, %87 : vector<16x32xf32>
    %90 = vector.extract_strided_slice %61 {offsets = [0, 3, 0], sizes = [2, 8, 48], strides = [1, 1, 1]} : vector<2x16x48xf32> to vector<2x8x48xf32>
    %91 = vector.shape_cast %90 : vector<2x8x48xf32> to vector<16x48xf32>
    %c3_84 = arith.constant 3 : index
    %c0_85 = arith.constant 0 : index
    %c0_86 = arith.constant 0 : index
    %92 = vector.load %arg6[%c3_84, %c0_85, %c0_86] : memref<5x48x32xf32, #tpu.memory_space<vmem>>, vector<1x48x32xf32>
    %93 = vector.shape_cast %92 : vector<1x48x32xf32> to vector<48x32xf32>
    %cst_87 = arith.constant dense<0.000000e+00> : vector<16x32xf32>
    %94 = tpu.matmul %91, %93, %cst_87 {dimension_numbers = #tpu.dot_dimension_numbers<[1], [0], [0], [1], [0, 0, 1, 1], [], []>} : vector<16x48xf32>, vector<48x32xf32>, vector<16x32xf32> -> vector<16x32xf32>
    %c3_88 = arith.constant 3 : index
    %c0_89 = arith.constant 0 : index
    %c0_90 = arith.constant 0 : index
    %95 = vector.load %arg7[%c3_88, %c0_89, %c0_90] : memref<5x48x32xf32, #tpu.memory_space<vmem>>, vector<1x48x32xf32>
    %96 = vector.shape_cast %95 : vector<1x48x32xf32> to vector<48x32xf32>
    %cst_91 = arith.constant dense<0.000000e+00> : vector<16x32xf32>
    %97 = tpu.matmul %91, %96, %cst_91 {dimension_numbers = #tpu.dot_dimension_numbers<[1], [0], [0], [1], [0, 0, 1, 1], [], []>} : vector<16x48xf32>, vector<48x32xf32>, vector<16x32xf32> -> vector<16x32xf32>
    %98 = arith.addf %88, %94 : vector<16x32xf32>
    %99 = arith.addf %89, %97 : vector<16x32xf32>
    %100 = vector.extract_strided_slice %61 {offsets = [0, 4, 0], sizes = [2, 8, 48], strides = [1, 1, 1]} : vector<2x16x48xf32> to vector<2x8x48xf32>
    %101 = vector.shape_cast %100 : vector<2x8x48xf32> to vector<16x48xf32>
    %c4_92 = arith.constant 4 : index
    %c0_93 = arith.constant 0 : index
    %c0_94 = arith.constant 0 : index
    %102 = vector.load %arg6[%c4_92, %c0_93, %c0_94] : memref<5x48x32xf32, #tpu.memory_space<vmem>>, vector<1x48x32xf32>
    %103 = vector.shape_cast %102 : vector<1x48x32xf32> to vector<48x32xf32>
    %cst_95 = arith.constant dense<0.000000e+00> : vector<16x32xf32>
    %104 = tpu.matmul %101, %103, %cst_95 {dimension_numbers = #tpu.dot_dimension_numbers<[1], [0], [0], [1], [0, 0, 1, 1], [], []>} : vector<16x48xf32>, vector<48x32xf32>, vector<16x32xf32> -> vector<16x32xf32>
    %c4_96 = arith.constant 4 : index
    %c0_97 = arith.constant 0 : index
    %c0_98 = arith.constant 0 : index
    %105 = vector.load %arg7[%c4_96, %c0_97, %c0_98] : memref<5x48x32xf32, #tpu.memory_space<vmem>>, vector<1x48x32xf32>
    %106 = vector.shape_cast %105 : vector<1x48x32xf32> to vector<48x32xf32>
    %cst_99 = arith.constant dense<0.000000e+00> : vector<16x32xf32>
    %107 = tpu.matmul %101, %106, %cst_99 {dimension_numbers = #tpu.dot_dimension_numbers<[1], [0], [0], [1], [0, 0, 1, 1], [], []>} : vector<16x48xf32>, vector<48x32xf32>, vector<16x32xf32> -> vector<16x32xf32>
    %108 = arith.addf %98, %104 : vector<16x32xf32>
    %109 = arith.addf %99, %107 : vector<16x32xf32>
    %110 = arith.maximumf %108, %109 : vector<16x32xf32>
    %c0_100 = arith.constant 0 : index
    %c0_101 = arith.constant 0 : index
    %c0_102 = arith.constant 0 : index
    %c0_103 = arith.constant 0 : index
    %111 = vector.load %arg8[%c0_100, %c0_101, %c0_102, %c0_103] : memref<2x4x2x16xf32, #tpu.memory_space<vmem>>, vector<1x1x2x16xf32>
    %112 = vector.shape_cast %111 : vector<1x1x2x16xf32> to vector<2x16xf32>
    %cst_104 = arith.constant dense<0.000000e+00> : vector<2x32xf32>
    %113 = tpu.matmul %112, %110, %cst_104 {dimension_numbers = #tpu.dot_dimension_numbers<[1], [0], [0], [1], [0, 0, 1, 1], [], []>} : vector<2x16xf32>, vector<16x32xf32>, vector<2x32xf32> -> vector<2x32xf32>
    %c1_105 = arith.constant 1 : index
    %c0_106 = arith.constant 0 : index
    %c0_107 = arith.constant 0 : index
    %c0_108 = arith.constant 0 : index
    %114 = vector.load %arg8[%c1_105, %c0_106, %c0_107, %c0_108] : memref<2x4x2x16xf32, #tpu.memory_space<vmem>>, vector<1x1x2x16xf32>
    %115 = vector.shape_cast %114 : vector<1x1x2x16xf32> to vector<2x16xf32>
    %cst_109 = arith.constant dense<0.000000e+00> : vector<2x32xf32>
    %116 = tpu.matmul %115, %110, %cst_109 {dimension_numbers = #tpu.dot_dimension_numbers<[1], [0], [0], [1], [0, 0, 1, 1], [], []>} : vector<2x16xf32>, vector<16x32xf32>, vector<2x32xf32> -> vector<2x32xf32>
    %117 = arith.maximumf %113, %116 : vector<2x32xf32>
    %c0_110 = arith.constant 0 : index
    %c0_111 = arith.constant 0 : index
    %118 = vector.load %arg9[%c0_110, %c0_111] : memref<1x32xf32, #tpu.memory_space<vmem>>, vector<1x32xf32>
    %119 = vector.broadcast %118 : vector<1x32xf32> to vector<2x32xf32>
    %120 = arith.addf %117, %119 : vector<2x32xf32>
    %cst_112 = arith.constant 0.000000e+00 : f32
    %121 = vector.broadcast %cst_112 : f32 to vector<2x32xf32>
    %122 = arith.maximumf %120, %121 : vector<2x32xf32>
    %c0_113 = arith.constant 0 : index
    %c0_114 = arith.constant 0 : index
    %c0_115 = arith.constant 0 : index
    %123 = vector.load %arg10[%c0_113, %c0_114, %c0_115] : memref<4x32x32xf32, #tpu.memory_space<vmem>>, vector<1x32x32xf32>
    %124 = vector.shape_cast %123 : vector<1x32x32xf32> to vector<32x32xf32>
    %cst_116 = arith.constant dense<0.000000e+00> : vector<2x32xf32>
    %125 = tpu.matmul %122, %124, %cst_116 {dimension_numbers = #tpu.dot_dimension_numbers<[1], [0], [0], [1], [0, 0, 1, 1], [], []>} : vector<2x32xf32>, vector<32x32xf32>, vector<2x32xf32> -> vector<2x32xf32>
    %c0_117 = arith.constant 0 : index
    %c1_118 = arith.constant 1 : index
    %c0_119 = arith.constant 0 : index
    %c0_120 = arith.constant 0 : index
    %126 = vector.load %arg8[%c0_117, %c1_118, %c0_119, %c0_120] : memref<2x4x2x16xf32, #tpu.memory_space<vmem>>, vector<1x1x2x16xf32>
    %127 = vector.shape_cast %126 : vector<1x1x2x16xf32> to vector<2x16xf32>
    %cst_121 = arith.constant dense<0.000000e+00> : vector<2x32xf32>
    %128 = tpu.matmul %127, %110, %cst_121 {dimension_numbers = #tpu.dot_dimension_numbers<[1], [0], [0], [1], [0, 0, 1, 1], [], []>} : vector<2x16xf32>, vector<16x32xf32>, vector<2x32xf32> -> vector<2x32xf32>
    %c1_122 = arith.constant 1 : index
    %c1_123 = arith.constant 1 : index
    %c0_124 = arith.constant 0 : index
    %c0_125 = arith.constant 0 : index
    %129 = vector.load %arg8[%c1_122, %c1_123, %c0_124, %c0_125] : memref<2x4x2x16xf32, #tpu.memory_space<vmem>>, vector<1x1x2x16xf32>
    %130 = vector.shape_cast %129 : vector<1x1x2x16xf32> to vector<2x16xf32>
    %cst_126 = arith.constant dense<0.000000e+00> : vector<2x32xf32>
    %131 = tpu.matmul %130, %110, %cst_126 {dimension_numbers = #tpu.dot_dimension_numbers<[1], [0], [0], [1], [0, 0, 1, 1], [], []>} : vector<2x16xf32>, vector<16x32xf32>, vector<2x32xf32> -> vector<2x32xf32>
    %132 = arith.maximumf %128, %131 : vector<2x32xf32>
    %c0_127 = arith.constant 0 : index
    %c0_128 = arith.constant 0 : index
    %133 = vector.load %arg9[%c0_127, %c0_128] : memref<1x32xf32, #tpu.memory_space<vmem>>, vector<1x32xf32>
    %134 = vector.broadcast %133 : vector<1x32xf32> to vector<2x32xf32>
    %135 = arith.addf %132, %134 : vector<2x32xf32>
    %cst_129 = arith.constant 0.000000e+00 : f32
    %136 = vector.broadcast %cst_129 : f32 to vector<2x32xf32>
    %137 = arith.maximumf %135, %136 : vector<2x32xf32>
    %c1_130 = arith.constant 1 : index
    %c0_131 = arith.constant 0 : index
    %c0_132 = arith.constant 0 : index
    %138 = vector.load %arg10[%c1_130, %c0_131, %c0_132] : memref<4x32x32xf32, #tpu.memory_space<vmem>>, vector<1x32x32xf32>
    %139 = vector.shape_cast %138 : vector<1x32x32xf32> to vector<32x32xf32>
    %cst_133 = arith.constant dense<0.000000e+00> : vector<2x32xf32>
    %140 = tpu.matmul %137, %139, %cst_133 {dimension_numbers = #tpu.dot_dimension_numbers<[1], [0], [0], [1], [0, 0, 1, 1], [], []>} : vector<2x32xf32>, vector<32x32xf32>, vector<2x32xf32> -> vector<2x32xf32>
    %141 = arith.addf %125, %140 : vector<2x32xf32>
    %c0_134 = arith.constant 0 : index
    %c2_135 = arith.constant 2 : index
    %c0_136 = arith.constant 0 : index
    %c0_137 = arith.constant 0 : index
    %142 = vector.load %arg8[%c0_134, %c2_135, %c0_136, %c0_137] : memref<2x4x2x16xf32, #tpu.memory_space<vmem>>, vector<1x1x2x16xf32>
    %143 = vector.shape_cast %142 : vector<1x1x2x16xf32> to vector<2x16xf32>
    %cst_138 = arith.constant dense<0.000000e+00> : vector<2x32xf32>
    %144 = tpu.matmul %143, %110, %cst_138 {dimension_numbers = #tpu.dot_dimension_numbers<[1], [0], [0], [1], [0, 0, 1, 1], [], []>} : vector<2x16xf32>, vector<16x32xf32>, vector<2x32xf32> -> vector<2x32xf32>
    %c1_139 = arith.constant 1 : index
    %c2_140 = arith.constant 2 : index
    %c0_141 = arith.constant 0 : index
    %c0_142 = arith.constant 0 : index
    %145 = vector.load %arg8[%c1_139, %c2_140, %c0_141, %c0_142] : memref<2x4x2x16xf32, #tpu.memory_space<vmem>>, vector<1x1x2x16xf32>
    %146 = vector.shape_cast %145 : vector<1x1x2x16xf32> to vector<2x16xf32>
    %cst_143 = arith.constant dense<0.000000e+00> : vector<2x32xf32>
    %147 = tpu.matmul %146, %110, %cst_143 {dimension_numbers = #tpu.dot_dimension_numbers<[1], [0], [0], [1], [0, 0, 1, 1], [], []>} : vector<2x16xf32>, vector<16x32xf32>, vector<2x32xf32> -> vector<2x32xf32>
    %148 = arith.maximumf %144, %147 : vector<2x32xf32>
    %c0_144 = arith.constant 0 : index
    %c0_145 = arith.constant 0 : index
    %149 = vector.load %arg9[%c0_144, %c0_145] : memref<1x32xf32, #tpu.memory_space<vmem>>, vector<1x32xf32>
    %150 = vector.broadcast %149 : vector<1x32xf32> to vector<2x32xf32>
    %151 = arith.addf %148, %150 : vector<2x32xf32>
    %cst_146 = arith.constant 0.000000e+00 : f32
    %152 = vector.broadcast %cst_146 : f32 to vector<2x32xf32>
    %153 = arith.maximumf %151, %152 : vector<2x32xf32>
    %c2_147 = arith.constant 2 : index
    %c0_148 = arith.constant 0 : index
    %c0_149 = arith.constant 0 : index
    %154 = vector.load %arg10[%c2_147, %c0_148, %c0_149] : memref<4x32x32xf32, #tpu.memory_space<vmem>>, vector<1x32x32xf32>
    %155 = vector.shape_cast %154 : vector<1x32x32xf32> to vector<32x32xf32>
    %cst_150 = arith.constant dense<0.000000e+00> : vector<2x32xf32>
    %156 = tpu.matmul %153, %155, %cst_150 {dimension_numbers = #tpu.dot_dimension_numbers<[1], [0], [0], [1], [0, 0, 1, 1], [], []>} : vector<2x32xf32>, vector<32x32xf32>, vector<2x32xf32> -> vector<2x32xf32>
    %157 = arith.addf %141, %156 : vector<2x32xf32>
    %c0_151 = arith.constant 0 : index
    %c3_152 = arith.constant 3 : index
    %c0_153 = arith.constant 0 : index
    %c0_154 = arith.constant 0 : index
    %158 = vector.load %arg8[%c0_151, %c3_152, %c0_153, %c0_154] : memref<2x4x2x16xf32, #tpu.memory_space<vmem>>, vector<1x1x2x16xf32>
    %159 = vector.shape_cast %158 : vector<1x1x2x16xf32> to vector<2x16xf32>
    %cst_155 = arith.constant dense<0.000000e+00> : vector<2x32xf32>
    %160 = tpu.matmul %159, %110, %cst_155 {dimension_numbers = #tpu.dot_dimension_numbers<[1], [0], [0], [1], [0, 0, 1, 1], [], []>} : vector<2x16xf32>, vector<16x32xf32>, vector<2x32xf32> -> vector<2x32xf32>
    %c1_156 = arith.constant 1 : index
    %c3_157 = arith.constant 3 : index
    %c0_158 = arith.constant 0 : index
    %c0_159 = arith.constant 0 : index
    %161 = vector.load %arg8[%c1_156, %c3_157, %c0_158, %c0_159] : memref<2x4x2x16xf32, #tpu.memory_space<vmem>>, vector<1x1x2x16xf32>
    %162 = vector.shape_cast %161 : vector<1x1x2x16xf32> to vector<2x16xf32>
    %cst_160 = arith.constant dense<0.000000e+00> : vector<2x32xf32>
    %163 = tpu.matmul %162, %110, %cst_160 {dimension_numbers = #tpu.dot_dimension_numbers<[1], [0], [0], [1], [0, 0, 1, 1], [], []>} : vector<2x16xf32>, vector<16x32xf32>, vector<2x32xf32> -> vector<2x32xf32>
    %164 = arith.maximumf %160, %163 : vector<2x32xf32>
    %c0_161 = arith.constant 0 : index
    %c0_162 = arith.constant 0 : index
    %165 = vector.load %arg9[%c0_161, %c0_162] : memref<1x32xf32, #tpu.memory_space<vmem>>, vector<1x32xf32>
    %166 = vector.broadcast %165 : vector<1x32xf32> to vector<2x32xf32>
    %167 = arith.addf %164, %166 : vector<2x32xf32>
    %cst_163 = arith.constant 0.000000e+00 : f32
    %168 = vector.broadcast %cst_163 : f32 to vector<2x32xf32>
    %169 = arith.maximumf %167, %168 : vector<2x32xf32>
    %c3_164 = arith.constant 3 : index
    %c0_165 = arith.constant 0 : index
    %c0_166 = arith.constant 0 : index
    %170 = vector.load %arg10[%c3_164, %c0_165, %c0_166] : memref<4x32x32xf32, #tpu.memory_space<vmem>>, vector<1x32x32xf32>
    %171 = vector.shape_cast %170 : vector<1x32x32xf32> to vector<32x32xf32>
    %cst_167 = arith.constant dense<0.000000e+00> : vector<2x32xf32>
    %172 = tpu.matmul %169, %171, %cst_167 {dimension_numbers = #tpu.dot_dimension_numbers<[1], [0], [0], [1], [0, 0, 1, 1], [], []>} : vector<2x32xf32>, vector<32x32xf32>, vector<2x32xf32> -> vector<2x32xf32>
    %173 = arith.addf %157, %172 : vector<2x32xf32>
    %c0_168 = arith.constant 0 : index
    %c0_169 = arith.constant 0 : index
    %174 = vector.load %arg11[%c0_168, %c0_169] : memref<1x32xf32, #tpu.memory_space<vmem>>, vector<1x32xf32>
    %175 = vector.broadcast %174 : vector<1x32xf32> to vector<2x32xf32>
    %176 = arith.addf %173, %175 : vector<2x32xf32>
    %cst_170 = arith.constant 0.000000e+00 : f32
    %177 = vector.broadcast %cst_170 : f32 to vector<2x32xf32>
    %178 = arith.maximumf %176, %177 : vector<2x32xf32>
    %c0_171 = arith.constant 0 : index
    %c0_172 = arith.constant 0 : index
    %179 = vector.load %arg12[%c0_171, %c0_172] : memref<32x16xf32, #tpu.memory_space<vmem>>, vector<32x16xf32>
    %cst_173 = arith.constant dense<0.000000e+00> : vector<2x16xf32>
    %180 = tpu.matmul %178, %179, %cst_173 {dimension_numbers = #tpu.dot_dimension_numbers<[1], [0], [0], [1], [0, 0, 1, 1], [], []>} : vector<2x32xf32>, vector<32x16xf32>, vector<2x16xf32> -> vector<2x16xf32>
    %c0_174 = arith.constant 0 : index
    %c0_175 = arith.constant 0 : index
    %181 = vector.load %arg13[%c0_174, %c0_175] : memref<1x16xf32, #tpu.memory_space<vmem>>, vector<1x16xf32>
    %182 = vector.broadcast %181 : vector<1x16xf32> to vector<2x16xf32>
    %183 = arith.addf %180, %182 : vector<2x16xf32>
    %cst_176 = arith.constant 0.000000e+00 : f32
    %184 = vector.broadcast %cst_176 : f32 to vector<2x16xf32>
    %185 = arith.maximumf %183, %184 : vector<2x16xf32>
    %c0_177 = arith.constant 0 : index
    %c0_178 = arith.constant 0 : index
    %186 = vector.load %arg14[%c0_177, %c0_178] : memref<16x10xf32, #tpu.memory_space<vmem>>, vector<16x10xf32>
    %cst_179 = arith.constant dense<0.000000e+00> : vector<2x10xf32>
    %187 = tpu.matmul %185, %186, %cst_179 {dimension_numbers = #tpu.dot_dimension_numbers<[1], [0], [0], [1], [0, 0, 1, 1], [], []>} : vector<2x16xf32>, vector<16x10xf32>, vector<2x10xf32> -> vector<2x10xf32>
    %c0_180 = arith.constant 0 : index
    %c0_181 = arith.constant 0 : index
    %188 = vector.load %arg15[%c0_180, %c0_181] : memref<1x10xf32, #tpu.memory_space<vmem>>, vector<1x10xf32>
    %189 = vector.broadcast %188 : vector<1x10xf32> to vector<2x10xf32>
    %190 = arith.addf %187, %189 : vector<2x10xf32>
    %cst_182 = arith.constant dense<0xFF800000> : vector<2xf32>
    %191 = vector.multi_reduction <maximumf>, %190, %cst_182 [1] : vector<2x10xf32> to vector<2xf32>
    %192 = vector.shape_cast %191 : vector<2xf32> to vector<2x1xf32>
    %193 = vector.broadcast %192 : vector<2x1xf32> to vector<2x10xf32>
    %194 = arith.subf %190, %193 : vector<2x10xf32>
    %195 = math.exp %194 : vector<2x10xf32>
    %cst_183 = arith.constant dense<0.000000e+00> : vector<2xf32>
    %196 = vector.multi_reduction <add>, %195, %cst_183 [1] : vector<2x10xf32> to vector<2xf32>
    %197 = vector.shape_cast %196 : vector<2xf32> to vector<2x1xf32>
    %198 = math.log %197 : vector<2x1xf32>
    %199 = arith.addf %198, %192 : vector<2x1xf32>
    %200 = vector.broadcast %199 : vector<2x1xf32> to vector<2x10xf32>
    %201 = arith.subf %190, %200 : vector<2x10xf32>
    %c0_184 = arith.constant 0 : index
    %c0_185 = arith.constant 0 : index
    %202 = vector.load %arg16[%c0_184, %c0_185] : memref<2x10xf32, #tpu.memory_space<vmem>>, vector<2x10xf32>
    tpu.vector_store %arg16[%c0_184, %c0_185], %201 {strides = array<i32>} : memref<2x10xf32, #tpu.memory_space<vmem>>, vector<2x10xf32>,
    return
  }
  func.func @transform_0(%arg0: i32) -> (i32, i32, i32) {
    %c0_i32 = arith.constant 0 : i32
    %c0_i32_0 = arith.constant 0 : i32
    %c0_i32_1 = arith.constant 0 : i32
    return %arg0, %c0_i32, %c0_i32_0 : i32, i32, i32
  }
  func.func @transform_1(%arg0: i32) -> (i32, i32, i32) {
    %c0_i32 = arith.constant 0 : i32
    %c0_i32_0 = arith.constant 0 : i32
    %c0_i32_1 = arith.constant 0 : i32
    %c0_i32_2 = arith.constant 0 : i32
    return %c0_i32, %c0_i32_0, %c0_i32_1 : i32, i32, i32
  }
  func.func @transform_2(%arg0: i32) -> (i32, i32, i32) {
    %c0_i32 = arith.constant 0 : i32
    %c0_i32_0 = arith.constant 0 : i32
    %c0_i32_1 = arith.constant 0 : i32
    %c0_i32_2 = arith.constant 0 : i32
    return %c0_i32, %c0_i32_0, %c0_i32_1 : i32, i32, i32
  }
  func.func @transform_3(%arg0: i32) -> (i32, i32, i32) {
    %c0_i32 = arith.constant 0 : i32
    %c0_i32_0 = arith.constant 0 : i32
    %c0_i32_1 = arith.constant 0 : i32
    %c0_i32_2 = arith.constant 0 : i32
    return %c0_i32, %c0_i32_0, %c0_i32_1 : i32, i32, i32
  }
  func.func @transform_4(%arg0: i32) -> (i32, i32) {
    %c0_i32 = arith.constant 0 : i32
    %c0_i32_0 = arith.constant 0 : i32
    %c0_i32_1 = arith.constant 0 : i32
    return %c0_i32, %c0_i32_0 : i32, i32
  }
  func.func @transform_5(%arg0: i32) -> (i32, i32, i32) {
    %c0_i32 = arith.constant 0 : i32
    %c0_i32_0 = arith.constant 0 : i32
    %c0_i32_1 = arith.constant 0 : i32
    %c0_i32_2 = arith.constant 0 : i32
    return %c0_i32, %c0_i32_0, %c0_i32_1 : i32, i32, i32
  }
  func.func @transform_6(%arg0: i32) -> (i32, i32, i32) {
    %c0_i32 = arith.constant 0 : i32
    %c0_i32_0 = arith.constant 0 : i32
    %c0_i32_1 = arith.constant 0 : i32
    %c0_i32_2 = arith.constant 0 : i32
    return %c0_i32, %c0_i32_0, %c0_i32_1 : i32, i32, i32
  }
  func.func @transform_7(%arg0: i32) -> (i32, i32, i32, i32) {
    %c0_i32 = arith.constant 0 : i32
    %c0_i32_0 = arith.constant 0 : i32
    %c0_i32_1 = arith.constant 0 : i32
    %c0_i32_2 = arith.constant 0 : i32
    %c0_i32_3 = arith.constant 0 : i32
    return %c0_i32, %c0_i32_0, %c0_i32_1, %c0_i32_2 : i32, i32, i32, i32
  }
  func.func @transform_8(%arg0: i32) -> (i32, i32) {
    %c0_i32 = arith.constant 0 : i32
    %c0_i32_0 = arith.constant 0 : i32
    %c0_i32_1 = arith.constant 0 : i32
    return %c0_i32, %c0_i32_0 : i32, i32
  }
  func.func @transform_9(%arg0: i32) -> (i32, i32, i32) {
    %c0_i32 = arith.constant 0 : i32
    %c0_i32_0 = arith.constant 0 : i32
    %c0_i32_1 = arith.constant 0 : i32
    %c0_i32_2 = arith.constant 0 : i32
    return %c0_i32, %c0_i32_0, %c0_i32_1 : i32, i32, i32
  }
  func.func @transform_10(%arg0: i32) -> (i32, i32) {
    %c0_i32 = arith.constant 0 : i32
    %c0_i32_0 = arith.constant 0 : i32
    %c0_i32_1 = arith.constant 0 : i32
    return %c0_i32, %c0_i32_0 : i32, i32
  }
  func.func @transform_11(%arg0: i32) -> (i32, i32) {
    %c0_i32 = arith.constant 0 : i32
    %c0_i32_0 = arith.constant 0 : i32
    %c0_i32_1 = arith.constant 0 : i32
    return %c0_i32, %c0_i32_0 : i32, i32
  }
  func.func @transform_12(%arg0: i32) -> (i32, i32) {
    %c0_i32 = arith.constant 0 : i32
    %c0_i32_0 = arith.constant 0 : i32
    %c0_i32_1 = arith.constant 0 : i32
    return %c0_i32, %c0_i32_0 : i32, i32
  }
  func.func @transform_13(%arg0: i32) -> (i32, i32) {
    %c0_i32 = arith.constant 0 : i32
    %c0_i32_0 = arith.constant 0 : i32
    %c0_i32_1 = arith.constant 0 : i32
    return %c0_i32, %c0_i32_0 : i32, i32
  }
  func.func @transform_14(%arg0: i32) -> (i32, i32) {
    %c0_i32 = arith.constant 0 : i32
    %c0_i32_0 = arith.constant 0 : i32
    %c0_i32_1 = arith.constant 0 : i32
    return %c0_i32, %c0_i32_0 : i32, i32
  }
  func.func @transform_15(%arg0: i32) -> (i32, i32) {
    %c0_i32 = arith.constant 0 : i32
    %c0_i32_0 = arith.constant 0 : i32
    return %arg0, %c0_i32 : i32, i32
  }
}

</mosaic_0001>

<llo_original>
// kernel: convnet_forward.1
$region0: #{convnet_forward.1}
  #allocation0 [shape = 'u32[]', space=smem, size = 0x4, offset = 0x4, fixed_abs, tag = 'smem constant byte address 0x4 - core index']
  #allocation1 [shape = 'u32[144,128]{1,0:T(1,128)}', space=vmem, size = 0x12000, scoped, tag = 'internal scratch']
  %s0 = inlined_call_operand.vmem [shape: f32[2,32,28], index: 0, kind: input, shape index: {}]
  %s1 = inlined_call_operand.vmem [shape: f32[5,28,48], index: 1, kind: input, shape index: {}]
  %s2 = inlined_call_operand.vmem [shape: f32[5,28,48], index: 2, kind: input, shape index: {}]
  %s3 = inlined_call_operand.vmem [shape: f32[2,32,48], index: 3, kind: input, shape index: {}]
  %s4 = inlined_call_operand.vmem [shape: f32[1,48], index: 4, kind: input, shape index: {}]
  %s5 = inlined_call_operand.vmem [shape: f32[5,48,32], index: 5, kind: input, shape index: {}]
  %s6 = inlined_call_operand.vmem [shape: f32[5,48,32], index: 6, kind: input, shape index: {}]
  %s7 = inlined_call_operand.vmem [shape: f32[2,4,2,16], index: 7, kind: input, shape index: {}]
  %s8 = inlined_call_operand.vmem [shape: f32[1,32], index: 8, kind: input, shape index: {}]
  %s9 = inlined_call_operand.vmem [shape: f32[4,32,32], index: 9, kind: input, shape index: {}]
  %s10 = inlined_call_operand.vmem [shape: f32[1,32], index: 10, kind: input, shape index: {}]
  %s11 = inlined_call_operand.vmem [shape: f32[32,16], index: 11, kind: input, shape index: {}]
  %s12 = inlined_call_operand.vmem [shape: f32[1,16], index: 12, kind: input, shape index: {}]
  %s13 = inlined_call_operand.vmem [shape: f32[16,10], index: 13, kind: input, shape index: {}]
  %s14 = inlined_call_operand.vmem [shape: f32[1,10], index: 14, kind: input, shape index: {}]
  %s15 = inlined_call_operand.hbm [shape: f32[2,10], index: 15, kind: output, shape index: {}]
  %s16 = sld [smem:[#allocation0]]
  $region70: #{convnet_forward.1} parent=0
    _
  %s18 = ssub.s32 1, %s16
  %s19 = scalar_select 0, %s18, %s16
  $region1: #{convnet_forward.1} parent=0
    #allocation2 [shape = 'u8[1024]{0}', space=vmem, size = 0x400, scoped, tag = 'output window, operand 0, single buffered']
    #allocation3 [shape = 's32[1]{0}', space=sflag, size = 0x4, scoped, tag = 'scoped memory for convnet_forward.1']
    %20 = vsyncpa [#allocation3], 0
    // Predicated region
    $region2: #{convnet_forward.1} parent=1 // pred_check
      _
    $region3: #{convnet_forward.1} parent=1 // pred_check_branch
      %22 = sbr.rel (0) target = $region5
    $region4: #{convnet_forward.1} parent=1 // pred_region
      _
    $region5: #{convnet_forward.1} parent=1 // pred_fallthru
      _
    // Predicated region
    $region6: #{convnet_forward.1} parent=1 // pred_check
      _
    $region7: #{convnet_forward.1} parent=1 // pred_check_branch
      %24 = sbr.rel (0) target = $region9
    $region8: #{convnet_forward.1} parent=1 // pred_region
      _
    $region9: #{convnet_forward.1} parent=1 // pred_fallthru
      _
    // Predicated region
    $region10: #{convnet_forward.1} parent=1 // pred_check
      _
    $region11: #{convnet_forward.1} parent=1 // pred_check_branch
      %26 = sbr.rel (0) target = $region13
    $region12: #{convnet_forward.1} parent=1 // pred_region
      _
    $region13: #{convnet_forward.1} parent=1 // pred_fallthru
      _
    // Predicated region
    $region14: #{convnet_forward.1} parent=1 // pred_check
      _
    $region15: #{convnet_forward.1} parent=1 // pred_check_branch
      %28 = sbr.rel (0) target = $region17
    $region16: #{convnet_forward.1} parent=1 // pred_region
      _
    $region17: #{convnet_forward.1} parent=1 // pred_fallthru
      _
    // Predicated region
    $region18: #{convnet_forward.1} parent=1 // pred_check
      _
    $region19: #{convnet_forward.1} parent=1 // pred_check_branch
      %30 = sbr.rel (0) target = $region21
    $region20: #{convnet_forward.1} parent=1 // pred_region
      _
    $region21: #{convnet_forward.1} parent=1 // pred_fallthru
      _
    // Predicated region
    $region22: #{convnet_forward.1} parent=1 // pred_check
      _
    $region23: #{convnet_forward.1} parent=1 // pred_check_branch
      %32 = sbr.rel (0) target = $region25
    $region24: #{convnet_forward.1} parent=1 // pred_region
      _
    $region25: #{convnet_forward.1} parent=1 // pred_fallthru
      _
    // Predicated region
    $region26: #{convnet_forward.1} parent=1 // pred_check
      _
    $region27: #{convnet_forward.1} parent=1 // pred_check_branch
      %34 = sbr.rel (0) target = $region29
    $region28: #{convnet_forward.1} parent=1 // pred_region
      _
    $region29: #{convnet_forward.1} parent=1 // pred_fallthru
      _
    // Predicated region
    $region30: #{convnet_forward.1} parent=1 // pred_check
      _
    $region31: #{convnet_forward.1} parent=1 // pred_check_branch
      %36 = sbr.rel (0) target = $region33
    $region32: #{convnet_forward.1} parent=1 // pred_region
      _
    $region33: #{convnet_forward.1} parent=1 // pred_fallthru
      _
    // Predicated region
    $region34: #{convnet_forward.1} parent=1 // pred_check
      _
    $region35: #{convnet_forward.1} parent=1 // pred_check_branch
      %38 = sbr.rel (0) target = $region37
    $region36: #{convnet_forward.1} parent=1 // pred_region
      _
    $region37: #{convnet_forward.1} parent=1 // pred_fallthru
      _
    // Predicated region
    $region38: #{convnet_forward.1} parent=1 // pred_check
      _
    $region39: #{convnet_forward.1} parent=1 // pred_check_branch
      %40 = sbr.rel (0) target = $region41
    $region40: #{convnet_forward.1} parent=1 // pred_region
      _
    $region41: #{convnet_forward.1} parent=1 // pred_fallthru
      _
    // Predicated region
    $region42: #{convnet_forward.1} parent=1 // pred_check
      _
    $region43: #{convnet_forward.1} parent=1 // pred_check_branch
      %42 = sbr.rel (0) target = $region45
    $region44: #{convnet_forward.1} parent=1 // pred_region
      _
    $region45: #{convnet_forward.1} parent=1 // pred_fallthru
      _
    // Predicated region
    $region46: #{convnet_forward.1} parent=1 // pred_check
      _
    $region47: #{convnet_forward.1} parent=1 // pred_check_branch
      %44 = sbr.rel (0) target = $region49
    $region48: #{convnet_forward.1} parent=1 // pred_region
      _
    $region49: #{convnet_forward.1} parent=1 // pred_fallthru
      _
    // Predicated region
    $region50: #{convnet_forward.1} parent=1 // pred_check
      _
    $region51: #{convnet_forward.1} parent=1 // pred_check_branch
      %46 = sbr.rel (0) target = $region53
    $region52: #{convnet_forward.1} parent=1 // pred_region
      _
    $region53: #{convnet_forward.1} parent=1 // pred_fallthru
      _
    // Predicated region
    $region54: #{convnet_forward.1} parent=1 // pred_check
      _
    $region55: #{convnet_forward.1} parent=1 // pred_check_branch
      %48 = sbr.rel (0) target = $region57
    $region56: #{convnet_forward.1} parent=1 // pred_region
      _
    $region57: #{convnet_forward.1} parent=1 // pred_fallthru
      _
    // Predicated region
    $region58: #{convnet_forward.1} parent=1 // pred_check
      _
    $region59: #{convnet_forward.1} parent=1 // pred_check_branch
      %50 = sbr.rel (0) target = $region61
    $region60: #{convnet_forward.1} parent=1 // pred_region
      _
    $region61: #{convnet_forward.1} parent=1 // pred_fallthru
      _
    %v51 = vld [vmem:[%s0] sm:$0xff]
    %v52 = vld [vmem:[%s0 + $0x8] sm:$0xff]
    %v53 = vld [vmem:[%s0 + $0x10] sm:$0xff]
    %v54 = vld [vmem:[%s0 + $0x20] sm:$0xff]
    %v55 = vld [vmem:[%s0 + $0x28] sm:$0xff]
    %v56 = vld [vmem:[%s0 + $0x30] sm:$0xff]
    %v57 = vld [vmem:[%s1] sm:$0xff]
    %v58 = vld [vmem:[%s1 + $0x8] sm:$0xff]
    %v59 = vld [vmem:[%s1 + $0x10] sm:$0xff]
    %v60 = vld [vmem:[%s1 + $0x18] sm:$0xf]
    %v61 = vld [vmem:[%s2] sm:$0xff]
    %v62 = vld [vmem:[%s2 + $0x8] sm:$0xff]
    %v63 = vld [vmem:[%s2 + $0x10] sm:$0xff]
    %v64 = vld [vmem:[%s2 + $0x18] sm:$0xf]
    %v65 = vld [vmem:[%s0 + $0x1] sm:$0xff]
    %v66 = vld [vmem:[%s0 + $0x9] sm:$0xff]
    %v67 = vld [vmem:[%s0 + $0x11] sm:$0xff]
    %v68 = vld [vmem:[%s0 + $0x21] sm:$0xff]
    %v69 = vld [vmem:[%s0 + $0x29] sm:$0xff]
    %v70 = vld [vmem:[%s0 + $0x31] sm:$0xff]
    %s71 = scalar_lea.vmem %s1, 32
    %v72 = vld [vmem:[%s71] sm:$0xff]
    %v73 = vld [vmem:[%s71 + $0x8] sm:$0xff]
    %v74 = vld [vmem:[%s71 + $0x10] sm:$0xff]
    %v75 = vld [vmem:[%s71 + $0x18] sm:$0xf]
    %vm76 = vcmask 228352
    %v78 = vsel %vm76, %v65, 0
    %v81 = vsel %vm76, %v66, 0
    %v84 = vsel %vm76, %v67, 0
    %v87 = vsel %vm76, %v68, 0
    %v90 = vsel %vm76, %v69, 0
    %v93 = vsel %vm76, %v70, 0
    %vm95 = vcmask 1043456
    %v97 = vsel %vm95, %v75, 0
    %99 = vmatprep.subr.mxu0 0.0
    %100 = vmatpush1.msra.mxu0 %v72
    %101 = vmatprep.subr.mxu0 0.0
    %102 = vmatpush1.msra.mxu0 %v73
    %103 = vmatprep.subr.mxu0 0.0
    %104 = vmatpush1.msra.mxu0 %v74
    %105 = vmatprep.subr.mxu0 0.0
    %106 = vmatpush1.msra.mxu0 %v97
    %107 = vmatprep.subr.mxu0 0.0
    %108 = vmatpush1.msra.mxu0 0.0
    %109 = vmatprep.subr.mxu0 0.0
    %110 = vmatpush1.msra.mxu0 0.0
    %111 = vmatprep.subr.mxu0 0.0
    %112 = vmatpush1.msra.mxu0 0.0
    %113 = vmatprep.subr.mxu0 0.0
    %114 = vmatpush1.msra.mxu0 0.0
    %115 = vmatprep.subr.mxu0 0.0
    %116 = vmatpush1.msra.mxu0 0.0
    %117 = vmatprep.subr.mxu0 0.0
    %118 = vmatpush1.msra.mxu0 0.0
    %119 = vmatprep.subr.mxu0 0.0
    %120 = vmatpush1.msra.mxu0 0.0
    %121 = vmatprep.subr.mxu0 0.0
    %122 = vmatpush1.msra.mxu0 0.0
    %123 = vmatprep.subr.mxu0 0.0
    %124 = vmatpush1.msra.mxu0 0.0
    %125 = vmatprep.subr.mxu0 0.0
    %126 = vmatpush1.msra.mxu0 0.0
    %127 = vmatprep.subr.mxu0 0.0
    %128 = vmatpush1.msra.mxu0 0.0
    %129 = vmatprep.subr.mxu0 0.0
    %130 = vmatpush1.msra.mxu0 0.0
    %131 = vmatprep.subr.mxu0 0.0
    %132 = vmatpush1.msra.mxu0 0.0
    %133 = vmatprep.subr.mxu0 0.0
    %134 = vmatpush1.msra.mxu0 0.0
    %135 = vmatprep.subr.mxu0 0.0
    %136 = vmatpush1.msra.mxu0 0.0
    %137 = vmatprep.subr.mxu0 0.0
    %138 = vmatpush1.msra.mxu0 0.0
    %139 = vmatprep.subr.mxu0 0.0
    %140 = vmatpush1.msra.mxu0 0.0
    %141 = vmatprep.subr.mxu0 0.0
    %142 = vmatpush1.msra.mxu0 0.0
    %143 = vmatprep.subr.mxu0 0.0
    %144 = vmatpush1.msra.mxu0 0.0
    %145 = vmatprep.subr.mxu0 0.0
    %146 = vmatpush1.msra.mxu0 0.0
    %147 = vmatprep.subr.mxu0 0.0
    %148 = vmatpush1.msra.mxu0 0.0
    %149 = vmatprep.subr.mxu0 0.0
    %150 = vmatpush1.msra.mxu0 0.0
    %151 = vmatprep.subr.mxu0 0.0
    %152 = vmatpush1.msra.mxu0 0.0
    %153 = vmatprep.subr.mxu0 0.0
    %154 = vmatpush1.msra.mxu0 0.0
    %155 = vmatprep.subr.mxu0 0.0
    %156 = vmatpush1.msra.mxu0 0.0
    %157 = vmatprep.subr.mxu0 0.0
    %158 = vmatpush1.msra.mxu0 0.0
    %159 = vmatprep.subr.mxu0 0.0
    %160 = vmatpush1.msra.mxu0 0.0
    %161 = vmatprep.subr.mxu0 0.0
    %162 = vmatpush1.msra.mxu0 0.0
    %163 = vmatprep.mubr.f32.mxu0 0.0
    %164 = vmatmul.mubr.f32.gmra.mrb[0].mxu0 %v78
    %v165 = vpop.f32.mrb[0].mxu0
    %v166 = vadd.f32 0.0, %v165
    %v167 = vpop.f32.mrb[0].mxu0
    %168 = vmatprep.mubr.f32.mxu0 0.0
    %169 = vmatmul.mubr.f32.gmra.mrb[0].mxu0 %v81
    %v170 = vpop.f32.mrb[0].mxu0
    %v171 = vadd.f32 0.0, %v170
    %v172 = vpop.f32.mrb[0].mxu0
    %173 = vmatprep.mubr.f32.mxu0 0.0
    %174 = vmatmul.mubr.f32.gmra.mrb[0].mxu0 %v84
    %v175 = vpop.f32.mrb[0].mxu0
    %v176 = vadd.f32 0.0, %v175
    %v177 = vpop.f32.mrb[0].mxu0
    %178 = vmatprep.mubr.f32.mxu0 0.0
    %179 = vmatmul.mubr.f32.gmra.mrb[0].mxu0 %v87
    %v180 = vpop.f32.mrb[0].mxu0
    %v181 = vadd.f32 0.0, %v180
    %v182 = vpop.f32.mrb[0].mxu0
    %183 = vmatprep.mubr.f32.mxu0 0.0
    %184 = vmatmul.mubr.f32.gmra.mrb[0].mxu0 %v90
    %v185 = vpop.f32.mrb[0].mxu0
    %v186 = vadd.f32 0.0, %v185
    %v187 = vpop.f32.mrb[0].mxu0
    %188 = vmatprep.mubr.f32.mxu0 0.0
    %189 = vmatmul.mubr.f32.gmra.mrb[0].mxu0 %v93
    %v190 = vpop.f32.mrb[0].mxu0
    %v191 = vadd.f32 0.0, %v190
    %v192 = vpop.f32.mrb[0].mxu0
    %193 = vdwg.mxu0
    %s194 = scalar_lea.vmem %s2, 32
    %v195 = vld [vmem:[%s194] sm:$0xff]
    %v196 = vld [vmem:[%s194 + $0x8] sm:$0xff]
    %v197 = vld [vmem:[%s194 + $0x10] sm:$0xff]
    %v198 = vld [vmem:[%s194 + $0x18] sm:$0xf]
    %v200 = vsel %vm95, %v198, 0
    %202 = vmatprep.subr.mxu0 0.0
    %203 = vmatpush1.msra.mxu0 %v195
    %204 = vmatprep.subr.mxu0 0.0
    %205 = vmatpush1.msra.mxu0 %v196
    %206 = vmatprep.subr.mxu0 0.0
    %207 = vmatpush1.msra.mxu0 %v197
    %208 = vmatprep.subr.mxu0 0.0
    %209 = vmatpush1.msra.mxu0 %v200
    %210 = vmatprep.subr.mxu0 0.0
    %211 = vmatpush1.msra.mxu0 0.0
    %212 = vmatprep.subr.mxu0 0.0
    %213 = vmatpush1.msra.mxu0 0.0
    %214 = vmatprep.subr.mxu0 0.0
    %215 = vmatpush1.msra.mxu0 0.0
    %216 = vmatprep.subr.mxu0 0.0
    %217 = vmatpush1.msra.mxu0 0.0
    %218 = vmatprep.subr.mxu0 0.0
    %219 = vmatpush1.msra.mxu0 0.0
    %220 = vmatprep.subr.mxu0 0.0
    %221 = vmatpush1.msra.mxu0 0.0
    %222 = vmatprep.subr.mxu0 0.0
    %223 = vmatpush1.msra.mxu0 0.0
    %224 = vmatprep.subr.mxu0 0.0
    %225 = vmatpush1.msra.mxu0 0.0
    %226 = vmatprep.subr.mxu0 0.0
    %227 = vmatpush1.msra.mxu0 0.0
    %228 = vmatprep.subr.mxu0 0.0
    %229 = vmatpush1.msra.mxu0 0.0
    %230 = vmatprep.subr.mxu0 0.0
    %231 = vmatpush1.msra.mxu0 0.0
    %232 = vmatprep.subr.mxu0 0.0
    %233 = vmatpush1.msra.mxu0 0.0
    %234 = vmatprep.subr.mxu0 0.0
    %235 = vmatpush1.msra.mxu0 0.0
    %236 = vmatprep.subr.mxu0 0.0
    %237 = vmatpush1.msra.mxu0 0.0
    %238 = vmatprep.subr.mxu0 0.0
    %239 = vmatpush1.msra.mxu0 0.0
    %240 = vmatprep.subr.mxu0 0.0
    %241 = vmatpush1.msra.mxu0 0.0
    %242 = vmatprep.subr.mxu0 0.0
    %243 = vmatpush1.msra.mxu0 0.0
    %244 = vmatprep.subr.mxu0 0.0
    %245 = vmatpush1.msra.mxu0 0.0
    %246 = vmatprep.subr.mxu0 0.0
    %247 = vmatpush1.msra.mxu0 0.0
    %248 = vmatprep.subr.mxu0 0.0
    %249 = vmatpush1.msra.mxu0 0.0
    %250 = vmatprep.subr.mxu0 0.0
    %251 = vmatpush1.msra.mxu0 0.0
    %252 = vmatprep.subr.mxu0 0.0
    %253 = vmatpush1.msra.mxu0 0.0
    %254 = vmatprep.subr.mxu0 0.0
    %255 = vmatpush1.msra.mxu0 0.0
    %256 = vmatprep.subr.mxu0 0.0
    %257 = vmatpush1.msra.mxu0 0.0
    %258 = vmatprep.subr.mxu0 0.0
    %259 = vmatpush1.msra.mxu0 0.0
    %260 = vmatprep.subr.mxu0 0.0
    %261 = vmatpush1.msra.mxu0 0.0
    %262 = vmatprep.subr.mxu0 0.0
    %263 = vmatpush1.msra.mxu0 0.0
    %264 = vmatprep.subr.mxu0 0.0
    %265 = vmatpush1.msra.mxu0 0.0
    %266 = vmatprep.mubr.f32.mxu0 0.0
    %267 = vmatmul.mubr.f32.gmra.mrb[0].mxu0 %v78
    %v268 = vpop.f32.mrb[0].mxu0
    %v269 = vadd.f32 0.0, %v268
    %v270 = vpop.f32.mrb[0].mxu0
    %271 = vmatprep.mubr.f32.mxu0 0.0
    %272 = vmatmul.mubr.f32.gmra.mrb[0].mxu0 %v81
    %v273 = vpop.f32.mrb[0].mxu0
    %v274 = vadd.f32 0.0, %v273
    %v275 = vpop.f32.mrb[0].mxu0
    %276 = vmatprep.mubr.f32.mxu0 0.0
    %277 = vmatmul.mubr.f32.gmra.mrb[0].mxu0 %v84
    %v278 = vpop.f32.mrb[0].mxu0
    %v279 = vadd.f32 0.0, %v278
    %v280 = vpop.f32.mrb[0].mxu0
    %281 = vmatprep.mubr.f32.mxu0 0.0
    %282 = vmatmul.mubr.f32.gmra.mrb[0].mxu0 %v87
    %v283 = vpop.f32.mrb[0].mxu0
    %v284 = vadd.f32 0.0, %v283
    %v285 = vpop.f32.mrb[0].mxu0
    %286 = vmatprep.mubr.f32.mxu0 0.0
    %287 = vmatmul.mubr.f32.gmra.mrb[0].mxu0 %v90
    %v288 = vpop.f32.mrb[0].mxu0
    %v289 = vadd.f32 0.0, %v288
    %v290 = vpop.f32.mrb[0].mxu0
    %291 = vmatprep.mubr.f32.mxu0 0.0
    %292 = vmatmul.mubr.f32.gmra.mrb[0].mxu0 %v93
    %v293 = vpop.f32.mrb[0].mxu0
    %v294 = vadd.f32 0.0, %v293
    %v295 = vpop.f32.mrb[0].mxu0
    %296 = vdwg.mxu0
    %v298 = vsel %vm76, %v51, 0
    %v301 = vsel %vm76, %v52, 0
    %v304 = vsel %vm76, %v53, 0
    %v307 = vsel %vm76, %v54, 0
    %v310 = vsel %vm76, %v55, 0
    %v313 = vsel %vm76, %v56, 0
    %v316 = vsel %vm95, %v60, 0
    %318 = vmatprep.subr.mxu0 0.0
    %319 = vmatpush1.msra.mxu0 %v57
    %320 = vmatprep.subr.mxu0 0.0
    %321 = vmatpush1.msra.mxu0 %v58
    %322 = vmatprep.subr.mxu0 0.0
    %323 = vmatpush1.msra.mxu0 %v59
    %324 = vmatprep.subr.mxu0 0.0
    %325 = vmatpush1.msra.mxu0 %v316
    %326 = vmatprep.subr.mxu0 0.0
    %327 = vmatpush1.msra.mxu0 0.0
    %328 = vmatprep.subr.mxu0 0.0
    %329 = vmatpush1.msra.mxu0 0.0
    %330 = vmatprep.subr.mxu0 0.0
    %331 = vmatpush1.msra.mxu0 0.0
    %332 = vmatprep.subr.mxu0 0.0
    %333 = vmatpush1.msra.mxu0 0.0
    %334 = vmatprep.subr.mxu0 0.0
    %335 = vmatpush1.msra.mxu0 0.0
    %336 = vmatprep.subr.mxu0 0.0
    %337 = vmatpush1.msra.mxu0 0.0
    %338 = vmatprep.subr.mxu0 0.0
    %339 = vmatpush1.msra.mxu0 0.0
    %340 = vmatprep.subr.mxu0 0.0
    %341 = vmatpush1.msra.mxu0 0.0
    %342 = vmatprep.subr.mxu0 0.0
    %343 = vmatpush1.msra.mxu0 0.0
    %344 = vmatprep.subr.mxu0 0.0
    %345 = vmatpush1.msra.mxu0 0.0
    %346 = vmatprep.subr.mxu0 0.0
    %347 = vmatpush1.msra.mxu0 0.0
    %348 = vmatprep.subr.mxu0 0.0
    %349 = vmatpush1.msra.mxu0 0.0
    %350 = vmatprep.subr.mxu0 0.0
    %351 = vmatpush1.msra.mxu0 0.0
    %352 = vmatprep.subr.mxu0 0.0
    %353 = vmatpush1.msra.mxu0 0.0
    %354 = vmatprep.subr.mxu0 0.0
    %355 = vmatpush1.msra.mxu0 0.0
    %356 = vmatprep.subr.mxu0 0.0
    %357 = vmatpush1.msra.mxu0 0.0
    %358 = vmatprep.subr.mxu0 0.0
    %359 = vmatpush1.msra.mxu0 0.0
    %360 = vmatprep.subr.mxu0 0.0
    %361 = vmatpush1.msra.mxu0 0.0
    %362 = vmatprep.subr.mxu0 0.0
    %363 = vmatpush1.msra.mxu0 0.0
    %364 = vmatprep.subr.mxu0 0.0
    %365 = vmatpush1.msra.mxu0 0.0
    %366 = vmatprep.subr.mxu0 0.0
    %367 = vmatpush1.msra.mxu0 0.0
    %368 = vmatprep.subr.mxu0 0.0
    %369 = vmatpush1.msra.mxu0 0.0
    %370 = vmatprep.subr.mxu0 0.0
    %371 = vmatpush1.msra.mxu0 0.0
    %372 = vmatprep.subr.mxu0 0.0
    %373 = vmatpush1.msra.mxu0 0.0
    %374 = vmatprep.subr.mxu0 0.0
    %375 = vmatpush1.msra.mxu0 0.0
    %376 = vmatprep.subr.mxu0 0.0
    %377 = vmatpush1.msra.mxu0 0.0
    %378 = vmatprep.subr.mxu0 0.0
    %379 = vmatpush1.msra.mxu0 0.0
    %380 = vmatprep.subr.mxu0 0.0
    %381 = vmatpush1.msra.mxu0 0.0
    %382 = vmatprep.mubr.f32.mxu0 0.0
    %383 = vmatmul.mubr.f32.gmra.mrb[0].mxu0 %v298
    %v384 = vpop.f32.mrb[0].mxu0
    %v385 = vadd.f32 %v166, %v384
    %v386 = vpop.f32.mrb[0].mxu0
    %387 = vmatprep.mubr.f32.mxu0 0.0
    %388 = vmatmul.mubr.f32.gmra.mrb[0].mxu0 %v301
    %v389 = vpop.f32.mrb[0].mxu0
    %v390 = vadd.f32 %v171, %v389
    %v391 = vpop.f32.mrb[0].mxu0
    %392 = vmatprep.mubr.f32.mxu0 0.0
    %393 = vmatmul.mubr.f32.gmra.mrb[0].mxu0 %v304
    %v394 = vpop.f32.mrb[0].mxu0
    %v395 = vadd.f32 %v176, %v394
    %v396 = vpop.f32.mrb[0].mxu0
    %397 = vmatprep.mubr.f32.mxu0 0.0
    %398 = vmatmul.mubr.f32.gmra.mrb[0].mxu0 %v307
    %v399 = vpop.f32.mrb[0].mxu0
    %v400 = vadd.f32 %v181, %v399
    %v401 = vpop.f32.mrb[0].mxu0
    %402 = vmatprep.mubr.f32.mxu0 0.0
    %403 = vmatmul.mubr.f32.gmra.mrb[0].mxu0 %v310
    %v404 = vpop.f32.mrb[0].mxu0
    %v405 = vadd.f32 %v186, %v404
    %v406 = vpop.f32.mrb[0].mxu0
    %407 = vmatprep.mubr.f32.mxu0 0.0
    %408 = vmatmul.mubr.f32.gmra.mrb[0].mxu0 %v313
    %v409 = vpop.f32.mrb[0].mxu0
    %v410 = vadd.f32 %v191, %v409
    %v411 = vpop.f32.mrb[0].mxu0
    %412 = vdwg.mxu0
    %v414 = vsel %vm95, %v64, 0
    %416 = vmatprep.subr.mxu0 0.0
    %417 = vmatpush1.msra.mxu0 %v61
    %418 = vmatprep.subr.mxu0 0.0
    %419 = vmatpush1.msra.mxu0 %v62
    %420 = vmatprep.subr.mxu0 0.0
    %421 = vmatpush1.msra.mxu0 %v63
    %422 = vmatprep.subr.mxu0 0.0
    %423 = vmatpush1.msra.mxu0 %v414
    %424 = vmatprep.subr.mxu0 0.0
    %425 = vmatpush1.msra.mxu0 0.0
    %426 = vmatprep.subr.mxu0 0.0
    %427 = vmatpush1.msra.mxu0 0.0
    %428 = vmatprep.subr.mxu0 0.0
    %429 = vmatpush1.msra.mxu0 0.0
    %430 = vmatprep.subr.mxu0 0.0
    %431 = vmatpush1.msra.mxu0 0.0
    %432 = vmatprep.subr.mxu0 0.0
    %433 = vmatpush1.msra.mxu0 0.0
    %434 = vmatprep.subr.mxu0 0.0
    %435 = vmatpush1.msra.mxu0 0.0
    %436 = vmatprep.subr.mxu0 0.0
    %437 = vmatpush1.msra.mxu0 0.0
    %438 = vmatprep.subr.mxu0 0.0
    %439 = vmatpush1.msra.mxu0 0.0
    %440 = vmatprep.subr.mxu0 0.0
    %441 = vmatpush1.msra.mxu0 0.0
    %442 = vmatprep.subr.mxu0 0.0
    %443 = vmatpush1.msra.mxu0 0.0
    %444 = vmatprep.subr.mxu0 0.0
    %445 = vmatpush1.msra.mxu0 0.0
    %446 = vmatprep.subr.mxu0 0.0
    %447 = vmatpush1.msra.mxu0 0.0
    %448 = vmatprep.subr.mxu0 0.0
    %449 = vmatpush1.msra.mxu0 0.0
    %450 = vmatprep.subr.mxu0 0.0
    %451 = vmatpush1.msra.mxu0 0.0
    %452 = vmatprep.subr.mxu0 0.0
    %453 = vmatpush1.msra.mxu0 0.0
    %454 = vmatprep.subr.mxu0 0.0
    %455 = vmatpush1.msra.mxu0 0.0
    %456 = vmatprep.subr.mxu0 0.0
    %457 = vmatpush1.msra.mxu0 0.0
    %458 = vmatprep.subr.mxu0 0.0
    %459 = vmatpush1.msra.mxu0 0.0
    %460 = vmatprep.subr.mxu0 0.0
    %461 = vmatpush1.msra.mxu0 0.0
    %462 = vmatprep.subr.mxu0 0.0
    %463 = vmatpush1.msra.mxu0 0.0
    %464 = vmatprep.subr.mxu0 0.0
    %465 = vmatpush1.msra.mxu0 0.0
    %466 = vmatprep.subr.mxu0 0.0
    %467 = vmatpush1.msra.mxu0 0.0
    %468 = vmatprep.subr.mxu0 0.0
    %469 = vmatpush1.msra.mxu0 0.0
    %470 = vmatprep.subr.mxu0 0.0
    %471 = vmatpush1.msra.mxu0 0.0
    %472 = vmatprep.subr.mxu0 0.0
    %473 = vmatpush1.msra.mxu0 0.0
    %474 = vmatprep.subr.mxu0 0.0
    %475 = vmatpush1.msra.mxu0 0.0
    %476 = vmatprep.subr.mxu0 0.0
    %477 = vmatpush1.msra.mxu0 0.0
    %478 = vmatprep.subr.mxu0 0.0
    %479 = vmatpush1.msra.mxu0 0.0
    %480 = vmatprep.mubr.f32.mxu0 0.0
    %481 = vmatmul.mubr.f32.gmra.mrb[0].mxu0 %v298
    %v482 = vpop.f32.mrb[0].mxu0
    %v483 = vadd.f32 %v269, %v482
    %v484 = vpop.f32.mrb[0].mxu0
    %485 = vmatprep.mubr.f32.mxu0 0.0
    %486 = vmatmul.mubr.f32.gmra.mrb[0].mxu0 %v301
    %v487 = vpop.f32.mrb[0].mxu0
    %v488 = vadd.f32 %v274, %v487
    %v489 = vpop.f32.mrb[0].mxu0
    %490 = vmatprep.mubr.f32.mxu0 0.0
    %491 = vmatmul.mubr.f32.gmra.mrb[0].mxu0 %v304
    %v492 = vpop.f32.mrb[0].mxu0
    %v493 = vadd.f32 %v279, %v492
    %v494 = vpop.f32.mrb[0].mxu0
    %495 = vmatprep.mubr.f32.mxu0 0.0
    %496 = vmatmul.mubr.f32.gmra.mrb[0].mxu0 %v307
    %v497 = vpop.f32.mrb[0].mxu0
    %v498 = vadd.f32 %v284, %v497
    %v499 = vpop.f32.mrb[0].mxu0
    %500 = vmatprep.mubr.f32.mxu0 0.0
    %501 = vmatmul.mubr.f32.gmra.mrb[0].mxu0 %v310
    %v502 = vpop.f32.mrb[0].mxu0
    %v503 = vadd.f32 %v289, %v502
    %v504 = vpop.f32.mrb[0].mxu0
    %505 = vmatprep.mubr.f32.mxu0 0.0
    %506 = vmatmul.mubr.f32.gmra.mrb[0].mxu0 %v313
    %v507 = vpop.f32.mrb[0].mxu0
    %v508 = vadd.f32 %v294, %v507
    %v509 = vpop.f32.mrb[0].mxu0
    %510 = vdwg.mxu0
    %v511 = vld [vmem:[%s0 + $0x2] sm:$0xff]
    %v512 = vld [vmem:[%s0 + $0xa] sm:$0xff]
    %v513 = vld [vmem:[%s0 + $0x12] sm:$0xff]
    %v514 = vld [vmem:[%s0 + $0x22] sm:$0xff]
    %v515 = vld [vmem:[%s0 + $0x2a] sm:$0xff]
    %v516 = vld [vmem:[%s0 + $0x32] sm:$0xff]
    %s517 = scalar_lea.vmem %s1, 64
    %v518 = vld [vmem:[%s517] sm:$0xff]
    %v519 = vld [vmem:[%s517 + $0x8] sm:$0xff]
    %v520 = vld [vmem:[%s517 + $0x10] sm:$0xff]
    %v521 = vld [vmem:[%s517 + $0x18] sm:$0xf]
    %v523 = vsel %vm76, %v511, 0
    %v526 = vsel %vm76, %v512, 0
    %v529 = vsel %vm76, %v513, 0
    %v532 = vsel %vm76, %v514, 0
    %v535 = vsel %vm76, %v515, 0
    %v538 = vsel %vm76, %v516, 0
    %v541 = vsel %vm95, %v521, 0
    %543 = vmatprep.subr.mxu0 0.0
    %544 = vmatpush1.msra.mxu0 %v518
    %545 = vmatprep.subr.mxu0 0.0
    %546 = vmatpush1.msra.mxu0 %v519
    %547 = vmatprep.subr.mxu0 0.0
    %548 = vmatpush1.msra.mxu0 %v520
    %549 = vmatprep.subr.mxu0 0.0
    %550 = vmatpush1.msra.mxu0 %v541
    %551 = vmatprep.subr.mxu0 0.0
    %552 = vmatpush1.msra.mxu0 0.0
    %553 = vmatprep.subr.mxu0 0.0
    %554 = vmatpush1.msra.mxu0 0.0
    %555 = vmatprep.subr.mxu0 0.0
    %556 = vmatpush1.msra.mxu0 0.0
    %557 = vmatprep.subr.mxu0 0.0
    %558 = vmatpush1.msra.mxu0 0.0
    %559 = vmatprep.subr.mxu0 0.0
    %560 = vmatpush1.msra.mxu0 0.0
    %561 = vmatprep.subr.mxu0 0.0
    %562 = vmatpush1.msra.mxu0 0.0
    %563 = vmatprep.subr.mxu0 0.0
    %564 = vmatpush1.msra.mxu0 0.0
    %565 = vmatprep.subr.mxu0 0.0
    %566 = vmatpush1.msra.mxu0 0.0
    %567 = vmatprep.subr.mxu0 0.0
    %568 = vmatpush1.msra.mxu0 0.0
    %569 = vmatprep.subr.mxu0 0.0
    %570 = vmatpush1.msra.mxu0 0.0
    %571 = vmatprep.subr.mxu0 0.0
    %572 = vmatpush1.msra.mxu0 0.0
    %573 = vmatprep.subr.mxu0 0.0
    %574 = vmatpush1.msra.mxu0 0.0
    %575 = vmatprep.subr.mxu0 0.0
    %576 = vmatpush1.msra.mxu0 0.0
    %577 = vmatprep.subr.mxu0 0.0
    %578 = vmatpush1.msra.mxu0 0.0
    %579 = vmatprep.subr.mxu0 0.0
    %580 = vmatpush1.msra.mxu0 0.0
    %581 = vmatprep.subr.mxu0 0.0
    %582 = vmatpush1.msra.mxu0 0.0
    %583 = vmatprep.subr.mxu0 0.0
    %584 = vmatpush1.msra.mxu0 0.0
    %585 = vmatprep.subr.mxu0 0.0
    %586 = vmatpush1.msra.mxu0 0.0
    %587 = vmatprep.subr.mxu0 0.0
    %588 = vmatpush1.msra.mxu0 0.0
    %589 = vmatprep.subr.mxu0 0.0
    %590 = vmatpush1.msra.mxu0 0.0
    %591 = vmatprep.subr.mxu0 0.0
    %592 = vmatpush1.msra.mxu0 0.0
    %593 = vmatprep.subr.mxu0 0.0
    %594 = vmatpush1.msra.mxu0 0.0
    %595 = vmatprep.subr.mxu0 0.0
    %596 = vmatpush1.msra.mxu0 0.0
    %597 = vmatprep.subr.mxu0 0.0
    %598 = vmatpush1.msra.mxu0 0.0
    %599 = vmatprep.subr.mxu0 0.0
    %600 = vmatpush1.msra.mxu0 0.0
    %601 = vmatprep.subr.mxu0 0.0
    %602 = vmatpush1.msra.mxu0 0.0
    %603 = vmatprep.subr.mxu0 0.0
    %604 = vmatpush1.msra.mxu0 0.0
    %605 = vmatprep.subr.mxu0 0.0
    %606 = vmatpush1.msra.mxu0 0.0
    %607 = vmatprep.mubr.f32.mxu0 0.0
    %608 = vmatmul.mubr.f32.gmra.mrb[0].mxu0 %v523
    %v609 = vpop.f32.mrb[0].mxu0
    %v610 = vadd.f32 0.0, %v609
    %v611 = vpop.f32.mrb[0].mxu0
    %612 = vmatprep.mubr.f32.mxu0 0.0
    %613 = vmatmul.mubr.f32.gmra.mrb[0].mxu0 %v526
    %v614 = vpop.f32.mrb[0].mxu0
    %v615 = vadd.f32 0.0, %v614
    %v616 = vpop.f32.mrb[0].mxu0
    %617 = vmatprep.mubr.f32.mxu0 0.0
    %618 = vmatmul.mubr.f32.gmra.mrb[0].mxu0 %v529
    %v619 = vpop.f32.mrb[0].mxu0
    %v620 = vadd.f32 0.0, %v619
    %v621 = vpop.f32.mrb[0].mxu0
    %622 = vmatprep.mubr.f32.mxu0 0.0
    %623 = vmatmul.mubr.f32.gmra.mrb[0].mxu0 %v532
    %v624 = vpop.f32.mrb[0].mxu0
    %v625 = vadd.f32 0.0, %v624
    %v626 = vpop.f32.mrb[0].mxu0
    %627 = vmatprep.mubr.f32.mxu0 0.0
    %628 = vmatmul.mubr.f32.gmra.mrb[0].mxu0 %v535
    %v629 = vpop.f32.mrb[0].mxu0
    %v630 = vadd.f32 0.0, %v629
    %v631 = vpop.f32.mrb[0].mxu0
    %632 = vmatprep.mubr.f32.mxu0 0.0
    %633 = vmatmul.mubr.f32.gmra.mrb[0].mxu0 %v538
    %v634 = vpop.f32.mrb[0].mxu0
    %v635 = vadd.f32 0.0, %v634
    %v636 = vpop.f32.mrb[0].mxu0
    %637 = vdwg.mxu0
    %s638 = scalar_lea.vmem %s2, 64
    %v639 = vld [vmem:[%s638] sm:$0xff]
    %v640 = vld [vmem:[%s638 + $0x8] sm:$0xff]
    %v641 = vld [vmem:[%s638 + $0x10] sm:$0xff]
    %v642 = vld [vmem:[%s638 + $0x18] sm:$0xf]
    %v644 = vsel %vm95, %v642, 0
    %646 = vmatprep.subr.mxu0 0.0
    %647 = vmatpush1.msra.mxu0 %v639
    %648 = vmatprep.subr.mxu0 0.0
    %649 = vmatpush1.msra.mxu0 %v640
    %650 = vmatprep.subr.mxu0 0.0
    %651 = vmatpush1.msra.mxu0 %v641
    %652 = vmatprep.subr.mxu0 0.0
    %653 = vmatpush1.msra.mxu0 %v644
    %654 = vmatprep.subr.mxu0 0.0
    %655 = vmatpush1.msra.mxu0 0.0
    %656 = vmatprep.subr.mxu0 0.0
    %657 = vmatpush1.msra.mxu0 0.0
    %658 = vmatprep.subr.mxu0 0.0
    %659 = vmatpush1.msra.mxu0 0.0
    %660 = vmatprep.subr.mxu0 0.0
    %661 = vmatpush1.msra.mxu0 0.0
    %662 = vmatprep.subr.mxu0 0.0
    %663 = vmatpush1.msra.mxu0 0.0
    %664 = vmatprep.subr.mxu0 0.0
    %665 = vmatpush1.msra.mxu0 0.0
    %666 = vmatprep.subr.mxu0 0.0
    %667 = vmatpush1.msra.mxu0 0.0
    %668 = vmatprep.subr.mxu0 0.0
    %669 = vmatpush1.msra.mxu0 0.0
    %670 = vmatprep.subr.mxu0 0.0
    %671 = vmatpush1.msra.mxu0 0.0
    %672 = vmatprep.subr.mxu0 0.0
    %673 = vmatpush1.msra.mxu0 0.0
    %674 = vmatprep.subr.mxu0 0.0
    %675 = vmatpush1.msra.mxu0 0.0
    %676 = vmatprep.subr.mxu0 0.0
    %677 = vmatpush1.msra.mxu0 0.0
    %678 = vmatprep.subr.mxu0 0.0
    %679 = vmatpush1.msra.mxu0 0.0
    %680 = vmatprep.subr.mxu0 0.0
    %681 = vmatpush1.msra.mxu0 0.0
    %682 = vmatprep.subr.mxu0 0.0
    %683 = vmatpush1.msra.mxu0 0.0
    %684 = vmatprep.subr.mxu0 0.0
    %685 = vmatpush1.msra.mxu0 0.0
    %686 = vmatprep.subr.mxu0 0.0
    %687 = vmatpush1.msra.mxu0 0.0
    %688 = vmatprep.subr.mxu0 0.0
    %689 = vmatpush1.msra.mxu0 0.0
    %690 = vmatprep.subr.mxu0 0.0
    %691 = vmatpush1.msra.mxu0 0.0
    %692 = vmatprep.subr.mxu0 0.0
    %693 = vmatpush1.msra.mxu0 0.0
    %694 = vmatprep.subr.mxu0 0.0
    %695 = vmatpush1.msra.mxu0 0.0
    %696 = vmatprep.subr.mxu0 0.0
    %697 = vmatpush1.msra.mxu0 0.0
    %698 = vmatprep.subr.mxu0 0.0
    %699 = vmatpush1.msra.mxu0 0.0
    %700 = vmatprep.subr.mxu0 0.0
    %701 = vmatpush1.msra.mxu0 0.0
    %702 = vmatprep.subr.mxu0 0.0
    %703 = vmatpush1.msra.mxu0 0.0
    %704 = vmatprep.subr.mxu0 0.0
    %705 = vmatpush1.msra.mxu0 0.0
    %706 = vmatprep.subr.mxu0 0.0
    %707 = vmatpush1.msra.mxu0 0.0
    %708 = vmatprep.subr.mxu0 0.0
    %709 = vmatpush1.msra.mxu0 0.0
    %710 = vmatprep.mubr.f32.mxu0 0.0
    %711 = vmatmul.mubr.f32.gmra.mrb[0].mxu0 %v523
    %v712 = vpop.f32.mrb[0].mxu0
    %v713 = vadd.f32 0.0, %v712
    %v714 = vpop.f32.mrb[0].mxu0
    %715 = vmatprep.mubr.f32.mxu0 0.0
    %716 = vmatmul.mubr.f32.gmra.mrb[0].mxu0 %v526
    %v717 = vpop.f32.mrb[0].mxu0
    %v718 = vadd.f32 0.0, %v717
    %v719 = vpop.f32.mrb[0].mxu0
    %720 = vmatprep.mubr.f32.mxu0 0.0
    %721 = vmatmul.mubr.f32.gmra.mrb[0].mxu0 %v529
    %v722 = vpop.f32.mrb[0].mxu0
    %v723 = vadd.f32 0.0, %v722
    %v724 = vpop.f32.mrb[0].mxu0
    %725 = vmatprep.mubr.f32.mxu0 0.0
    %726 = vmatmul.mubr.f32.gmra.mrb[0].mxu0 %v532
    %v727 = vpop.f32.mrb[0].mxu0
    %v728 = vadd.f32 0.0, %v727
    %v729 = vpop.f32.mrb[0].mxu0
    %730 = vmatprep.mubr.f32.mxu0 0.0
    %731 = vmatmul.mubr.f32.gmra.mrb[0].mxu0 %v535
    %v732 = vpop.f32.mrb[0].mxu0
    %v733 = vadd.f32 0.0, %v732
    %v734 = vpop.f32.mrb[0].mxu0
    %735 = vmatprep.mubr.f32.mxu0 0.0
    %736 = vmatmul.mubr.f32.gmra.mrb[0].mxu0 %v538
    %v737 = vpop.f32.mrb[0].mxu0
    %v738 = vadd.f32 0.0, %v737
    %v739 = vpop.f32.mrb[0].mxu0
    %740 = vdwg.mxu0
    %v741 = vadd.f32 %v385, %v610
    %v742 = vadd.f32 %v390, %v615
    %v743 = vadd.f32 %v395, %v620
    %v744 = vadd.f32 %v400, %v625
    %v745 = vadd.f32 %v405, %v630
    %v746 = vadd.f32 %v410, %v635
    %v747 = vadd.f32 %v483, %v713
    %v748 = vadd.f32 %v488, %v718
    %v749 = vadd.f32 %v493, %v723
    %v750 = vadd.f32 %v498, %v728
    %v751 = vadd.f32 %v503, %v733
    %v752 = vadd.f32 %v508, %v738
    %v753 = vld [vmem:[%s0 + $0x3] sm:$0xff]
    %v754 = vld [vmem:[%s0 + $0xb] sm:$0xff]
    %v755 = vld [vmem:[%s0 + $0x13] sm:$0xff]
    %v756 = vld [vmem:[%s0 + $0x23] sm:$0xff]
    %v757 = vld [vmem:[%s0 + $0x2b] sm:$0xff]
    %v758 = vld [vmem:[%s0 + $0x33] sm:$0xff]
    %s759 = scalar_lea.vmem %s1, 96
    %v760 = vld [vmem:[%s759] sm:$0xff]
    %v761 = vld [vmem:[%s759 + $0x8] sm:$0xff]
    %v762 = vld [vmem:[%s759 + $0x10] sm:$0xff]
    %v763 = vld [vmem:[%s759 + $0x18] sm:$0xf]
    %v765 = vsel %vm76, %v753, 0
    %v768 = vsel %vm76, %v754, 0
    %v771 = vsel %vm76, %v755, 0
    %v774 = vsel %vm76, %v756, 0
    %v777 = vsel %vm76, %v757, 0
    %v780 = vsel %vm76, %v758, 0
    %v783 = vsel %vm95, %v763, 0
    %785 = vmatprep.subr.mxu0 0.0
    %786 = vmatpush1.msra.mxu0 %v760
    %787 = vmatprep.subr.mxu0 0.0
    %788 = vmatpush1.msra.mxu0 %v761
    %789 = vmatprep.subr.mxu0 0.0
    %790 = vmatpush1.msra.mxu0 %v762
    %791 = vmatprep.subr.mxu0 0.0
    %792 = vmatpush1.msra.mxu0 %v783
    %793 = vmatprep.subr.mxu0 0.0
    %794 = vmatpush1.msra.mxu0 0.0
    %795 = vmatprep.subr.mxu0 0.0
    %796 = vmatpush1.msra.mxu0 0.0
    %797 = vmatprep.subr.mxu0 0.0
    %798 = vmatpush1.msra.mxu0 0.0
    %799 = vmatprep.subr.mxu0 0.0
    %800 = vmatpush1.msra.mxu0 0.0
    %801 = vmatprep.subr.mxu0 0.0
    %802 = vmatpush1.msra.mxu0 0.0
    %803 = vmatprep.subr.mxu0 0.0
    %804 = vmatpush1.msra.mxu0 0.0
    %805 = vmatprep.subr.mxu0 0.0
    %806 = vmatpush1.msra.mxu0 0.0
    %807 = vmatprep.subr.mxu0 0.0
    %808 = vmatpush1.msra.mxu0 0.0
    %809 = vmatprep.subr.mxu0 0.0
    %810 = vmatpush1.msra.mxu0 0.0
    %811 = vmatprep.subr.mxu0 0.0
    %812 = vmatpush1.msra.mxu0 0.0
    %813 = vmatprep.subr.mxu0 0.0
    %814 = vmatpush1.msra.mxu0 0.0
    %815 = vmatprep.subr.mxu0 0.0
    %816 = vmatpush1.msra.mxu0 0.0
    %817 = vmatprep.subr.mxu0 0.0
    %818 = vmatpush1.msra.mxu0 0.0
    %819 = vmatprep.subr.mxu0 0.0
    %820 = vmatpush1.msra.mxu0 0.0
    %821 = vmatprep.subr.mxu0 0.0
    %822 = vmatpush1.msra.mxu0 0.0
    %823 = vmatprep.subr.mxu0 0.0
    %824 = vmatpush1.msra.mxu0 0.0
    %825 = vmatprep.subr.mxu0 0.0
    %826 = vmatpush1.msra.mxu0 0.0
    %827 = vmatprep.subr.mxu0 0.0
    %828 = vmatpush1.msra.mxu0 0.0
    %829 = vmatprep.subr.mxu0 0.0
    %830 = vmatpush1.msra.mxu0 0.0
    %831 = vmatprep.subr.mxu0 0.0
    %832 = vmatpush1.msra.mxu0 0.0
    %833 = vmatprep.subr.mxu0 0.0
    %834 = vmatpush1.msra.mxu0 0.0
    %835 = vmatprep.subr.mxu0 0.0
    %836 = vmatpush1.msra.mxu0 0.0
    %837 = vmatprep.subr.mxu0 0.0
    %838 = vmatpush1.msra.mxu0 0.0
    %839 = vmatprep.subr.mxu0 0.0
    %840 = vmatpush1.msra.mxu0 0.0
    %841 = vmatprep.subr.mxu0 0.0
    %842 = vmatpush1.msra.mxu0 0.0
    %843 = vmatprep.subr.mxu0 0.0
    %844 = vmatpush1.msra.mxu0 0.0
    %845 = vmatprep.subr.mxu0 0.0
    %846 = vmatpush1.msra.mxu0 0.0
    %847 = vmatprep.subr.mxu0 0.0
    %848 = vmatpush1.msra.mxu0 0.0
    %849 = vmatprep.mubr.f32.mxu0 0.0
    %850 = vmatmul.mubr.f32.gmra.mrb[0].mxu0 %v765
    %v851 = vpop.f32.mrb[0].mxu0
    %v852 = vadd.f32 0.0, %v851
    %v853 = vpop.f32.mrb[0].mxu0
    %854 = vmatprep.mubr.f32.mxu0 0.0
    %855 = vmatmul.mubr.f32.gmra.mrb[0].mxu0 %v768
    %v856 = vpop.f32.mrb[0].mxu0
    %v857 = vadd.f32 0.0, %v856
    %v858 = vpop.f32.mrb[0].mxu0
    %859 = vmatprep.mubr.f32.mxu0 0.0
    %860 = vmatmul.mubr.f32.gmra.mrb[0].mxu0 %v771
    %v861 = vpop.f32.mrb[0].mxu0
    %v862 = vadd.f32 0.0, %v861
    %v863 = vpop.f32.mrb[0].mxu0
    %864 = vmatprep.mubr.f32.mxu0 0.0
    %865 = vmatmul.mubr.f32.gmra.mrb[0].mxu0 %v774
    %v866 = vpop.f32.mrb[0].mxu0
    %v867 = vadd.f32 0.0, %v866
    %v868 = vpop.f32.mrb[0].mxu0
    %869 = vmatprep.mubr.f32.mxu0 0.0
    %870 = vmatmul.mubr.f32.gmra.mrb[0].mxu0 %v777
    %v871 = vpop.f32.mrb[0].mxu0
    %v872 = vadd.f32 0.0, %v871
    %v873 = vpop.f32.mrb[0].mxu0
    %874 = vmatprep.mubr.f32.mxu0 0.0
    %875 = vmatmul.mubr.f32.gmra.mrb[0].mxu0 %v780
    %v876 = vpop.f32.mrb[0].mxu0
    %v877 = vadd.f32 0.0, %v876
    %v878 = vpop.f32.mrb[0].mxu0
    %879 = vdwg.mxu0
    %s880 = scalar_lea.vmem %s2, 96
    %v881 = vld [vmem:[%s880] sm:$0xff]
    %v882 = vld [vmem:[%s880 + $0x8] sm:$0xff]
    %v883 = vld [vmem:[%s880 + $0x10] sm:$0xff]
    %v884 = vld [vmem:[%s880 + $0x18] sm:$0xf]
    %v886 = vsel %vm95, %v884, 0
    %888 = vmatprep.subr.mxu0 0.0
    %889 = vmatpush1.msra.mxu0 %v881
    %890 = vmatprep.subr.mxu0 0.0
    %891 = vmatpush1.msra.mxu0 %v882
    %892 = vmatprep.subr.mxu0 0.0
    %893 = vmatpush1.msra.mxu0 %v883
    %894 = vmatprep.subr.mxu0 0.0
    %895 = vmatpush1.msra.mxu0 %v886
    %896 = vmatprep.subr.mxu0 0.0
    %897 = vmatpush1.msra.mxu0 0.0
    %898 = vmatprep.subr.mxu0 0.0
    %899 = vmatpush1.msra.mxu0 0.0
    %900 = vmatprep.subr.mxu0 0.0
    %901 = vmatpush1.msra.mxu0 0.0
    %902 = vmatprep.subr.mxu0 0.0
    %903 = vmatpush1.msra.mxu0 0.0
    %904 = vmatprep.subr.mxu0 0.0
    %905 = vmatpush1.msra.mxu0 0.0
    %906 = vmatprep.subr.mxu0 0.0
    %907 = vmatpush1.msra.mxu0 0.0
    %908 = vmatprep.subr.mxu0 0.0
    %909 = vmatpush1.msra.mxu0 0.0
    %910 = vmatprep.subr.mxu0 0.0
    %911 = vmatpush1.msra.mxu0 0.0
    %912 = vmatprep.subr.mxu0 0.0
    %913 = vmatpush1.msra.mxu0 0.0
    %914 = vmatprep.subr.mxu0 0.0
    %915 = vmatpush1.msra.mxu0 0.0
    %916 = vmatprep.subr.mxu0 0.0
    %917 = vmatpush1.msra.mxu0 0.0
    %918 = vmatprep.subr.mxu0 0.0
    %919 = vmatpush1.msra.mxu0 0.0
    %920 = vmatprep.subr.mxu0 0.0
    %921 = vmatpush1.msra.mxu0 0.0
    %922 = vmatprep.subr.mxu0 0.0
    %923 = vmatpush1.msra.mxu0 0.0
    %924 = vmatprep.subr.mxu0 0.0
    %925 = vmatpush1.msra.mxu0 0.0
    %926 = vmatprep.subr.mxu0 0.0
    %927 = vmatpush1.msra.mxu0 0.0
    %928 = vmatprep.subr.mxu0 0.0
    %929 = vmatpush1.msra.mxu0 0.0
    %930 = vmatprep.subr.mxu0 0.0
    %931 = vmatpush1.msra.mxu0 0.0
    %932 = vmatprep.subr.mxu0 0.0
    %933 = vmatpush1.msra.mxu0 0.0
    %934 = vmatprep.subr.mxu0 0.0
    %935 = vmatpush1.msra.mxu0 0.0
    %936 = vmatprep.subr.mxu0 0.0
    %937 = vmatpush1.msra.mxu0 0.0
    %938 = vmatprep.subr.mxu0 0.0
    %939 = vmatpush1.msra.mxu0 0.0
    %940 = vmatprep.subr.mxu0 0.0
    %941 = vmatpush1.msra.mxu0 0.0
    %942 = vmatprep.subr.mxu0 0.0
    %943 = vmatpush1.msra.mxu0 0.0
    %944 = vmatprep.subr.mxu0 0.0
    %945 = vmatpush1.msra.mxu0 0.0
    %946 = vmatprep.subr.mxu0 0.0
    %947 = vmatpush1.msra.mxu0 0.0
    %948 = vmatprep.subr.mxu0 0.0
    %949 = vmatpush1.msra.mxu0 0.0
    %950 = vmatprep.subr.mxu0 0.0
    %951 = vmatpush1.msra.mxu0 0.0
    %952 = vmatprep.mubr.f32.mxu0 0.0
    %953 = vmatmul.mubr.f32.gmra.mrb[0].mxu0 %v765
    %v954 = vpop.f32.mrb[0].mxu0
    %v955 = vadd.f32 0.0, %v954
    %v956 = vpop.f32.mrb[0].mxu0
    %957 = vmatprep.mubr.f32.mxu0 0.0
    %958 = vmatmul.mubr.f32.gmra.mrb[0].mxu0 %v768
    %v959 = vpop.f32.mrb[0].mxu0
    %v960 = vadd.f32 0.0, %v959
    %v961 = vpop.f32.mrb[0].mxu0
    %962 = vmatprep.mubr.f32.mxu0 0.0
    %963 = vmatmul.mubr.f32.gmra.mrb[0].mxu0 %v771
    %v964 = vpop.f32.mrb[0].mxu0
    %v965 = vadd.f32 0.0, %v964
    %v966 = vpop.f32.mrb[0].mxu0
    %967 = vmatprep.mubr.f32.mxu0 0.0
    %968 = vmatmul.mubr.f32.gmra.mrb[0].mxu0 %v774
    %v969 = vpop.f32.mrb[0].mxu0
    %v970 = vadd.f32 0.0, %v969
    %v971 = vpop.f32.mrb[0].mxu0
    %972 = vmatprep.mubr.f32.mxu0 0.0
    %973 = vmatmul.mubr.f32.gmra.mrb[0].mxu0 %v777
    %v974 = vpop.f32.mrb[0].mxu0
    %v975 = vadd.f32 0.0, %v974
    %v976 = vpop.f32.mrb[0].mxu0
    %977 = vmatprep.mubr.f32.mxu0 0.0
    %978 = vmatmul.mubr.f32.gmra.mrb[0].mxu0 %v780
    %v979 = vpop.f32.mrb[0].mxu0
    %v980 = vadd.f32 0.0, %v979
    %v981 = vpop.f32.mrb[0].mxu0
    %982 = vdwg.mxu0
    %v983 = vadd.f32 %v741, %v852
    %v984 = vadd.f32 %v742, %v857
    %v985 = vadd.f32 %v743, %v862
    %v986 = vadd.f32 %v744, %v867
    %v987 = vadd.f32 %v745, %v872
    %v988 = vadd.f32 %v746, %v877
    %v989 = vadd.f32 %v747, %v955
    %v990 = vadd.f32 %v748, %v960
    %v991 = vadd.f32 %v749, %v965
    %v992 = vadd.f32 %v750, %v970
    %v993 = vadd.f32 %v751, %v975
    %v994 = vadd.f32 %v752, %v980
    %v995 = vld [vmem:[%s0 + $0x4] sm:$0xff]
    %v996 = vld [vmem:[%s0 + $0xc] sm:$0xff]
    %v997 = vld [vmem:[%s0 + $0x14] sm:$0xff]
    %v998 = vld [vmem:[%s0 + $0x24] sm:$0xff]
    %v999 = vld [vmem:[%s0 + $0x2c] sm:$0xff]
    %v1000 = vld [vmem:[%s0 + $0x34] sm:$0xff]
    %s1001 = scalar_lea.vmem %s1, 128
    %v1002 = vld [vmem:[%s1001] sm:$0xff]
    %v1003 = vld [vmem:[%s1001 + $0x8] sm:$0xff]
    %v1004 = vld [vmem:[%s1001 + $0x10] sm:$0xff]
    %v1005 = vld [vmem:[%s1001 + $0x18] sm:$0xf]
    %v1007 = vsel %vm76, %v995, 0
    %v1010 = vsel %vm76, %v996, 0
    %v1013 = vsel %vm76, %v997, 0
    %v1016 = vsel %vm76, %v998, 0
    %v1019 = vsel %vm76, %v999, 0
    %v1022 = vsel %vm76, %v1000, 0
    %v1025 = vsel %vm95, %v1005, 0
    %1027 = vmatprep.subr.mxu0 0.0
    %1028 = vmatpush1.msra.mxu0 %v1002
    %1029 = vmatprep.subr.mxu0 0.0
    %1030 = vmatpush1.msra.mxu0 %v1003
    %1031 = vmatprep.subr.mxu0 0.0
    %1032 = vmatpush1.msra.mxu0 %v1004
    %1033 = vmatprep.subr.mxu0 0.0
    %1034 = vmatpush1.msra.mxu0 %v1025
    %1035 = vmatprep.subr.mxu0 0.0
    %1036 = vmatpush1.msra.mxu0 0.0
    %1037 = vmatprep.subr.mxu0 0.0
    %1038 = vmatpush1.msra.mxu0 0.0
    %1039 = vmatprep.subr.mxu0 0.0
    %1040 = vmatpush1.msra.mxu0 0.0
    %1041 = vmatprep.subr.mxu0 0.0
    %1042 = vmatpush1.msra.mxu0 0.0
    %1043 = vmatprep.subr.mxu0 0.0
    %1044 = vmatpush1.msra.mxu0 0.0
    %1045 = vmatprep.subr.mxu0 0.0
    %1046 = vmatpush1.msra.mxu0 0.0
    %1047 = vmatprep.subr.mxu0 0.0
    %1048 = vmatpush1.msra.mxu0 0.0
    %1049 = vmatprep.subr.mxu0 0.0
    %1050 = vmatpush1.msra.mxu0 0.0
    %1051 = vmatprep.subr.mxu0 0.0
    %1052 = vmatpush1.msra.mxu0 0.0
    %1053 = vmatprep.subr.mxu0 0.0
    %1054 = vmatpush1.msra.mxu0 0.0
    %1055 = vmatprep.subr.mxu0 0.0
    %1056 = vmatpush1.msra.mxu0 0.0
    %1057 = vmatprep.subr.mxu0 0.0
    %1058 = vmatpush1.msra.mxu0 0.0
    %1059 = vmatprep.subr.mxu0 0.0
    %1060 = vmatpush1.msra.mxu0 0.0
    %1061 = vmatprep.subr.mxu0 0.0
    %1062 = vmatpush1.msra.mxu0 0.0
    %1063 = vmatprep.subr.mxu0 0.0
    %1064 = vmatpush1.msra.mxu0 0.0
    %1065 = vmatprep.subr.mxu0 0.0
    %1066 = vmatpush1.msra.mxu0 0.0
    %1067 = vmatprep.subr.mxu0 0.0
    %1068 = vmatpush1.msra.mxu0 0.0
    %1069 = vmatprep.subr.mxu0 0.0
    %1070 = vmatpush1.msra.mxu0 0.0
    %1071 = vmatprep.subr.mxu0 0.0
    %1072 = vmatpush1.msra.mxu0 0.0
    %1073 = vmatprep.subr.mxu0 0.0
    %1074 = vmatpush1.msra.mxu0 0.0
    %1075 = vmatprep.subr.mxu0 0.0
    %1076 = vmatpush1.msra.mxu0 0.0
    %1077 = vmatprep.subr.mxu0 0.0
    %1078 = vmatpush1.msra.mxu0 0.0
    %1079 = vmatprep.subr.mxu0 0.0
    %1080 = vmatpush1.msra.mxu0 0.0
    %1081 = vmatprep.subr.mxu0 0.0
    %1082 = vmatpush1.msra.mxu0 0.0
    %1083 = vmatprep.subr.mxu0 0.0
    %1084 = vmatpush1.msra.mxu0 0.0
    %1085 = vmatprep.subr.mxu0 0.0
    %1086 = vmatpush1.msra.mxu0 0.0
    %1087 = vmatprep.subr.mxu0 0.0
    %1088 = vmatpush1.msra.mxu0 0.0
    %1089 = vmatprep.subr.mxu0 0.0
    %1090 = vmatpush1.msra.mxu0 0.0
    %1091 = vmatprep.mubr.f32.mxu0 0.0
    %1092 = vmatmul.mubr.f32.gmra.mrb[0].mxu0 %v1007
    %v1093 = vpop.f32.mrb[0].mxu0
    %v1094 = vadd.f32 0.0, %v1093
    %v1095 = vpop.f32.mrb[0].mxu0
    %1096 = vmatprep.mubr.f32.mxu0 0.0
    %1097 = vmatmul.mubr.f32.gmra.mrb[0].mxu0 %v1010
    %v1098 = vpop.f32.mrb[0].mxu0
    %v1099 = vadd.f32 0.0, %v1098
    %v1100 = vpop.f32.mrb[0].mxu0
    %1101 = vmatprep.mubr.f32.mxu0 0.0
    %1102 = vmatmul.mubr.f32.gmra.mrb[0].mxu0 %v1013
    %v1103 = vpop.f32.mrb[0].mxu0
    %v1104 = vadd.f32 0.0, %v1103
    %v1105 = vpop.f32.mrb[0].mxu0
    %1106 = vmatprep.mubr.f32.mxu0 0.0
    %1107 = vmatmul.mubr.f32.gmra.mrb[0].mxu0 %v1016
    %v1108 = vpop.f32.mrb[0].mxu0
    %v1109 = vadd.f32 0.0, %v1108
    %v1110 = vpop.f32.mrb[0].mxu0
    %1111 = vmatprep.mubr.f32.mxu0 0.0
    %1112 = vmatmul.mubr.f32.gmra.mrb[0].mxu0 %v1019
    %v1113 = vpop.f32.mrb[0].mxu0
    %v1114 = vadd.f32 0.0, %v1113
    %v1115 = vpop.f32.mrb[0].mxu0
    %1116 = vmatprep.mubr.f32.mxu0 0.0
    %1117 = vmatmul.mubr.f32.gmra.mrb[0].mxu0 %v1022
    %v1118 = vpop.f32.mrb[0].mxu0
    %v1119 = vadd.f32 0.0, %v1118
    %v1120 = vpop.f32.mrb[0].mxu0
    %1121 = vdwg.mxu0
    %s1122 = scalar_lea.vmem %s2, 128
    %v1123 = vld [vmem:[%s1122] sm:$0xff]
    %v1124 = vld [vmem:[%s1122 + $0x8] sm:$0xff]
    %v1125 = vld [vmem:[%s1122 + $0x10] sm:$0xff]
    %v1126 = vld [vmem:[%s1122 + $0x18] sm:$0xf]
    %v1128 = vsel %vm95, %v1126, 0
    %1130 = vmatprep.subr.mxu0 0.0
    %1131 = vmatpush1.msra.mxu0 %v1123
    %1132 = vmatprep.subr.mxu0 0.0
    %1133 = vmatpush1.msra.mxu0 %v1124
    %1134 = vmatprep.subr.mxu0 0.0
    %1135 = vmatpush1.msra.mxu0 %v1125
    %1136 = vmatprep.subr.mxu0 0.0
    %1137 = vmatpush1.msra.mxu0 %v1128
    %1138 = vmatprep.subr.mxu0 0.0
    %1139 = vmatpush1.msra.mxu0 0.0
    %1140 = vmatprep.subr.mxu0 0.0
    %1141 = vmatpush1.msra.mxu0 0.0
    %1142 = vmatprep.subr.mxu0 0.0
    %1143 = vmatpush1.msra.mxu0 0.0
    %1144 = vmatprep.subr.mxu0 0.0
    %1145 = vmatpush1.msra.mxu0 0.0
    %1146 = vmatprep.subr.mxu0 0.0
    %1147 = vmatpush1.msra.mxu0 0.0
    %1148 = vmatprep.subr.mxu0 0.0
    %1149 = vmatpush1.msra.mxu0 0.0
    %1150 = vmatprep.subr.mxu0 0.0
    %1151 = vmatpush1.msra.mxu0 0.0
    %1152 = vmatprep.subr.mxu0 0.0
    %1153 = vmatpush1.msra.mxu0 0.0
    %1154 = vmatprep.subr.mxu0 0.0
    %1155 = vmatpush1.msra.mxu0 0.0
    %1156 = vmatprep.subr.mxu0 0.0
    %1157 = vmatpush1.msra.mxu0 0.0
    %1158 = vmatprep.subr.mxu0 0.0
    %1159 = vmatpush1.msra.mxu0 0.0
    %1160 = vmatprep.subr.mxu0 0.0
    %1161 = vmatpush1.msra.mxu0 0.0
    %1162 = vmatprep.subr.mxu0 0.0
    %1163 = vmatpush1.msra.mxu0 0.0
    %1164 = vmatprep.subr.mxu0 0.0
    %1165 = vmatpush1.msra.mxu0 0.0
    %1166 = vmatprep.subr.mxu0 0.0
    %1167 = vmatpush1.msra.mxu0 0.0
    %1168 = vmatprep.subr.mxu0 0.0
    %1169 = vmatpush1.msra.mxu0 0.0
    %1170 = vmatprep.subr.mxu0 0.0
    %1171 = vmatpush1.msra.mxu0 0.0
    %1172 = vmatprep.subr.mxu0 0.0
    %1173 = vmatpush1.msra.mxu0 0.0
    %1174 = vmatprep.subr.mxu0 0.0
    %1175 = vmatpush1.msra.mxu0 0.0
    %1176 = vmatprep.subr.mxu0 0.0
    %1177 = vmatpush1.msra.mxu0 0.0
    %1178 = vmatprep.subr.mxu0 0.0
    %1179 = vmatpush1.msra.mxu0 0.0
    %1180 = vmatprep.subr.mxu0 0.0
    %1181 = vmatpush1.msra.mxu0 0.0
    %1182 = vmatprep.subr.mxu0 0.0
    %1183 = vmatpush1.msra.mxu0 0.0
    %1184 = vmatprep.subr.mxu0 0.0
    %1185 = vmatpush1.msra.mxu0 0.0
    %1186 = vmatprep.subr.mxu0 0.0
    %1187 = vmatpush1.msra.mxu0 0.0
    %1188 = vmatprep.subr.mxu0 0.0
    %1189 = vmatpush1.msra.mxu0 0.0
    %1190 = vmatprep.subr.mxu0 0.0
    %1191 = vmatpush1.msra.mxu0 0.0
    %1192 = vmatprep.subr.mxu0 0.0
    %1193 = vmatpush1.msra.mxu0 0.0
    %1194 = vmatprep.mubr.f32.mxu0 0.0
    %1195 = vmatmul.mubr.f32.gmra.mrb[0].mxu0 %v1007
    %v1196 = vpop.f32.mrb[0].mxu0
    %v1197 = vadd.f32 0.0, %v1196
    %v1198 = vpop.f32.mrb[0].mxu0
    %1199 = vmatprep.mubr.f32.mxu0 0.0
    %1200 = vmatmul.mubr.f32.gmra.mrb[0].mxu0 %v1010
    %v1201 = vpop.f32.mrb[0].mxu0
    %v1202 = vadd.f32 0.0, %v1201
    %v1203 = vpop.f32.mrb[0].mxu0
    %1204 = vmatprep.mubr.f32.mxu0 0.0
    %1205 = vmatmul.mubr.f32.gmra.mrb[0].mxu0 %v1013
    %v1206 = vpop.f32.mrb[0].mxu0
    %v1207 = vadd.f32 0.0, %v1206
    %v1208 = vpop.f32.mrb[0].mxu0
    %1209 = vmatprep.mubr.f32.mxu0 0.0
    %1210 = vmatmul.mubr.f32.gmra.mrb[0].mxu0 %v1016
    %v1211 = vpop.f32.mrb[0].mxu0
    %v1212 = vadd.f32 0.0, %v1211
    %v1213 = vpop.f32.mrb[0].mxu0
    %1214 = vmatprep.mubr.f32.mxu0 0.0
    %1215 = vmatmul.mubr.f32.gmra.mrb[0].mxu0 %v1019
    %v1216 = vpop.f32.mrb[0].mxu0
    %v1217 = vadd.f32 0.0, %v1216
    %v1218 = vpop.f32.mrb[0].mxu0
    %1219 = vmatprep.mubr.f32.mxu0 0.0
    %1220 = vmatmul.mubr.f32.gmra.mrb[0].mxu0 %v1022
    %v1221 = vpop.f32.mrb[0].mxu0
    %v1222 = vadd.f32 0.0, %v1221
    %v1223 = vpop.f32.mrb[0].mxu0
    %1224 = vdwg.mxu0
    %v1225 = vadd.f32 %v983, %v1094
    %v1226 = vadd.f32 %v984, %v1099
    %v1227 = vadd.f32 %v985, %v1104
    %v1228 = vadd.f32 %v986, %v1109
    %v1229 = vadd.f32 %v987, %v1114
    %v1230 = vadd.f32 %v988, %v1119
    %v1231 = vadd.f32 %v989, %v1197
    %v1232 = vadd.f32 %v990, %v1202
    %v1233 = vadd.f32 %v991, %v1207
    %v1234 = vadd.f32 %v992, %v1212
    %v1235 = vadd.f32 %v993, %v1217
    %v1236 = vadd.f32 %v994, %v1222
    %v1237 = vmax.f32 %v1225, %v1231
    %v1238 = vmax.f32 %v1226, %v1232
    %v1239 = vmax.f32 %v1227, %v1233
    %v1240 = vmax.f32 %v1228, %v1234
    %v1241 = vmax.f32 %v1229, %v1235
    %v1242 = vmax.f32 %v1230, %v1236
    %v1243 = vld [vmem:[%s3] sm:$0xff]
    %v1244 = vld [vmem:[%s3 + $0x8] sm:$0xff]
    %v1245 = vld [vmem:[%s3 + $0x10] sm:$0xff]
    %v1246 = vld [vmem:[%s3 + $0x18] sm:$0xff]
    %vm1247 = vcmask 392192
    %v1249 = vsel %vm1247, %v1243, 0
    %v1252 = vsel %vm1247, %v1244, 0
    %v1255 = vsel %vm1247, %v1245, 0
    %v1258 = vsel %vm1247, %v1246, 0
    %1260 = vmatprep.subr.mxu0 0.0
    %1261 = vmatpush1.msra.mxu0 %v1237
    %1262 = vmatprep.subr.mxu0 0.0
    %1263 = vmatpush1.msra.mxu0 %v1238
    %1264 = vmatprep.subr.mxu0 0.0
    %1265 = vmatpush1.msra.mxu0 %v1239
    %1266 = vmatprep.subr.mxu0 0.0
    %1267 = vmatpush1.msra.mxu0 %v1240
    %1268 = vmatprep.subr.mxu0 0.0
    %1269 = vmatpush1.msra.mxu0 %v1241
    %1270 = vmatprep.subr.mxu0 0.0
    %1271 = vmatpush1.msra.mxu0 %v1242
    %1272 = vmatprep.subr.mxu0 0.0
    %1273 = vmatpush1.msra.mxu0 0.0
    %1274 = vmatprep.subr.mxu0 0.0
    %1275 = vmatpush1.msra.mxu0 0.0
    %1276 = vmatprep.subr.mxu0 0.0
    %1277 = vmatpush1.msra.mxu0 0.0
    %1278 = vmatprep.subr.mxu0 0.0
    %1279 = vmatpush1.msra.mxu0 0.0
    %1280 = vmatprep.subr.mxu0 0.0
    %1281 = vmatpush1.msra.mxu0 0.0
    %1282 = vmatprep.subr.mxu0 0.0
    %1283 = vmatpush1.msra.mxu0 0.0
    %1284 = vmatprep.subr.mxu0 0.0
    %1285 = vmatpush1.msra.mxu0 0.0
    %1286 = vmatprep.subr.mxu0 0.0
    %1287 = vmatpush1.msra.mxu0 0.0
    %1288 = vmatprep.subr.mxu0 0.0
    %1289 = vmatpush1.msra.mxu0 0.0
    %1290 = vmatprep.subr.mxu0 0.0
    %1291 = vmatpush1.msra.mxu0 0.0
    %1292 = vmatprep.subr.mxu0 0.0
    %1293 = vmatpush1.msra.mxu0 0.0
    %1294 = vmatprep.subr.mxu0 0.0
    %1295 = vmatpush1.msra.mxu0 0.0
    %1296 = vmatprep.subr.mxu0 0.0
    %1297 = vmatpush1.msra.mxu0 0.0
    %1298 = vmatprep.subr.mxu0 0.0
    %1299 = vmatpush1.msra.mxu0 0.0
    %1300 = vmatprep.subr.mxu0 0.0
    %1301 = vmatpush1.msra.mxu0 0.0
    %1302 = vmatprep.subr.mxu0 0.0
    %1303 = vmatpush1.msra.mxu0 0.0
    %1304 = vmatprep.subr.mxu0 0.0
    %1305 = vmatpush1.msra.mxu0 0.0
    %1306 = vmatprep.subr.mxu0 0.0
    %1307 = vmatpush1.msra.mxu0 0.0
    %1308 = vmatprep.subr.mxu0 0.0
    %1309 = vmatpush1.msra.mxu0 0.0
    %1310 = vmatprep.subr.mxu0 0.0
    %1311 = vmatpush1.msra.mxu0 0.0
    %1312 = vmatprep.subr.mxu0 0.0
    %1313 = vmatpush1.msra.mxu0 0.0
    %1314 = vmatprep.subr.mxu0 0.0
    %1315 = vmatpush1.msra.mxu0 0.0
    %1316 = vmatprep.subr.mxu0 0.0
    %1317 = vmatpush1.msra.mxu0 0.0
    %1318 = vmatprep.subr.mxu0 0.0
    %1319 = vmatpush1.msra.mxu0 0.0
    %1320 = vmatprep.subr.mxu0 0.0
    %1321 = vmatpush1.msra.mxu0 0.0
    %1322 = vmatprep.subr.mxu0 0.0
    %1323 = vmatpush1.msra.mxu0 0.0
    %1324 = vmatprep.mubr.f32.mxu0 0.0
    %1325 = vmatmul.mubr.f32.gmra.mrb[0].mxu0 %v1249
    %v1326 = vpop.f32.mrb[0].mxu0
    %v1327 = vadd.f32 0.0, %v1326
    %v1328 = vpop.f32.mrb[0].mxu0
    %1329 = vmatprep.mubr.f32.mxu0 0.0
    %1330 = vmatmul.mubr.f32.gmra.mrb[0].mxu0 %v1252
    %v1331 = vpop.f32.mrb[0].mxu0
    %v1332 = vadd.f32 0.0, %v1331
    %v1333 = vpop.f32.mrb[0].mxu0
    %1334 = vmatprep.mubr.f32.mxu0 0.0
    %1335 = vmatmul.mubr.f32.gmra.mrb[0].mxu0 %v1255
    %v1336 = vpop.f32.mrb[0].mxu0
    %v1337 = vadd.f32 0.0, %v1336
    %v1338 = vpop.f32.mrb[0].mxu0
    %1339 = vmatprep.mubr.f32.mxu0 0.0
    %1340 = vmatmul.mubr.f32.gmra.mrb[0].mxu0 %v1258
    %v1341 = vpop.f32.mrb[0].mxu0
    %v1342 = vadd.f32 0.0, %v1341
    %v1343 = vpop.f32.mrb[0].mxu0
    %1344 = vdwg.mxu0
    %s1345 = scalar_lea.vmem %s3, 32
    %v1346 = vld [vmem:[%s1345] sm:$0xff]
    %v1347 = vld [vmem:[%s1345 + $0x8] sm:$0xff]
    %v1348 = vld [vmem:[%s1345 + $0x10] sm:$0xff]
    %v1349 = vld [vmem:[%s1345 + $0x18] sm:$0xff]
    %v1351 = vsel %vm1247, %v1346, 0
    %v1354 = vsel %vm1247, %v1347, 0
    %v1357 = vsel %vm1247, %v1348, 0
    %v1360 = vsel %vm1247, %v1349, 0
    %1362 = vmatprep.subr.mxu0 0.0
    %1363 = vmatpush1.msra.mxu0 %v1237
    %1364 = vmatprep.subr.mxu0 0.0
    %1365 = vmatpush1.msra.mxu0 %v1238
    %1366 = vmatprep.subr.mxu0 0.0
    %1367 = vmatpush1.msra.mxu0 %v1239
    %1368 = vmatprep.subr.mxu0 0.0
    %1369 = vmatpush1.msra.mxu0 %v1240
    %1370 = vmatprep.subr.mxu0 0.0
    %1371 = vmatpush1.msra.mxu0 %v1241
    %1372 = vmatprep.subr.mxu0 0.0
    %1373 = vmatpush1.msra.mxu0 %v1242
    %1374 = vmatprep.subr.mxu0 0.0
    %1375 = vmatpush1.msra.mxu0 0.0
    %1376 = vmatprep.subr.mxu0 0.0
    %1377 = vmatpush1.msra.mxu0 0.0
    %1378 = vmatprep.subr.mxu0 0.0
    %1379 = vmatpush1.msra.mxu0 0.0
    %1380 = vmatprep.subr.mxu0 0.0
    %1381 = vmatpush1.msra.mxu0 0.0
    %1382 = vmatprep.subr.mxu0 0.0
    %1383 = vmatpush1.msra.mxu0 0.0
    %1384 = vmatprep.subr.mxu0 0.0
    %1385 = vmatpush1.msra.mxu0 0.0
    %1386 = vmatprep.subr.mxu0 0.0
    %1387 = vmatpush1.msra.mxu0 0.0
    %1388 = vmatprep.subr.mxu0 0.0
    %1389 = vmatpush1.msra.mxu0 0.0
    %1390 = vmatprep.subr.mxu0 0.0
    %1391 = vmatpush1.msra.mxu0 0.0
    %1392 = vmatprep.subr.mxu0 0.0
    %1393 = vmatpush1.msra.mxu0 0.0
    %1394 = vmatprep.subr.mxu0 0.0
    %1395 = vmatpush1.msra.mxu0 0.0
    %1396 = vmatprep.subr.mxu0 0.0
    %1397 = vmatpush1.msra.mxu0 0.0
    %1398 = vmatprep.subr.mxu0 0.0
    %1399 = vmatpush1.msra.mxu0 0.0
    %1400 = vmatprep.subr.mxu0 0.0
    %1401 = vmatpush1.msra.mxu0 0.0
    %1402 = vmatprep.subr.mxu0 0.0
    %1403 = vmatpush1.msra.mxu0 0.0
    %1404 = vmatprep.subr.mxu0 0.0
    %1405 = vmatpush1.msra.mxu0 0.0
    %1406 = vmatprep.subr.mxu0 0.0
    %1407 = vmatpush1.msra.mxu0 0.0
    %1408 = vmatprep.subr.mxu0 0.0
    %1409 = vmatpush1.msra.mxu0 0.0
    %1410 = vmatprep.subr.mxu0 0.0
    %1411 = vmatpush1.msra.mxu0 0.0
    %1412 = vmatprep.subr.mxu0 0.0
    %1413 = vmatpush1.msra.mxu0 0.0
    %1414 = vmatprep.subr.mxu0 0.0
    %1415 = vmatpush1.msra.mxu0 0.0
    %1416 = vmatprep.subr.mxu0 0.0
    %1417 = vmatpush1.msra.mxu0 0.0
    %1418 = vmatprep.subr.mxu0 0.0
    %1419 = vmatpush1.msra.mxu0 0.0
    %1420 = vmatprep.subr.mxu0 0.0
    %1421 = vmatpush1.msra.mxu0 0.0
    %1422 = vmatprep.subr.mxu0 0.0
    %1423 = vmatpush1.msra.mxu0 0.0
    %1424 = vmatprep.subr.mxu0 0.0
    %1425 = vmatpush1.msra.mxu0 0.0
    %1426 = vmatprep.mubr.f32.mxu0 0.0
    %1427 = vmatmul.mubr.f32.gmra.mrb[0].mxu0 %v1351
    %v1428 = vpop.f32.mrb[0].mxu0
    %v1429 = vadd.f32 0.0, %v1428
    %v1430 = vpop.f32.mrb[0].mxu0
    %1431 = vmatprep.mubr.f32.mxu0 0.0
    %1432 = vmatmul.mubr.f32.gmra.mrb[0].mxu0 %v1354
    %v1433 = vpop.f32.mrb[0].mxu0
    %v1434 = vadd.f32 0.0, %v1433
    %v1435 = vpop.f32.mrb[0].mxu0
    %1436 = vmatprep.mubr.f32.mxu0 0.0
    %1437 = vmatmul.mubr.f32.gmra.mrb[0].mxu0 %v1357
    %v1438 = vpop.f32.mrb[0].mxu0
    %v1439 = vadd.f32 0.0, %v1438
    %v1440 = vpop.f32.mrb[0].mxu0
    %1441 = vmatprep.mubr.f32.mxu0 0.0
    %1442 = vmatmul.mubr.f32.gmra.mrb[0].mxu0 %v1360
    %v1443 = vpop.f32.mrb[0].mxu0
    %v1444 = vadd.f32 0.0, %v1443
    %v1445 = vpop.f32.mrb[0].mxu0
    %1446 = vdwg.mxu0
    %v1447 = vmax.f32 %v1327, %v1429
    %v1448 = vmax.f32 %v1332, %v1434
    %v1449 = vmax.f32 %v1337, %v1439
    %v1450 = vmax.f32 %v1342, %v1444
    %v1451 = vld [vmem:[%s4] sm:$0x1]
    %v1453 = vlaneseq
    %v1454 = vshrl.u32 %v1453, 7
    %v1455 = vsub.s32 0, %v1454
    %v1456 = vrot.slane %v1451, %v1455
    %v1458 = vadd.f32 %v1447, %v1456
    %v1459 = vadd.f32 %v1448, %v1456
    %v1460 = vadd.f32 %v1449, %v1456
    %v1461 = vadd.f32 %v1450, %v1456
    %v1462 = vmax.f32 %v1458, 0.0
    %v1463 = vmax.f32 %v1459, 0.0
    %v1464 = vmax.f32 %v1460, 0.0
    %v1465 = vmax.f32 %v1461, 0.0
    %v1466 = vld [vmem:[%s5] sm:$0xff]
    %v1467 = vld [vmem:[%s5 + $0x8] sm:$0xff]
    %v1468 = vld [vmem:[%s5 + $0x10] sm:$0xff]
    %v1469 = vld [vmem:[%s5 + $0x18] sm:$0xff]
    %v1470 = vld [vmem:[%s5 + $0x20] sm:$0xff]
    %v1471 = vld [vmem:[%s5 + $0x28] sm:$0xff]
    %v1472 = vld [vmem:[%s6] sm:$0xff]
    %v1473 = vld [vmem:[%s6 + $0x8] sm:$0xff]
    %v1474 = vld [vmem:[%s6 + $0x10] sm:$0xff]
    %v1475 = vld [vmem:[%s6 + $0x18] sm:$0xff]
    %v1476 = vld [vmem:[%s6 + $0x20] sm:$0xff]
    %v1477 = vld [vmem:[%s6 + $0x28] sm:$0xff]
    %vm1482 = vcmask 1046528
    %v1483 = vrot.slane %v1462, 1
    %v1484 = vrot.slane %v1463, 1
    %v1485 = vsel %vm1482, %v1483, %v1484
    %v1486 = vrot.slane %v1464, 1
    %v1487 = vrot.slane %v1465, 1
    %v1488 = vsel %vm1482, %v1486, %v1487
    %s1489 = scalar_lea.vmem %s5, 48
    %v1490 = vld [vmem:[%s1489] sm:$0xff]
    %v1491 = vld [vmem:[%s1489 + $0x8] sm:$0xff]
    %v1492 = vld [vmem:[%s1489 + $0x10] sm:$0xff]
    %v1493 = vld [vmem:[%s1489 + $0x18] sm:$0xff]
    %v1494 = vld [vmem:[%s1489 + $0x20] sm:$0xff]
    %v1495 = vld [vmem:[%s1489 + $0x28] sm:$0xff]
    %v1496 = vsel %vm1247, %v1485, 0
    %v1498 = vsel %vm1247, %v1488, 0
    %1500 = vmatprep.subr.mxu0 0.0
    %1501 = vmatpush1.msra.mxu0 %v1490
    %1502 = vmatprep.subr.mxu0 0.0
    %1503 = vmatpush1.msra.mxu0 %v1491
    %1504 = vmatprep.subr.mxu0 0.0
    %1505 = vmatpush1.msra.mxu0 %v1492
    %1506 = vmatprep.subr.mxu0 0.0
    %1507 = vmatpush1.msra.mxu0 %v1493
    %1508 = vmatprep.subr.mxu0 0.0
    %1509 = vmatpush1.msra.mxu0 %v1494
    %1510 = vmatprep.subr.mxu0 0.0
    %1511 = vmatpush1.msra.mxu0 %v1495
    %1512 = vmatprep.subr.mxu0 0.0
    %1513 = vmatpush1.msra.mxu0 0.0
    %1514 = vmatprep.subr.mxu0 0.0
    %1515 = vmatpush1.msra.mxu0 0.0
    %1516 = vmatprep.subr.mxu0 0.0
    %1517 = vmatpush1.msra.mxu0 0.0
    %1518 = vmatprep.subr.mxu0 0.0
    %1519 = vmatpush1.msra.mxu0 0.0
    %1520 = vmatprep.subr.mxu0 0.0
    %1521 = vmatpush1.msra.mxu0 0.0
    %1522 = vmatprep.subr.mxu0 0.0
    %1523 = vmatpush1.msra.mxu0 0.0
    %1524 = vmatprep.subr.mxu0 0.0
    %1525 = vmatpush1.msra.mxu0 0.0
    %1526 = vmatprep.subr.mxu0 0.0
    %1527 = vmatpush1.msra.mxu0 0.0
    %1528 = vmatprep.subr.mxu0 0.0
    %1529 = vmatpush1.msra.mxu0 0.0
    %1530 = vmatprep.subr.mxu0 0.0
    %1531 = vmatpush1.msra.mxu0 0.0
    %1532 = vmatprep.subr.mxu0 0.0
    %1533 = vmatpush1.msra.mxu0 0.0
    %1534 = vmatprep.subr.mxu0 0.0
    %1535 = vmatpush1.msra.mxu0 0.0
    %1536 = vmatprep.subr.mxu0 0.0
    %1537 = vmatpush1.msra.mxu0 0.0
    %1538 = vmatprep.subr.mxu0 0.0
    %1539 = vmatpush1.msra.mxu0 0.0
    %1540 = vmatprep.subr.mxu0 0.0
    %1541 = vmatpush1.msra.mxu0 0.0
    %1542 = vmatprep.subr.mxu0 0.0
    %1543 = vmatpush1.msra.mxu0 0.0
    %1544 = vmatprep.subr.mxu0 0.0
    %1545 = vmatpush1.msra.mxu0 0.0
    %1546 = vmatprep.subr.mxu0 0.0
    %1547 = vmatpush1.msra.mxu0 0.0
    %1548 = vmatprep.subr.mxu0 0.0
    %1549 = vmatpush1.msra.mxu0 0.0
    %1550 = vmatprep.subr.mxu0 0.0
    %1551 = vmatpush1.msra.mxu0 0.0
    %1552 = vmatprep.subr.mxu0 0.0
    %1553 = vmatpush1.msra.mxu0 0.0
    %1554 = vmatprep.subr.mxu0 0.0
    %1555 = vmatpush1.msra.mxu0 0.0
    %1556 = vmatprep.subr.mxu0 0.0
    %1557 = vmatpush1.msra.mxu0 0.0
    %1558 = vmatprep.subr.mxu0 0.0
    %1559 = vmatpush1.msra.mxu0 0.0
    %1560 = vmatprep.subr.mxu0 0.0
    %1561 = vmatpush1.msra.mxu0 0.0
    %1562 = vmatprep.subr.mxu0 0.0
    %1563 = vmatpush1.msra.mxu0 0.0
    %1564 = vmatprep.mubr.f32.mxu0 0.0
    %1565 = vmatmul.mubr.f32.gmra.mrb[0].mxu0 %v1496
    %v1566 = vpop.f32.mrb[0].mxu0
    %v1567 = vadd.f32 0.0, %v1566
    %v1568 = vpop.f32.mrb[0].mxu0
    %1569 = vmatprep.mubr.f32.mxu0 0.0
    %1570 = vmatmul.mubr.f32.gmra.mrb[0].mxu0 %v1498
    %v1571 = vpop.f32.mrb[0].mxu0
    %v1572 = vadd.f32 0.0, %v1571
    %v1573 = vpop.f32.mrb[0].mxu0
    %1574 = vdwg.mxu0
    %s1575 = scalar_lea.vmem %s6, 48
    %v1576 = vld [vmem:[%s1575] sm:$0xff]
    %v1577 = vld [vmem:[%s1575 + $0x8] sm:$0xff]
    %v1578 = vld [vmem:[%s1575 + $0x10] sm:$0xff]
    %v1579 = vld [vmem:[%s1575 + $0x18] sm:$0xff]
    %v1580 = vld [vmem:[%s1575 + $0x20] sm:$0xff]
    %v1581 = vld [vmem:[%s1575 + $0x28] sm:$0xff]
    %1582 = vmatprep.subr.mxu0 0.0
    %1583 = vmatpush1.msra.mxu0 %v1576
    %1584 = vmatprep.subr.mxu0 0.0
    %1585 = vmatpush1.msra.mxu0 %v1577
    %1586 = vmatprep.subr.mxu0 0.0
    %1587 = vmatpush1.msra.mxu0 %v1578
    %1588 = vmatprep.subr.mxu0 0.0
    %1589 = vmatpush1.msra.mxu0 %v1579
    %1590 = vmatprep.subr.mxu0 0.0
    %1591 = vmatpush1.msra.mxu0 %v1580
    %1592 = vmatprep.subr.mxu0 0.0
    %1593 = vmatpush1.msra.mxu0 %v1581
    %1594 = vmatprep.subr.mxu0 0.0
    %1595 = vmatpush1.msra.mxu0 0.0
    %1596 = vmatprep.subr.mxu0 0.0
    %1597 = vmatpush1.msra.mxu0 0.0
    %1598 = vmatprep.subr.mxu0 0.0
    %1599 = vmatpush1.msra.mxu0 0.0
    %1600 = vmatprep.subr.mxu0 0.0
    %1601 = vmatpush1.msra.mxu0 0.0
    %1602 = vmatprep.subr.mxu0 0.0
    %1603 = vmatpush1.msra.mxu0 0.0
    %1604 = vmatprep.subr.mxu0 0.0
    %1605 = vmatpush1.msra.mxu0 0.0
    %1606 = vmatprep.subr.mxu0 0.0
    %1607 = vmatpush1.msra.mxu0 0.0
    %1608 = vmatprep.subr.mxu0 0.0
    %1609 = vmatpush1.msra.mxu0 0.0
    %1610 = vmatprep.subr.mxu0 0.0
    %1611 = vmatpush1.msra.mxu0 0.0
    %1612 = vmatprep.subr.mxu0 0.0
    %1613 = vmatpush1.msra.mxu0 0.0
    %1614 = vmatprep.subr.mxu0 0.0
    %1615 = vmatpush1.msra.mxu0 0.0
    %1616 = vmatprep.subr.mxu0 0.0
    %1617 = vmatpush1.msra.mxu0 0.0
    %1618 = vmatprep.subr.mxu0 0.0
    %1619 = vmatpush1.msra.mxu0 0.0
    %1620 = vmatprep.subr.mxu0 0.0
    %1621 = vmatpush1.msra.mxu0 0.0
    %1622 = vmatprep.subr.mxu0 0.0
    %1623 = vmatpush1.msra.mxu0 0.0
    %1624 = vmatprep.subr.mxu0 0.0
    %1625 = vmatpush1.msra.mxu0 0.0
    %1626 = vmatprep.subr.mxu0 0.0
    %1627 = vmatpush1.msra.mxu0 0.0
    %1628 = vmatprep.subr.mxu0 0.0
    %1629 = vmatpush1.msra.mxu0 0.0
    %1630 = vmatprep.subr.mxu0 0.0
    %1631 = vmatpush1.msra.mxu0 0.0
    %1632 = vmatprep.subr.mxu0 0.0
    %1633 = vmatpush1.msra.mxu0 0.0
    %1634 = vmatprep.subr.mxu0 0.0
    %1635 = vmatpush1.msra.mxu0 0.0
    %1636 = vmatprep.subr.mxu0 0.0
    %1637 = vmatpush1.msra.mxu0 0.0
    %1638 = vmatprep.subr.mxu0 0.0
    %1639 = vmatpush1.msra.mxu0 0.0
    %1640 = vmatprep.subr.mxu0 0.0
    %1641 = vmatpush1.msra.mxu0 0.0
    %1642 = vmatprep.subr.mxu0 0.0
    %1643 = vmatpush1.msra.mxu0 0.0
    %1644 = vmatprep.subr.mxu0 0.0
    %1645 = vmatpush1.msra.mxu0 0.0
    %1646 = vmatprep.mubr.f32.mxu0 0.0
    %1647 = vmatmul.mubr.f32.gmra.mrb[0].mxu0 %v1496
    %v1648 = vpop.f32.mrb[0].mxu0
    %v1649 = vadd.f32 0.0, %v1648
    %v1650 = vpop.f32.mrb[0].mxu0
    %1651 = vmatprep.mubr.f32.mxu0 0.0
    %1652 = vmatmul.mubr.f32.gmra.mrb[0].mxu0 %v1498
    %v1653 = vpop.f32.mrb[0].mxu0
    %v1654 = vadd.f32 0.0, %v1653
    %v1655 = vpop.f32.mrb[0].mxu0
    %1656 = vdwg.mxu0
    %v1657 = vsel %vm1247, %v1462, 0
    %v1659 = vsel %vm1247, %v1464, 0
    %1661 = vmatprep.subr.mxu0 0.0
    %1662 = vmatpush1.msra.mxu0 %v1466
    %1663 = vmatprep.subr.mxu0 0.0
    %1664 = vmatpush1.msra.mxu0 %v1467
    %1665 = vmatprep.subr.mxu0 0.0
    %1666 = vmatpush1.msra.mxu0 %v1468
    %1667 = vmatprep.subr.mxu0 0.0
    %1668 = vmatpush1.msra.mxu0 %v1469
    %1669 = vmatprep.subr.mxu0 0.0
    %1670 = vmatpush1.msra.mxu0 %v1470
    %1671 = vmatprep.subr.mxu0 0.0
    %1672 = vmatpush1.msra.mxu0 %v1471
    %1673 = vmatprep.subr.mxu0 0.0
    %1674 = vmatpush1.msra.mxu0 0.0
    %1675 = vmatprep.subr.mxu0 0.0
    %1676 = vmatpush1.msra.mxu0 0.0
    %1677 = vmatprep.subr.mxu0 0.0
    %1678 = vmatpush1.msra.mxu0 0.0
    %1679 = vmatprep.subr.mxu0 0.0
    %1680 = vmatpush1.msra.mxu0 0.0
    %1681 = vmatprep.subr.mxu0 0.0
    %1682 = vmatpush1.msra.mxu0 0.0
    %1683 = vmatprep.subr.mxu0 0.0
    %1684 = vmatpush1.msra.mxu0 0.0
    %1685 = vmatprep.subr.mxu0 0.0
    %1686 = vmatpush1.msra.mxu0 0.0
    %1687 = vmatprep.subr.mxu0 0.0
    %1688 = vmatpush1.msra.mxu0 0.0
    %1689 = vmatprep.subr.mxu0 0.0
    %1690 = vmatpush1.msra.mxu0 0.0
    %1691 = vmatprep.subr.mxu0 0.0
    %1692 = vmatpush1.msra.mxu0 0.0
    %1693 = vmatprep.subr.mxu0 0.0
    %1694 = vmatpush1.msra.mxu0 0.0
    %1695 = vmatprep.subr.mxu0 0.0
    %1696 = vmatpush1.msra.mxu0 0.0
    %1697 = vmatprep.subr.mxu0 0.0
    %1698 = vmatpush1.msra.mxu0 0.0
    %1699 = vmatprep.subr.mxu0 0.0
    %1700 = vmatpush1.msra.mxu0 0.0
    %1701 = vmatprep.subr.mxu0 0.0
    %1702 = vmatpush1.msra.mxu0 0.0
    %1703 = vmatprep.subr.mxu0 0.0
    %1704 = vmatpush1.msra.mxu0 0.0
    %1705 = vmatprep.subr.mxu0 0.0
    %1706 = vmatpush1.msra.mxu0 0.0
    %1707 = vmatprep.subr.mxu0 0.0
    %1708 = vmatpush1.msra.mxu0 0.0
    %1709 = vmatprep.subr.mxu0 0.0
    %1710 = vmatpush1.msra.mxu0 0.0
    %1711 = vmatprep.subr.mxu0 0.0
    %1712 = vmatpush1.msra.mxu0 0.0
    %1713 = vmatprep.subr.mxu0 0.0
    %1714 = vmatpush1.msra.mxu0 0.0
    %1715 = vmatprep.subr.mxu0 0.0
    %1716 = vmatpush1.msra.mxu0 0.0
    %1717 = vmatprep.subr.mxu0 0.0
    %1718 = vmatpush1.msra.mxu0 0.0
    %1719 = vmatprep.subr.mxu0 0.0
    %1720 = vmatpush1.msra.mxu0 0.0
    %1721 = vmatprep.subr.mxu0 0.0
    %1722 = vmatpush1.msra.mxu0 0.0
    %1723 = vmatprep.subr.mxu0 0.0
    %1724 = vmatpush1.msra.mxu0 0.0
    %1725 = vmatprep.mubr.f32.mxu0 0.0
    %1726 = vmatmul.mubr.f32.gmra.mrb[0].mxu0 %v1657
    %v1727 = vpop.f32.mrb[0].mxu0
    %v1728 = vadd.f32 %v1567, %v1727
    %v1729 = vpop.f32.mrb[0].mxu0
    %1730 = vmatprep.mubr.f32.mxu0 0.0
    %1731 = vmatmul.mubr.f32.gmra.mrb[0].mxu0 %v1659
    %v1732 = vpop.f32.mrb[0].mxu0
    %v1733 = vadd.f32 %v1572, %v1732
    %v1734 = vpop.f32.mrb[0].mxu0
    %1735 = vdwg.mxu0
    %1736 = vmatprep.subr.mxu0 0.0
    %1737 = vmatpush1.msra.mxu0 %v1472
    %1738 = vmatprep.subr.mxu0 0.0
    %1739 = vmatpush1.msra.mxu0 %v1473
    %1740 = vmatprep.subr.mxu0 0.0
    %1741 = vmatpush1.msra.mxu0 %v1474
    %1742 = vmatprep.subr.mxu0 0.0
    %1743 = vmatpush1.msra.mxu0 %v1475
    %1744 = vmatprep.subr.mxu0 0.0
    %1745 = vmatpush1.msra.mxu0 %v1476
    %1746 = vmatprep.subr.mxu0 0.0
    %1747 = vmatpush1.msra.mxu0 %v1477
    %1748 = vmatprep.subr.mxu0 0.0
    %1749 = vmatpush1.msra.mxu0 0.0
    %1750 = vmatprep.subr.mxu0 0.0
    %1751 = vmatpush1.msra.mxu0 0.0
    %1752 = vmatprep.subr.mxu0 0.0
    %1753 = vmatpush1.msra.mxu0 0.0
    %1754 = vmatprep.subr.mxu0 0.0
    %1755 = vmatpush1.msra.mxu0 0.0
    %1756 = vmatprep.subr.mxu0 0.0
    %1757 = vmatpush1.msra.mxu0 0.0
    %1758 = vmatprep.subr.mxu0 0.0
    %1759 = vmatpush1.msra.mxu0 0.0
    %1760 = vmatprep.subr.mxu0 0.0
    %1761 = vmatpush1.msra.mxu0 0.0
    %1762 = vmatprep.subr.mxu0 0.0
    %1763 = vmatpush1.msra.mxu0 0.0
    %1764 = vmatprep.subr.mxu0 0.0
    %1765 = vmatpush1.msra.mxu0 0.0
    %1766 = vmatprep.subr.mxu0 0.0
    %1767 = vmatpush1.msra.mxu0 0.0
    %1768 = vmatprep.subr.mxu0 0.0
    %1769 = vmatpush1.msra.mxu0 0.0
    %1770 = vmatprep.subr.mxu0 0.0
    %1771 = vmatpush1.msra.mxu0 0.0
    %1772 = vmatprep.subr.mxu0 0.0
    %1773 = vmatpush1.msra.mxu0 0.0
    %1774 = vmatprep.subr.mxu0 0.0
    %1775 = vmatpush1.msra.mxu0 0.0
    %1776 = vmatprep.subr.mxu0 0.0
    %1777 = vmatpush1.msra.mxu0 0.0
    %1778 = vmatprep.subr.mxu0 0.0
    %1779 = vmatpush1.msra.mxu0 0.0
    %1780 = vmatprep.subr.mxu0 0.0
    %1781 = vmatpush1.msra.mxu0 0.0
    %1782 = vmatprep.subr.mxu0 0.0
    %1783 = vmatpush1.msra.mxu0 0.0
    %1784 = vmatprep.subr.mxu0 0.0
    %1785 = vmatpush1.msra.mxu0 0.0
    %1786 = vmatprep.subr.mxu0 0.0
    %1787 = vmatpush1.msra.mxu0 0.0
    %1788 = vmatprep.subr.mxu0 0.0
    %1789 = vmatpush1.msra.mxu0 0.0
    %1790 = vmatprep.subr.mxu0 0.0
    %1791 = vmatpush1.msra.mxu0 0.0
    %1792 = vmatprep.subr.mxu0 0.0
    %1793 = vmatpush1.msra.mxu0 0.0
    %1794 = vmatprep.subr.mxu0 0.0
    %1795 = vmatpush1.msra.mxu0 0.0
    %1796 = vmatprep.subr.mxu0 0.0
    %1797 = vmatpush1.msra.mxu0 0.0
    %1798 = vmatprep.subr.mxu0 0.0
    %1799 = vmatpush1.msra.mxu0 0.0
    %1800 = vmatprep.mubr.f32.mxu0 0.0
    %1801 = vmatmul.mubr.f32.gmra.mrb[0].mxu0 %v1657
    %v1802 = vpop.f32.mrb[0].mxu0
    %v1803 = vadd.f32 %v1649, %v1802
    %v1804 = vpop.f32.mrb[0].mxu0
    %1805 = vmatprep.mubr.f32.mxu0 0.0
    %1806 = vmatmul.mubr.f32.gmra.mrb[0].mxu0 %v1659
    %v1807 = vpop.f32.mrb[0].mxu0
    %v1808 = vadd.f32 %v1654, %v1807
    %v1809 = vpop.f32.mrb[0].mxu0
    %1810 = vdwg.mxu0
    %vm1811 = vcmask 1045504
    %v1812 = vrot.slane %v1462, 2
    %v1813 = vrot.slane %v1463, 2
    %v1814 = vsel %vm1811, %v1812, %v1813
    %v1815 = vrot.slane %v1464, 2
    %v1816 = vrot.slane %v1465, 2
    %v1817 = vsel %vm1811, %v1815, %v1816
    %s1818 = scalar_lea.vmem %s5, 96
    %v1819 = vld [vmem:[%s1818] sm:$0xff]
    %v1820 = vld [vmem:[%s1818 + $0x8] sm:$0xff]
    %v1821 = vld [vmem:[%s1818 + $0x10] sm:$0xff]
    %v1822 = vld [vmem:[%s1818 + $0x18] sm:$0xff]
    %v1823 = vld [vmem:[%s1818 + $0x20] sm:$0xff]
    %v1824 = vld [vmem:[%s1818 + $0x28] sm:$0xff]
    %v1825 = vsel %vm1247, %v1814, 0
    %v1827 = vsel %vm1247, %v1817, 0
    %1829 = vmatprep.subr.mxu0 0.0
    %1830 = vmatpush1.msra.mxu0 %v1819
    %1831 = vmatprep.subr.mxu0 0.0
    %1832 = vmatpush1.msra.mxu0 %v1820
    %1833 = vmatprep.subr.mxu0 0.0
    %1834 = vmatpush1.msra.mxu0 %v1821
    %1835 = vmatprep.subr.mxu0 0.0
    %1836 = vmatpush1.msra.mxu0 %v1822
    %1837 = vmatprep.subr.mxu0 0.0
    %1838 = vmatpush1.msra.mxu0 %v1823
    %1839 = vmatprep.subr.mxu0 0.0
    %1840 = vmatpush1.msra.mxu0 %v1824
    %1841 = vmatprep.subr.mxu0 0.0
    %1842 = vmatpush1.msra.mxu0 0.0
    %1843 = vmatprep.subr.mxu0 0.0
    %1844 = vmatpush1.msra.mxu0 0.0
    %1845 = vmatprep.subr.mxu0 0.0
    %1846 = vmatpush1.msra.mxu0 0.0
    %1847 = vmatprep.subr.mxu0 0.0
    %1848 = vmatpush1.msra.mxu0 0.0
    %1849 = vmatprep.subr.mxu0 0.0
    %1850 = vmatpush1.msra.mxu0 0.0
    %1851 = vmatprep.subr.mxu0 0.0
    %1852 = vmatpush1.msra.mxu0 0.0
    %1853 = vmatprep.subr.mxu0 0.0
    %1854 = vmatpush1.msra.mxu0 0.0
    %1855 = vmatprep.subr.mxu0 0.0
    %1856 = vmatpush1.msra.mxu0 0.0
    %1857 = vmatprep.subr.mxu0 0.0
    %1858 = vmatpush1.msra.mxu0 0.0
    %1859 = vmatprep.subr.mxu0 0.0
    %1860 = vmatpush1.msra.mxu0 0.0
    %1861 = vmatprep.subr.mxu0 0.0
    %1862 = vmatpush1.msra.mxu0 0.0
    %1863 = vmatprep.subr.mxu0 0.0
    %1864 = vmatpush1.msra.mxu0 0.0
    %1865 = vmatprep.subr.mxu0 0.0
    %1866 = vmatpush1.msra.mxu0 0.0
    %1867 = vmatprep.subr.mxu0 0.0
    %1868 = vmatpush1.msra.mxu0 0.0
    %1869 = vmatprep.subr.mxu0 0.0
    %1870 = vmatpush1.msra.mxu0 0.0
    %1871 = vmatprep.subr.mxu0 0.0
    %1872 = vmatpush1.msra.mxu0 0.0
    %1873 = vmatprep.subr.mxu0 0.0
    %1874 = vmatpush1.msra.mxu0 0.0
    %1875 = vmatprep.subr.mxu0 0.0
    %1876 = vmatpush1.msra.mxu0 0.0
    %1877 = vmatprep.subr.mxu0 0.0
    %1878 = vmatpush1.msra.mxu0 0.0
    %1879 = vmatprep.subr.mxu0 0.0
    %1880 = vmatpush1.msra.mxu0 0.0
    %1881 = vmatprep.subr.mxu0 0.0
    %1882 = vmatpush1.msra.mxu0 0.0
    %1883 = vmatprep.subr.mxu0 0.0
    %1884 = vmatpush1.msra.mxu0 0.0
    %1885 = vmatprep.subr.mxu0 0.0
    %1886 = vmatpush1.msra.mxu0 0.0
    %1887 = vmatprep.subr.mxu0 0.0
    %1888 = vmatpush1.msra.mxu0 0.0
    %1889 = vmatprep.subr.mxu0 0.0
    %1890 = vmatpush1.msra.mxu0 0.0
    %1891 = vmatprep.subr.mxu0 0.0
    %1892 = vmatpush1.msra.mxu0 0.0
    %1893 = vmatprep.mubr.f32.mxu0 0.0
    %1894 = vmatmul.mubr.f32.gmra.mrb[0].mxu0 %v1825
    %v1895 = vpop.f32.mrb[0].mxu0
    %v1896 = vadd.f32 0.0, %v1895
    %v1897 = vpop.f32.mrb[0].mxu0
    %1898 = vmatprep.mubr.f32.mxu0 0.0
    %1899 = vmatmul.mubr.f32.gmra.mrb[0].mxu0 %v1827
    %v1900 = vpop.f32.mrb[0].mxu0
    %v1901 = vadd.f32 0.0, %v1900
    %v1902 = vpop.f32.mrb[0].mxu0
    %1903 = vdwg.mxu0
    %s1904 = scalar_lea.vmem %s6, 96
    %v1905 = vld [vmem:[%s1904] sm:$0xff]
    %v1906 = vld [vmem:[%s1904 + $0x8] sm:$0xff]
    %v1907 = vld [vmem:[%s1904 + $0x10] sm:$0xff]
    %v1908 = vld [vmem:[%s1904 + $0x18] sm:$0xff]
    %v1909 = vld [vmem:[%s1904 + $0x20] sm:$0xff]
    %v1910 = vld [vmem:[%s1904 + $0x28] sm:$0xff]
    %1911 = vmatprep.subr.mxu0 0.0
    %1912 = vmatpush1.msra.mxu0 %v1905
    %1913 = vmatprep.subr.mxu0 0.0
    %1914 = vmatpush1.msra.mxu0 %v1906
    %1915 = vmatprep.subr.mxu0 0.0
    %1916 = vmatpush1.msra.mxu0 %v1907
    %1917 = vmatprep.subr.mxu0 0.0
    %1918 = vmatpush1.msra.mxu0 %v1908
    %1919 = vmatprep.subr.mxu0 0.0
    %1920 = vmatpush1.msra.mxu0 %v1909
    %1921 = vmatprep.subr.mxu0 0.0
    %1922 = vmatpush1.msra.mxu0 %v1910
    %1923 = vmatprep.subr.mxu0 0.0
    %1924 = vmatpush1.msra.mxu0 0.0
    %1925 = vmatprep.subr.mxu0 0.0
    %1926 = vmatpush1.msra.mxu0 0.0
    %1927 = vmatprep.subr.mxu0 0.0
    %1928 = vmatpush1.msra.mxu0 0.0
    %1929 = vmatprep.subr.mxu0 0.0
    %1930 = vmatpush1.msra.mxu0 0.0
    %1931 = vmatprep.subr.mxu0 0.0
    %1932 = vmatpush1.msra.mxu0 0.0
    %1933 = vmatprep.subr.mxu0 0.0
    %1934 = vmatpush1.msra.mxu0 0.0
    %1935 = vmatprep.subr.mxu0 0.0
    %1936 = vmatpush1.msra.mxu0 0.0
    %1937 = vmatprep.subr.mxu0 0.0
    %1938 = vmatpush1.msra.mxu0 0.0
    %1939 = vmatprep.subr.mxu0 0.0
    %1940 = vmatpush1.msra.mxu0 0.0
    %1941 = vmatprep.subr.mxu0 0.0
    %1942 = vmatpush1.msra.mxu0 0.0
    %1943 = vmatprep.subr.mxu0 0.0
    %1944 = vmatpush1.msra.mxu0 0.0
    %1945 = vmatprep.subr.mxu0 0.0
    %1946 = vmatpush1.msra.mxu0 0.0
    %1947 = vmatprep.subr.mxu0 0.0
    %1948 = vmatpush1.msra.mxu0 0.0
    %1949 = vmatprep.subr.mxu0 0.0
    %1950 = vmatpush1.msra.mxu0 0.0
    %1951 = vmatprep.subr.mxu0 0.0
    %1952 = vmatpush1.msra.mxu0 0.0
    %1953 = vmatprep.subr.mxu0 0.0
    %1954 = vmatpush1.msra.mxu0 0.0
    %1955 = vmatprep.subr.mxu0 0.0
    %1956 = vmatpush1.msra.mxu0 0.0
    %1957 = vmatprep.subr.mxu0 0.0
    %1958 = vmatpush1.msra.mxu0 0.0
    %1959 = vmatprep.subr.mxu0 0.0
    %1960 = vmatpush1.msra.mxu0 0.0
    %1961 = vmatprep.subr.mxu0 0.0
    %1962 = vmatpush1.msra.mxu0 0.0
    %1963 = vmatprep.subr.mxu0 0.0
    %1964 = vmatpush1.msra.mxu0 0.0
    %1965 = vmatprep.subr.mxu0 0.0
    %1966 = vmatpush1.msra.mxu0 0.0
    %1967 = vmatprep.subr.mxu0 0.0
    %1968 = vmatpush1.msra.mxu0 0.0
    %1969 = vmatprep.subr.mxu0 0.0
    %1970 = vmatpush1.msra.mxu0 0.0
    %1971 = vmatprep.subr.mxu0 0.0
    %1972 = vmatpush1.msra.mxu0 0.0
    %1973 = vmatprep.subr.mxu0 0.0
    %1974 = vmatpush1.msra.mxu0 0.0
    %1975 = vmatprep.mubr.f32.mxu0 0.0
    %1976 = vmatmul.mubr.f32.gmra.mrb[0].mxu0 %v1825
    %v1977 = vpop.f32.mrb[0].mxu0
    %v1978 = vadd.f32 0.0, %v1977
    %v1979 = vpop.f32.mrb[0].mxu0
    %1980 = vmatprep.mubr.f32.mxu0 0.0
    %1981 = vmatmul.mubr.f32.gmra.mrb[0].mxu0 %v1827
    %v1982 = vpop.f32.mrb[0].mxu0
    %v1983 = vadd.f32 0.0, %v1982
    %v1984 = vpop.f32.mrb[0].mxu0
    %1985 = vdwg.mxu0
    %v1986 = vadd.f32 %v1728, %v1896
    %v1987 = vadd.f32 %v1733, %v1901
    %v1988 = vadd.f32 %v1803, %v1978
    %v1989 = vadd.f32 %v1808, %v1983
    %vm1990 = vcmask 1044480
    %v1991 = vrot.slane %v1462, 3
    %v1992 = vrot.slane %v1463, 3
    %v1993 = vsel %vm1990, %v1991, %v1992
    %v1994 = vrot.slane %v1464, 3
    %v1995 = vrot.slane %v1465, 3
    %v1996 = vsel %vm1990, %v1994, %v1995
    %s1997 = scalar_lea.vmem %s5, 144
    %v1998 = vld [vmem:[%s1997] sm:$0xff]
    %v1999 = vld [vmem:[%s1997 + $0x8] sm:$0xff]
    %v2000 = vld [vmem:[%s1997 + $0x10] sm:$0xff]
    %v2001 = vld [vmem:[%s1997 + $0x18] sm:$0xff]
    %v2002 = vld [vmem:[%s1997 + $0x20] sm:$0xff]
    %v2003 = vld [vmem:[%s1997 + $0x28] sm:$0xff]
    %v2004 = vsel %vm1247, %v1993, 0
    %v2006 = vsel %vm1247, %v1996, 0
    %2008 = vmatprep.subr.mxu0 0.0
    %2009 = vmatpush1.msra.mxu0 %v1998
    %2010 = vmatprep.subr.mxu0 0.0
    %2011 = vmatpush1.msra.mxu0 %v1999
    %2012 = vmatprep.subr.mxu0 0.0
    %2013 = vmatpush1.msra.mxu0 %v2000
    %2014 = vmatprep.subr.mxu0 0.0
    %2015 = vmatpush1.msra.mxu0 %v2001
    %2016 = vmatprep.subr.mxu0 0.0
    %2017 = vmatpush1.msra.mxu0 %v2002
    %2018 = vmatprep.subr.mxu0 0.0
    %2019 = vmatpush1.msra.mxu0 %v2003
    %2020 = vmatprep.subr.mxu0 0.0
    %2021 = vmatpush1.msra.mxu0 0.0
    %2022 = vmatprep.subr.mxu0 0.0
    %2023 = vmatpush1.msra.mxu0 0.0
    %2024 = vmatprep.subr.mxu0 0.0
    %2025 = vmatpush1.msra.mxu0 0.0
    %2026 = vmatprep.subr.mxu0 0.0
    %2027 = vmatpush1.msra.mxu0 0.0
    %2028 = vmatprep.subr.mxu0 0.0
    %2029 = vmatpush1.msra.mxu0 0.0
    %2030 = vmatprep.subr.mxu0 0.0
    %2031 = vmatpush1.msra.mxu0 0.0
    %2032 = vmatprep.subr.mxu0 0.0
    %2033 = vmatpush1.msra.mxu0 0.0
    %2034 = vmatprep.subr.mxu0 0.0
    %2035 = vmatpush1.msra.mxu0 0.0
    %2036 = vmatprep.subr.mxu0 0.0
    %2037 = vmatpush1.msra.mxu0 0.0
    %2038 = vmatprep.subr.mxu0 0.0
    %2039 = vmatpush1.msra.mxu0 0.0
    %2040 = vmatprep.subr.mxu0 0.0
    %2041 = vmatpush1.msra.mxu0 0.0
    %2042 = vmatprep.subr.mxu0 0.0
    %2043 = vmatpush1.msra.mxu0 0.0
    %2044 = vmatprep.subr.mxu0 0.0
    %2045 = vmatpush1.msra.mxu0 0.0
    %2046 = vmatprep.subr.mxu0 0.0
    %2047 = vmatpush1.msra.mxu0 0.0
    %2048 = vmatprep.subr.mxu0 0.0
    %2049 = vmatpush1.msra.mxu0 0.0
    %2050 = vmatprep.subr.mxu0 0.0
    %2051 = vmatpush1.msra.mxu0 0.0
    %2052 = vmatprep.subr.mxu0 0.0
    %2053 = vmatpush1.msra.mxu0 0.0
    %2054 = vmatprep.subr.mxu0 0.0
    %2055 = vmatpush1.msra.mxu0 0.0
    %2056 = vmatprep.subr.mxu0 0.0
    %2057 = vmatpush1.msra.mxu0 0.0
    %2058 = vmatprep.subr.mxu0 0.0
    %2059 = vmatpush1.msra.mxu0 0.0
    %2060 = vmatprep.subr.mxu0 0.0
    %2061 = vmatpush1.msra.mxu0 0.0
    %2062 = vmatprep.subr.mxu0 0.0
    %2063 = vmatpush1.msra.mxu0 0.0
    %2064 = vmatprep.subr.mxu0 0.0
    %2065 = vmatpush1.msra.mxu0 0.0
    %2066 = vmatprep.subr.mxu0 0.0
    %2067 = vmatpush1.msra.mxu0 0.0
    %2068 = vmatprep.subr.mxu0 0.0
    %2069 = vmatpush1.msra.mxu0 0.0
    %2070 = vmatprep.subr.mxu0 0.0
    %2071 = vmatpush1.msra.mxu0 0.0
    %2072 = vmatprep.mubr.f32.mxu0 0.0
    %2073 = vmatmul.mubr.f32.gmra.mrb[0].mxu0 %v2004
    %v2074 = vpop.f32.mrb[0].mxu0
    %v2075 = vadd.f32 0.0, %v2074
    %v2076 = vpop.f32.mrb[0].mxu0
    %2077 = vmatprep.mubr.f32.mxu0 0.0
    %2078 = vmatmul.mubr.f32.gmra.mrb[0].mxu0 %v2006
    %v2079 = vpop.f32.mrb[0].mxu0
    %v2080 = vadd.f32 0.0, %v2079
    %v2081 = vpop.f32.mrb[0].mxu0
    %2082 = vdwg.mxu0
    %s2083 = scalar_lea.vmem %s6, 144
    %v2084 = vld [vmem:[%s2083] sm:$0xff]
    %v2085 = vld [vmem:[%s2083 + $0x8] sm:$0xff]
    %v2086 = vld [vmem:[%s2083 + $0x10] sm:$0xff]
    %v2087 = vld [vmem:[%s2083 + $0x18] sm:$0xff]
    %v2088 = vld [vmem:[%s2083 + $0x20] sm:$0xff]
    %v2089 = vld [vmem:[%s2083 + $0x28] sm:$0xff]
    %2090 = vmatprep.subr.mxu0 0.0
    %2091 = vmatpush1.msra.mxu0 %v2084
    %2092 = vmatprep.subr.mxu0 0.0
    %2093 = vmatpush1.msra.mxu0 %v2085
    %2094 = vmatprep.subr.mxu0 0.0
    %2095 = vmatpush1.msra.mxu0 %v2086
    %2096 = vmatprep.subr.mxu0 0.0
    %2097 = vmatpush1.msra.mxu0 %v2087
    %2098 = vmatprep.subr.mxu0 0.0
    %2099 = vmatpush1.msra.mxu0 %v2088
    %2100 = vmatprep.subr.mxu0 0.0
    %2101 = vmatpush1.msra.mxu0 %v2089
    %2102 = vmatprep.subr.mxu0 0.0
    %2103 = vmatpush1.msra.mxu0 0.0
    %2104 = vmatprep.subr.mxu0 0.0
    %2105 = vmatpush1.msra.mxu0 0.0
    %2106 = vmatprep.subr.mxu0 0.0
    %2107 = vmatpush1.msra.mxu0 0.0
    %2108 = vmatprep.subr.mxu0 0.0
    %2109 = vmatpush1.msra.mxu0 0.0
    %2110 = vmatprep.subr.mxu0 0.0
    %2111 = vmatpush1.msra.mxu0 0.0
    %2112 = vmatprep.subr.mxu0 0.0
    %2113 = vmatpush1.msra.mxu0 0.0
    %2114 = vmatprep.subr.mxu0 0.0
    %2115 = vmatpush1.msra.mxu0 0.0
    %2116 = vmatprep.subr.mxu0 0.0
    %2117 = vmatpush1.msra.mxu0 0.0
    %2118 = vmatprep.subr.mxu0 0.0
    %2119 = vmatpush1.msra.mxu0 0.0
    %2120 = vmatprep.subr.mxu0 0.0
    %2121 = vmatpush1.msra.mxu0 0.0
    %2122 = vmatprep.subr.mxu0 0.0
    %2123 = vmatpush1.msra.mxu0 0.0
    %2124 = vmatprep.subr.mxu0 0.0
    %2125 = vmatpush1.msra.mxu0 0.0
    %2126 = vmatprep.subr.mxu0 0.0
    %2127 = vmatpush1.msra.mxu0 0.0
    %2128 = vmatprep.subr.mxu0 0.0
    %2129 = vmatpush1.msra.mxu0 0.0
    %2130 = vmatprep.subr.mxu0 0.0
    %2131 = vmatpush1.msra.mxu0 0.0
    %2132 = vmatprep.subr.mxu0 0.0
    %2133 = vmatpush1.msra.mxu0 0.0
    %2134 = vmatprep.subr.mxu0 0.0
    %2135 = vmatpush1.msra.mxu0 0.0
    %2136 = vmatprep.subr.mxu0 0.0
    %2137 = vmatpush1.msra.mxu0 0.0
    %2138 = vmatprep.subr.mxu0 0.0
    %2139 = vmatpush1.msra.mxu0 0.0
    %2140 = vmatprep.subr.mxu0 0.0
    %2141 = vmatpush1.msra.mxu0 0.0
    %2142 = vmatprep.subr.mxu0 0.0
    %2143 = vmatpush1.msra.mxu0 0.0
    %2144 = vmatprep.subr.mxu0 0.0
    %2145 = vmatpush1.msra.mxu0 0.0
    %2146 = vmatprep.subr.mxu0 0.0
    %2147 = vmatpush1.msra.mxu0 0.0
    %2148 = vmatprep.subr.mxu0 0.0
    %2149 = vmatpush1.msra.mxu0 0.0
    %2150 = vmatprep.subr.mxu0 0.0
    %2151 = vmatpush1.msra.mxu0 0.0
    %2152 = vmatprep.subr.mxu0 0.0
    %2153 = vmatpush1.msra.mxu0 0.0
    %2154 = vmatprep.mubr.f32.mxu0 0.0
    %2155 = vmatmul.mubr.f32.gmra.mrb[0].mxu0 %v2004
    %v2156 = vpop.f32.mrb[0].mxu0
    %v2157 = vadd.f32 0.0, %v2156
    %v2158 = vpop.f32.mrb[0].mxu0
    %2159 = vmatprep.mubr.f32.mxu0 0.0
    %2160 = vmatmul.mubr.f32.gmra.mrb[0].mxu0 %v2006
    %v2161 = vpop.f32.mrb[0].mxu0
    %v2162 = vadd.f32 0.0, %v2161
    %v2163 = vpop.f32.mrb[0].mxu0
    %2164 = vdwg.mxu0
    %v2165 = vadd.f32 %v1986, %v2075
    %v2166 = vadd.f32 %v1987, %v2080
    %v2167 = vadd.f32 %v1988, %v2157
    %v2168 = vadd.f32 %v1989, %v2162
    %v2169 = vrot.slane %v1462, 4
    %v2170 = vrot.slane %v1463, 4
    %v2171 = vsel %vm95, %v2169, %v2170
    %v2172 = vrot.slane %v1464, 4
    %v2173 = vrot.slane %v1465, 4
    %v2174 = vsel %vm95, %v2172, %v2173
    %s2175 = scalar_lea.vmem %s5, 192
    %v2176 = vld [vmem:[%s2175] sm:$0xff]
    %v2177 = vld [vmem:[%s2175 + $0x8] sm:$0xff]
    %v2178 = vld [vmem:[%s2175 + $0x10] sm:$0xff]
    %v2179 = vld [vmem:[%s2175 + $0x18] sm:$0xff]
    %v2180 = vld [vmem:[%s2175 + $0x20] sm:$0xff]
    %v2181 = vld [vmem:[%s2175 + $0x28] sm:$0xff]
    %v2182 = vsel %vm1247, %v2171, 0
    %v2184 = vsel %vm1247, %v2174, 0
    %2186 = vmatprep.subr.mxu0 0.0
    %2187 = vmatpush1.msra.mxu0 %v2176
    %2188 = vmatprep.subr.mxu0 0.0
    %2189 = vmatpush1.msra.mxu0 %v2177
    %2190 = vmatprep.subr.mxu0 0.0
    %2191 = vmatpush1.msra.mxu0 %v2178
    %2192 = vmatprep.subr.mxu0 0.0
    %2193 = vmatpush1.msra.mxu0 %v2179
    %2194 = vmatprep.subr.mxu0 0.0
    %2195 = vmatpush1.msra.mxu0 %v2180
    %2196 = vmatprep.subr.mxu0 0.0
    %2197 = vmatpush1.msra.mxu0 %v2181
    %2198 = vmatprep.subr.mxu0 0.0
    %2199 = vmatpush1.msra.mxu0 0.0
    %2200 = vmatprep.subr.mxu0 0.0
    %2201 = vmatpush1.msra.mxu0 0.0
    %2202 = vmatprep.subr.mxu0 0.0
    %2203 = vmatpush1.msra.mxu0 0.0
    %2204 = vmatprep.subr.mxu0 0.0
    %2205 = vmatpush1.msra.mxu0 0.0
    %2206 = vmatprep.subr.mxu0 0.0
    %2207 = vmatpush1.msra.mxu0 0.0
    %2208 = vmatprep.subr.mxu0 0.0
    %2209 = vmatpush1.msra.mxu0 0.0
    %2210 = vmatprep.subr.mxu0 0.0
    %2211 = vmatpush1.msra.mxu0 0.0
    %2212 = vmatprep.subr.mxu0 0.0
    %2213 = vmatpush1.msra.mxu0 0.0
    %2214 = vmatprep.subr.mxu0 0.0
    %2215 = vmatpush1.msra.mxu0 0.0
    %2216 = vmatprep.subr.mxu0 0.0
    %2217 = vmatpush1.msra.mxu0 0.0
    %2218 = vmatprep.subr.mxu0 0.0
    %2219 = vmatpush1.msra.mxu0 0.0
    %2220 = vmatprep.subr.mxu0 0.0
    %2221 = vmatpush1.msra.mxu0 0.0
    %2222 = vmatprep.subr.mxu0 0.0
    %2223 = vmatpush1.msra.mxu0 0.0
    %2224 = vmatprep.subr.mxu0 0.0
    %2225 = vmatpush1.msra.mxu0 0.0
    %2226 = vmatprep.subr.mxu0 0.0
    %2227 = vmatpush1.msra.mxu0 0.0
    %2228 = vmatprep.subr.mxu0 0.0
    %2229 = vmatpush1.msra.mxu0 0.0
    %2230 = vmatprep.subr.mxu0 0.0
    %2231 = vmatpush1.msra.mxu0 0.0
    %2232 = vmatprep.subr.mxu0 0.0
    %2233 = vmatpush1.msra.mxu0 0.0
    %2234 = vmatprep.subr.mxu0 0.0
    %2235 = vmatpush1.msra.mxu0 0.0
    %2236 = vmatprep.subr.mxu0 0.0
    %2237 = vmatpush1.msra.mxu0 0.0
    %2238 = vmatprep.subr.mxu0 0.0
    %2239 = vmatpush1.msra.mxu0 0.0
    %2240 = vmatprep.subr.mxu0 0.0
    %2241 = vmatpush1.msra.mxu0 0.0
    %2242 = vmatprep.subr.mxu0 0.0
    %2243 = vmatpush1.msra.mxu0 0.0
    %2244 = vmatprep.subr.mxu0 0.0
    %2245 = vmatpush1.msra.mxu0 0.0
    %2246 = vmatprep.subr.mxu0 0.0
    %2247 = vmatpush1.msra.mxu0 0.0
    %2248 = vmatprep.subr.mxu0 0.0
    %2249 = vmatpush1.msra.mxu0 0.0
    %2250 = vmatprep.mubr.f32.mxu0 0.0
    %2251 = vmatmul.mubr.f32.gmra.mrb[0].mxu0 %v2182
    %v2252 = vpop.f32.mrb[0].mxu0
    %v2253 = vadd.f32 0.0, %v2252
    %v2254 = vpop.f32.mrb[0].mxu0
    %2255 = vmatprep.mubr.f32.mxu0 0.0
    %2256 = vmatmul.mubr.f32.gmra.mrb[0].mxu0 %v2184
    %v2257 = vpop.f32.mrb[0].mxu0
    %v2258 = vadd.f32 0.0, %v2257
    %v2259 = vpop.f32.mrb[0].mxu0
    %2260 = vdwg.mxu0
    %s2261 = scalar_lea.vmem %s6, 192
    %v2262 = vld [vmem:[%s2261] sm:$0xff]
    %v2263 = vld [vmem:[%s2261 + $0x8] sm:$0xff]
    %v2264 = vld [vmem:[%s2261 + $0x10] sm:$0xff]
    %v2265 = vld [vmem:[%s2261 + $0x18] sm:$0xff]
    %v2266 = vld [vmem:[%s2261 + $0x20] sm:$0xff]
    %v2267 = vld [vmem:[%s2261 + $0x28] sm:$0xff]
    %2268 = vmatprep.subr.mxu0 0.0
    %2269 = vmatpush1.msra.mxu0 %v2262
    %2270 = vmatprep.subr.mxu0 0.0
    %2271 = vmatpush1.msra.mxu0 %v2263
    %2272 = vmatprep.subr.mxu0 0.0
    %2273 = vmatpush1.msra.mxu0 %v2264
    %2274 = vmatprep.subr.mxu0 0.0
    %2275 = vmatpush1.msra.mxu0 %v2265
    %2276 = vmatprep.subr.mxu0 0.0
    %2277 = vmatpush1.msra.mxu0 %v2266
    %2278 = vmatprep.subr.mxu0 0.0
    %2279 = vmatpush1.msra.mxu0 %v2267
    %2280 = vmatprep.subr.mxu0 0.0
    %2281 = vmatpush1.msra.mxu0 0.0
    %2282 = vmatprep.subr.mxu0 0.0
    %2283 = vmatpush1.msra.mxu0 0.0
    %2284 = vmatprep.subr.mxu0 0.0
    %2285 = vmatpush1.msra.mxu0 0.0
    %2286 = vmatprep.subr.mxu0 0.0
    %2287 = vmatpush1.msra.mxu0 0.0
    %2288 = vmatprep.subr.mxu0 0.0
    %2289 = vmatpush1.msra.mxu0 0.0
    %2290 = vmatprep.subr.mxu0 0.0
    %2291 = vmatpush1.msra.mxu0 0.0
    %2292 = vmatprep.subr.mxu0 0.0
    %2293 = vmatpush1.msra.mxu0 0.0
    %2294 = vmatprep.subr.mxu0 0.0
    %2295 = vmatpush1.msra.mxu0 0.0
    %2296 = vmatprep.subr.mxu0 0.0
    %2297 = vmatpush1.msra.mxu0 0.0
    %2298 = vmatprep.subr.mxu0 0.0
    %2299 = vmatpush1.msra.mxu0 0.0
    %2300 = vmatprep.subr.mxu0 0.0
    %2301 = vmatpush1.msra.mxu0 0.0
    %2302 = vmatprep.subr.mxu0 0.0
    %2303 = vmatpush1.msra.mxu0 0.0
    %2304 = vmatprep.subr.mxu0 0.0
    %2305 = vmatpush1.msra.mxu0 0.0
    %2306 = vmatprep.subr.mxu0 0.0
    %2307 = vmatpush1.msra.mxu0 0.0
    %2308 = vmatprep.subr.mxu0 0.0
    %2309 = vmatpush1.msra.mxu0 0.0
    %2310 = vmatprep.subr.mxu0 0.0
    %2311 = vmatpush1.msra.mxu0 0.0
    %2312 = vmatprep.subr.mxu0 0.0
    %2313 = vmatpush1.msra.mxu0 0.0
    %2314 = vmatprep.subr.mxu0 0.0
    %2315 = vmatpush1.msra.mxu0 0.0
    %2316 = vmatprep.subr.mxu0 0.0
    %2317 = vmatpush1.msra.mxu0 0.0
    %2318 = vmatprep.subr.mxu0 0.0
    %2319 = vmatpush1.msra.mxu0 0.0
    %2320 = vmatprep.subr.mxu0 0.0
    %2321 = vmatpush1.msra.mxu0 0.0
    %2322 = vmatprep.subr.mxu0 0.0
    %2323 = vmatpush1.msra.mxu0 0.0
    %2324 = vmatprep.subr.mxu0 0.0
    %2325 = vmatpush1.msra.mxu0 0.0
    %2326 = vmatprep.subr.mxu0 0.0
    %2327 = vmatpush1.msra.mxu0 0.0
    %2328 = vmatprep.subr.mxu0 0.0
    %2329 = vmatpush1.msra.mxu0 0.0
    %2330 = vmatprep.subr.mxu0 0.0
    %2331 = vmatpush1.msra.mxu0 0.0
    %2332 = vmatprep.mubr.f32.mxu0 0.0
    %2333 = vmatmul.mubr.f32.gmra.mrb[0].mxu0 %v2182
    %v2334 = vpop.f32.mrb[0].mxu0
    %v2335 = vadd.f32 0.0, %v2334
    %v2336 = vpop.f32.mrb[0].mxu0
    %2337 = vmatprep.mubr.f32.mxu0 0.0
    %2338 = vmatmul.mubr.f32.gmra.mrb[0].mxu0 %v2184
    %v2339 = vpop.f32.mrb[0].mxu0
    %v2340 = vadd.f32 0.0, %v2339
    %v2341 = vpop.f32.mrb[0].mxu0
    %2342 = vdwg.mxu0
    %v2343 = vadd.f32 %v2165, %v2253
    %v2344 = vadd.f32 %v2166, %v2258
    %v2345 = vadd.f32 %v2167, %v2335
    %v2346 = vadd.f32 %v2168, %v2340
    %v2347 = vmax.f32 %v2343, %v2345
    %v2348 = vmax.f32 %v2344, %v2346
    %v2349 = vld [vmem:[%s7] sm:$0x3]
    %vm2350 = vcmask 130048
    %v2352 = vsel %vm2350, %v2349, 0
    %2354 = vmatprep.subr.mxu0 0.0
    %2355 = vmatpush1.msra.mxu0 %v2347
    %2356 = vmatprep.subr.mxu0 0.0
    %2357 = vmatpush1.msra.mxu0 %v2348
    %2358 = vmatprep.subr.mxu0 0.0
    %2359 = vmatpush1.msra.mxu0 0.0
    %2360 = vmatprep.subr.mxu0 0.0
    %2361 = vmatpush1.msra.mxu0 0.0
    %2362 = vmatprep.subr.mxu0 0.0
    %2363 = vmatpush1.msra.mxu0 0.0
    %2364 = vmatprep.subr.mxu0 0.0
    %2365 = vmatpush1.msra.mxu0 0.0
    %2366 = vmatprep.subr.mxu0 0.0
    %2367 = vmatpush1.msra.mxu0 0.0
    %2368 = vmatprep.subr.mxu0 0.0
    %2369 = vmatpush1.msra.mxu0 0.0
    %2370 = vmatprep.subr.mxu0 0.0
    %2371 = vmatpush1.msra.mxu0 0.0
    %2372 = vmatprep.subr.mxu0 0.0
    %2373 = vmatpush1.msra.mxu0 0.0
    %2374 = vmatprep.subr.mxu0 0.0
    %2375 = vmatpush1.msra.mxu0 0.0
    %2376 = vmatprep.subr.mxu0 0.0
    %2377 = vmatpush1.msra.mxu0 0.0
    %2378 = vmatprep.subr.mxu0 0.0
    %2379 = vmatpush1.msra.mxu0 0.0
    %2380 = vmatprep.subr.mxu0 0.0
    %2381 = vmatpush1.msra.mxu0 0.0
    %2382 = vmatprep.subr.mxu0 0.0
    %2383 = vmatpush1.msra.mxu0 0.0
    %2384 = vmatprep.subr.mxu0 0.0
    %2385 = vmatpush1.msra.mxu0 0.0
    %2386 = vmatprep.subr.mxu0 0.0
    %2387 = vmatpush1.msra.mxu0 0.0
    %2388 = vmatprep.subr.mxu0 0.0
    %2389 = vmatpush1.msra.mxu0 0.0
    %2390 = vmatprep.subr.mxu0 0.0
    %2391 = vmatpush1.msra.mxu0 0.0
    %2392 = vmatprep.subr.mxu0 0.0
    %2393 = vmatpush1.msra.mxu0 0.0
    %2394 = vmatprep.subr.mxu0 0.0
    %2395 = vmatpush1.msra.mxu0 0.0
    %2396 = vmatprep.subr.mxu0 0.0
    %2397 = vmatpush1.msra.mxu0 0.0
    %2398 = vmatprep.subr.mxu0 0.0
    %2399 = vmatpush1.msra.mxu0 0.0
    %2400 = vmatprep.subr.mxu0 0.0
    %2401 = vmatpush1.msra.mxu0 0.0
    %2402 = vmatprep.subr.mxu0 0.0
    %2403 = vmatpush1.msra.mxu0 0.0
    %2404 = vmatprep.subr.mxu0 0.0
    %2405 = vmatpush1.msra.mxu0 0.0
    %2406 = vmatprep.subr.mxu0 0.0
    %2407 = vmatpush1.msra.mxu0 0.0
    %2408 = vmatprep.subr.mxu0 0.0
    %2409 = vmatpush1.msra.mxu0 0.0
    %2410 = vmatprep.subr.mxu0 0.0
    %2411 = vmatpush1.msra.mxu0 0.0
    %2412 = vmatprep.subr.mxu0 0.0
    %2413 = vmatpush1.msra.mxu0 0.0
    %2414 = vmatprep.subr.mxu0 0.0
    %2415 = vmatpush1.msra.mxu0 0.0
    %2416 = vmatprep.subr.mxu0 0.0
    %2417 = vmatpush1.msra.mxu0 0.0
    %2418 = vmatprep.mubr.f32.mxu0 0.0
    %2419 = vmatmul.mubr.f32.gmra.mrb[0].mxu0 %v2352
    %v2420 = vpop.f32.mrb[0].mxu0
    %v2421 = vadd.f32 0.0, %v2420
    %v2422 = vpop.f32.mrb[0].mxu0
    %2423 = vdwg.mxu0
    %s2424 = scalar_lea.vmem %s7, 8
    %v2425 = vld [vmem:[%s2424] sm:$0x3]
    %v2427 = vsel %vm2350, %v2425, 0
    %2429 = vmatprep.subr.mxu0 0.0
    %2430 = vmatpush1.msra.mxu0 %v2347
    %2431 = vmatprep.subr.mxu0 0.0
    %2432 = vmatpush1.msra.mxu0 %v2348
    %2433 = vmatprep.subr.mxu0 0.0
    %2434 = vmatpush1.msra.mxu0 0.0
    %2435 = vmatprep.subr.mxu0 0.0
    %2436 = vmatpush1.msra.mxu0 0.0
    %2437 = vmatprep.subr.mxu0 0.0
    %2438 = vmatpush1.msra.mxu0 0.0
    %2439 = vmatprep.subr.mxu0 0.0
    %2440 = vmatpush1.msra.mxu0 0.0
    %2441 = vmatprep.subr.mxu0 0.0
    %2442 = vmatpush1.msra.mxu0 0.0
    %2443 = vmatprep.subr.mxu0 0.0
    %2444 = vmatpush1.msra.mxu0 0.0
    %2445 = vmatprep.subr.mxu0 0.0
    %2446 = vmatpush1.msra.mxu0 0.0
    %2447 = vmatprep.subr.mxu0 0.0
    %2448 = vmatpush1.msra.mxu0 0.0
    %2449 = vmatprep.subr.mxu0 0.0
    %2450 = vmatpush1.msra.mxu0 0.0
    %2451 = vmatprep.subr.mxu0 0.0
    %2452 = vmatpush1.msra.mxu0 0.0
    %2453 = vmatprep.subr.mxu0 0.0
    %2454 = vmatpush1.msra.mxu0 0.0
    %2455 = vmatprep.subr.mxu0 0.0
    %2456 = vmatpush1.msra.mxu0 0.0
    %2457 = vmatprep.subr.mxu0 0.0
    %2458 = vmatpush1.msra.mxu0 0.0
    %2459 = vmatprep.subr.mxu0 0.0
    %2460 = vmatpush1.msra.mxu0 0.0
    %2461 = vmatprep.subr.mxu0 0.0
    %2462 = vmatpush1.msra.mxu0 0.0
    %2463 = vmatprep.subr.mxu0 0.0
    %2464 = vmatpush1.msra.mxu0 0.0
    %2465 = vmatprep.subr.mxu0 0.0
    %2466 = vmatpush1.msra.mxu0 0.0
    %2467 = vmatprep.subr.mxu0 0.0
    %2468 = vmatpush1.msra.mxu0 0.0
    %2469 = vmatprep.subr.mxu0 0.0
    %2470 = vmatpush1.msra.mxu0 0.0
    %2471 = vmatprep.subr.mxu0 0.0
    %2472 = vmatpush1.msra.mxu0 0.0
    %2473 = vmatprep.subr.mxu0 0.0
    %2474 = vmatpush1.msra.mxu0 0.0
    %2475 = vmatprep.subr.mxu0 0.0
    %2476 = vmatpush1.msra.mxu0 0.0
    %2477 = vmatprep.subr.mxu0 0.0
    %2478 = vmatpush1.msra.mxu0 0.0
    %2479 = vmatprep.subr.mxu0 0.0
    %2480 = vmatpush1.msra.mxu0 0.0
    %2481 = vmatprep.subr.mxu0 0.0
    %2482 = vmatpush1.msra.mxu0 0.0
    %2483 = vmatprep.subr.mxu0 0.0
    %2484 = vmatpush1.msra.mxu0 0.0
    %2485 = vmatprep.subr.mxu0 0.0
    %2486 = vmatpush1.msra.mxu0 0.0
    %2487 = vmatprep.subr.mxu0 0.0
    %2488 = vmatpush1.msra.mxu0 0.0
    %2489 = vmatprep.subr.mxu0 0.0
    %2490 = vmatpush1.msra.mxu0 0.0
    %2491 = vmatprep.subr.mxu0 0.0
    %2492 = vmatpush1.msra.mxu0 0.0
    %2493 = vmatprep.mubr.f32.mxu0 0.0
    %2494 = vmatmul.mubr.f32.gmra.mrb[0].mxu0 %v2427
    %v2495 = vpop.f32.mrb[0].mxu0
    %v2496 = vadd.f32 0.0, %v2495
    %v2497 = vpop.f32.mrb[0].mxu0
    %2498 = vdwg.mxu0
    %v2499 = vmax.f32 %v2421, %v2496
    %v2500 = vld [vmem:[%s8] sm:$0x1]
    %v2502 = vlaneseq
    %v2503 = vshrl.u32 %v2502, 7
    %v2504 = vsub.s32 0, %v2503
    %v2505 = vrot.slane %v2500, %v2504
    %v2507 = vadd.f32 %v2499, %v2505
    %v2508 = vmax.f32 %v2507, 0.0
    %v2509 = vld [vmem:[%s9] sm:$0xff]
    %v2510 = vld [vmem:[%s9 + $0x8] sm:$0xff]
    %v2511 = vld [vmem:[%s9 + $0x10] sm:$0xff]
    %v2512 = vld [vmem:[%s9 + $0x18] sm:$0xff]
    %s2513 = scalar_lea.vmem %s7, 2
    %v2514 = vld [vmem:[%s2513] sm:$0x3]
    %v2516 = vsel %vm2350, %v2514, 0
    %2518 = vmatprep.subr.mxu0 0.0
    %2519 = vmatpush1.msra.mxu0 %v2347
    %2520 = vmatprep.subr.mxu0 0.0
    %2521 = vmatpush1.msra.mxu0 %v2348
    %2522 = vmatprep.subr.mxu0 0.0
    %2523 = vmatpush1.msra.mxu0 0.0
    %2524 = vmatprep.subr.mxu0 0.0
    %2525 = vmatpush1.msra.mxu0 0.0
    %2526 = vmatprep.subr.mxu0 0.0
    %2527 = vmatpush1.msra.mxu0 0.0
    %2528 = vmatprep.subr.mxu0 0.0
    %2529 = vmatpush1.msra.mxu0 0.0
    %2530 = vmatprep.subr.mxu0 0.0
    %2531 = vmatpush1.msra.mxu0 0.0
    %2532 = vmatprep.subr.mxu0 0.0
    %2533 = vmatpush1.msra.mxu0 0.0
    %2534 = vmatprep.subr.mxu0 0.0
    %2535 = vmatpush1.msra.mxu0 0.0
    %2536 = vmatprep.subr.mxu0 0.0
    %2537 = vmatpush1.msra.mxu0 0.0
    %2538 = vmatprep.subr.mxu0 0.0
    %2539 = vmatpush1.msra.mxu0 0.0
    %2540 = vmatprep.subr.mxu0 0.0
    %2541 = vmatpush1.msra.mxu0 0.0
    %2542 = vmatprep.subr.mxu0 0.0
    %2543 = vmatpush1.msra.mxu0 0.0
    %2544 = vmatprep.subr.mxu0 0.0
    %2545 = vmatpush1.msra.mxu0 0.0
    %2546 = vmatprep.subr.mxu0 0.0
    %2547 = vmatpush1.msra.mxu0 0.0
    %2548 = vmatprep.subr.mxu0 0.0
    %2549 = vmatpush1.msra.mxu0 0.0
    %2550 = vmatprep.subr.mxu0 0.0
    %2551 = vmatpush1.msra.mxu0 0.0
    %2552 = vmatprep.subr.mxu0 0.0
    %2553 = vmatpush1.msra.mxu0 0.0
    %2554 = vmatprep.subr.mxu0 0.0
    %2555 = vmatpush1.msra.mxu0 0.0
    %2556 = vmatprep.subr.mxu0 0.0
    %2557 = vmatpush1.msra.mxu0 0.0
    %2558 = vmatprep.subr.mxu0 0.0
    %2559 = vmatpush1.msra.mxu0 0.0
    %2560 = vmatprep.subr.mxu0 0.0
    %2561 = vmatpush1.msra.mxu0 0.0
    %2562 = vmatprep.subr.mxu0 0.0
    %2563 = vmatpush1.msra.mxu0 0.0
    %2564 = vmatprep.subr.mxu0 0.0
    %2565 = vmatpush1.msra.mxu0 0.0
    %2566 = vmatprep.subr.mxu0 0.0
    %2567 = vmatpush1.msra.mxu0 0.0
    %2568 = vmatprep.subr.mxu0 0.0
    %2569 = vmatpush1.msra.mxu0 0.0
    %2570 = vmatprep.subr.mxu0 0.0
    %2571 = vmatpush1.msra.mxu0 0.0
    %2572 = vmatprep.subr.mxu0 0.0
    %2573 = vmatpush1.msra.mxu0 0.0
    %2574 = vmatprep.subr.mxu0 0.0
    %2575 = vmatpush1.msra.mxu0 0.0
    %2576 = vmatprep.subr.mxu0 0.0
    %2577 = vmatpush1.msra.mxu0 0.0
    %2578 = vmatprep.subr.mxu0 0.0
    %2579 = vmatpush1.msra.mxu0 0.0
    %2580 = vmatprep.subr.mxu0 0.0
    %2581 = vmatpush1.msra.mxu0 0.0
    %2582 = vmatprep.mubr.f32.mxu0 0.0
    %2583 = vmatmul.mubr.f32.gmra.mrb[0].mxu0 %v2516
    %v2584 = vpop.f32.mrb[0].mxu0
    %v2585 = vadd.f32 0.0, %v2584
    %v2586 = vpop.f32.mrb[0].mxu0
    %2587 = vdwg.mxu0
    %s2588 = scalar_lea.vmem %s7, 10
    %v2589 = vld [vmem:[%s2588] sm:$0x3]
    %v2591 = vsel %vm2350, %v2589, 0
    %2593 = vmatprep.subr.mxu0 0.0
    %2594 = vmatpush1.msra.mxu0 %v2347
    %2595 = vmatprep.subr.mxu0 0.0
    %2596 = vmatpush1.msra.mxu0 %v2348
    %2597 = vmatprep.subr.mxu0 0.0
    %2598 = vmatpush1.msra.mxu0 0.0
    %2599 = vmatprep.subr.mxu0 0.0
    %2600 = vmatpush1.msra.mxu0 0.0
    %2601 = vmatprep.subr.mxu0 0.0
    %2602 = vmatpush1.msra.mxu0 0.0
    %2603 = vmatprep.subr.mxu0 0.0
    %2604 = vmatpush1.msra.mxu0 0.0
    %2605 = vmatprep.subr.mxu0 0.0
    %2606 = vmatpush1.msra.mxu0 0.0
    %2607 = vmatprep.subr.mxu0 0.0
    %2608 = vmatpush1.msra.mxu0 0.0
    %2609 = vmatprep.subr.mxu0 0.0
    %2610 = vmatpush1.msra.mxu0 0.0
    %2611 = vmatprep.subr.mxu0 0.0
    %2612 = vmatpush1.msra.mxu0 0.0
    %2613 = vmatprep.subr.mxu0 0.0
    %2614 = vmatpush1.msra.mxu0 0.0
    %2615 = vmatprep.subr.mxu0 0.0
    %2616 = vmatpush1.msra.mxu0 0.0
    %2617 = vmatprep.subr.mxu0 0.0
    %2618 = vmatpush1.msra.mxu0 0.0
    %2619 = vmatprep.subr.mxu0 0.0
    %2620 = vmatpush1.msra.mxu0 0.0
    %2621 = vmatprep.subr.mxu0 0.0
    %2622 = vmatpush1.msra.mxu0 0.0
    %2623 = vmatprep.subr.mxu0 0.0
    %2624 = vmatpush1.msra.mxu0 0.0
    %2625 = vmatprep.subr.mxu0 0.0
    %2626 = vmatpush1.msra.mxu0 0.0
    %2627 = vmatprep.subr.mxu0 0.0
    %2628 = vmatpush1.msra.mxu0 0.0
    %2629 = vmatprep.subr.mxu0 0.0
    %2630 = vmatpush1.msra.mxu0 0.0
    %2631 = vmatprep.subr.mxu0 0.0
    %2632 = vmatpush1.msra.mxu0 0.0
    %2633 = vmatprep.subr.mxu0 0.0
    %2634 = vmatpush1.msra.mxu0 0.0
    %2635 = vmatprep.subr.mxu0 0.0
    %2636 = vmatpush1.msra.mxu0 0.0
    %2637 = vmatprep.subr.mxu0 0.0
    %2638 = vmatpush1.msra.mxu0 0.0
    %2639 = vmatprep.subr.mxu0 0.0
    %2640 = vmatpush1.msra.mxu0 0.0
    %2641 = vmatprep.subr.mxu0 0.0
    %2642 = vmatpush1.msra.mxu0 0.0
    %2643 = vmatprep.subr.mxu0 0.0
    %2644 = vmatpush1.msra.mxu0 0.0
    %2645 = vmatprep.subr.mxu0 0.0
    %2646 = vmatpush1.msra.mxu0 0.0
    %2647 = vmatprep.subr.mxu0 0.0
    %2648 = vmatpush1.msra.mxu0 0.0
    %2649 = vmatprep.subr.mxu0 0.0
    %2650 = vmatpush1.msra.mxu0 0.0
    %2651 = vmatprep.subr.mxu0 0.0
    %2652 = vmatpush1.msra.mxu0 0.0
    %2653 = vmatprep.subr.mxu0 0.0
    %2654 = vmatpush1.msra.mxu0 0.0
    %2655 = vmatprep.subr.mxu0 0.0
    %2656 = vmatpush1.msra.mxu0 0.0
    %2657 = vmatprep.mubr.f32.mxu0 0.0
    %2658 = vmatmul.mubr.f32.gmra.mrb[0].mxu0 %v2591
    %v2659 = vpop.f32.mrb[0].mxu0
    %v2660 = vadd.f32 0.0, %v2659
    %v2661 = vpop.f32.mrb[0].mxu0
    %2662 = vdwg.mxu0
    %v2663 = vmax.f32 %v2585, %v2660
    %v2664 = vadd.f32 %v2663, %v2505
    %v2665 = vmax.f32 %v2664, 0.0
    %s2666 = scalar_lea.vmem %s9, 32
    %v2667 = vld [vmem:[%s2666] sm:$0xff]
    %v2668 = vld [vmem:[%s2666 + $0x8] sm:$0xff]
    %v2669 = vld [vmem:[%s2666 + $0x10] sm:$0xff]
    %v2670 = vld [vmem:[%s2666 + $0x18] sm:$0xff]
    %vm2671 = vcmask 261120
    %v2673 = vsel %vm2671, %v2665, 0
    %2675 = vmatprep.subr.mxu0 0.0
    %2676 = vmatpush1.msra.mxu0 %v2667
    %2677 = vmatprep.subr.mxu0 0.0
    %2678 = vmatpush1.msra.mxu0 %v2668
    %2679 = vmatprep.subr.mxu0 0.0
    %2680 = vmatpush1.msra.mxu0 %v2669
    %2681 = vmatprep.subr.mxu0 0.0
    %2682 = vmatpush1.msra.mxu0 %v2670
    %2683 = vmatprep.subr.mxu0 0.0
    %2684 = vmatpush1.msra.mxu0 0.0
    %2685 = vmatprep.subr.mxu0 0.0
    %2686 = vmatpush1.msra.mxu0 0.0
    %2687 = vmatprep.subr.mxu0 0.0
    %2688 = vmatpush1.msra.mxu0 0.0
    %2689 = vmatprep.subr.mxu0 0.0
    %2690 = vmatpush1.msra.mxu0 0.0
    %2691 = vmatprep.subr.mxu0 0.0
    %2692 = vmatpush1.msra.mxu0 0.0
    %2693 = vmatprep.subr.mxu0 0.0
    %2694 = vmatpush1.msra.mxu0 0.0
    %2695 = vmatprep.subr.mxu0 0.0
    %2696 = vmatpush1.msra.mxu0 0.0
    %2697 = vmatprep.subr.mxu0 0.0
    %2698 = vmatpush1.msra.mxu0 0.0
    %2699 = vmatprep.subr.mxu0 0.0
    %2700 = vmatpush1.msra.mxu0 0.0
    %2701 = vmatprep.subr.mxu0 0.0
    %2702 = vmatpush1.msra.mxu0 0.0
    %2703 = vmatprep.subr.mxu0 0.0
    %2704 = vmatpush1.msra.mxu0 0.0
    %2705 = vmatprep.subr.mxu0 0.0
    %2706 = vmatpush1.msra.mxu0 0.0
    %2707 = vmatprep.subr.mxu0 0.0
    %2708 = vmatpush1.msra.mxu0 0.0
    %2709 = vmatprep.subr.mxu0 0.0
    %2710 = vmatpush1.msra.mxu0 0.0
    %2711 = vmatprep.subr.mxu0 0.0
    %2712 = vmatpush1.msra.mxu0 0.0
    %2713 = vmatprep.subr.mxu0 0.0
    %2714 = vmatpush1.msra.mxu0 0.0
    %2715 = vmatprep.subr.mxu0 0.0
    %2716 = vmatpush1.msra.mxu0 0.0
    %2717 = vmatprep.subr.mxu0 0.0
    %2718 = vmatpush1.msra.mxu0 0.0
    %2719 = vmatprep.subr.mxu0 0.0
    %2720 = vmatpush1.msra.mxu0 0.0
    %2721 = vmatprep.subr.mxu0 0.0
    %2722 = vmatpush1.msra.mxu0 0.0
    %2723 = vmatprep.subr.mxu0 0.0
    %2724 = vmatpush1.msra.mxu0 0.0
    %2725 = vmatprep.subr.mxu0 0.0
    %2726 = vmatpush1.msra.mxu0 0.0
    %2727 = vmatprep.subr.mxu0 0.0
    %2728 = vmatpush1.msra.mxu0 0.0
    %2729 = vmatprep.subr.mxu0 0.0
    %2730 = vmatpush1.msra.mxu0 0.0
    %2731 = vmatprep.subr.mxu0 0.0
    %2732 = vmatpush1.msra.mxu0 0.0
    %2733 = vmatprep.subr.mxu0 0.0
    %2734 = vmatpush1.msra.mxu0 0.0
    %2735 = vmatprep.subr.mxu0 0.0
    %2736 = vmatpush1.msra.mxu0 0.0
    %2737 = vmatprep.subr.mxu0 0.0
    %2738 = vmatpush1.msra.mxu0 0.0
    %2739 = vmatprep.mubr.f32.mxu0 0.0
    %2740 = vmatmul.mubr.f32.gmra.mrb[0].mxu0 %v2673
    %v2741 = vpop.f32.mrb[0].mxu0
    %v2742 = vadd.f32 0.0, %v2741
    %v2743 = vpop.f32.mrb[0].mxu0
    %2744 = vdwg.mxu0
    %v2746 = vsel %vm2671, %v2508, 0
    %2748 = vmatprep.subr.mxu0 0.0
    %2749 = vmatpush1.msra.mxu0 %v2509
    %2750 = vmatprep.subr.mxu0 0.0
    %2751 = vmatpush1.msra.mxu0 %v2510
    %2752 = vmatprep.subr.mxu0 0.0
    %2753 = vmatpush1.msra.mxu0 %v2511
    %2754 = vmatprep.subr.mxu0 0.0
    %2755 = vmatpush1.msra.mxu0 %v2512
    %2756 = vmatprep.subr.mxu0 0.0
    %2757 = vmatpush1.msra.mxu0 0.0
    %2758 = vmatprep.subr.mxu0 0.0
    %2759 = vmatpush1.msra.mxu0 0.0
    %2760 = vmatprep.subr.mxu0 0.0
    %2761 = vmatpush1.msra.mxu0 0.0
    %2762 = vmatprep.subr.mxu0 0.0
    %2763 = vmatpush1.msra.mxu0 0.0
    %2764 = vmatprep.subr.mxu0 0.0
    %2765 = vmatpush1.msra.mxu0 0.0
    %2766 = vmatprep.subr.mxu0 0.0
    %2767 = vmatpush1.msra.mxu0 0.0
    %2768 = vmatprep.subr.mxu0 0.0
    %2769 = vmatpush1.msra.mxu0 0.0
    %2770 = vmatprep.subr.mxu0 0.0
    %2771 = vmatpush1.msra.mxu0 0.0
    %2772 = vmatprep.subr.mxu0 0.0
    %2773 = vmatpush1.msra.mxu0 0.0
    %2774 = vmatprep.subr.mxu0 0.0
    %2775 = vmatpush1.msra.mxu0 0.0
    %2776 = vmatprep.subr.mxu0 0.0
    %2777 = vmatpush1.msra.mxu0 0.0
    %2778 = vmatprep.subr.mxu0 0.0
    %2779 = vmatpush1.msra.mxu0 0.0
    %2780 = vmatprep.subr.mxu0 0.0
    %2781 = vmatpush1.msra.mxu0 0.0
    %2782 = vmatprep.subr.mxu0 0.0
    %2783 = vmatpush1.msra.mxu0 0.0
    %2784 = vmatprep.subr.mxu0 0.0
    %2785 = vmatpush1.msra.mxu0 0.0
    %2786 = vmatprep.subr.mxu0 0.0
    %2787 = vmatpush1.msra.mxu0 0.0
    %2788 = vmatprep.subr.mxu0 0.0
    %2789 = vmatpush1.msra.mxu0 0.0
    %2790 = vmatprep.subr.mxu0 0.0
    %2791 = vmatpush1.msra.mxu0 0.0
    %2792 = vmatprep.subr.mxu0 0.0
    %2793 = vmatpush1.msra.mxu0 0.0
    %2794 = vmatprep.subr.mxu0 0.0
    %2795 = vmatpush1.msra.mxu0 0.0
    %2796 = vmatprep.subr.mxu0 0.0
    %2797 = vmatpush1.msra.mxu0 0.0
    %2798 = vmatprep.subr.mxu0 0.0
    %2799 = vmatpush1.msra.mxu0 0.0
    %2800 = vmatprep.subr.mxu0 0.0
    %2801 = vmatpush1.msra.mxu0 0.0
    %2802 = vmatprep.subr.mxu0 0.0
    %2803 = vmatpush1.msra.mxu0 0.0
    %2804 = vmatprep.subr.mxu0 0.0
    %2805 = vmatpush1.msra.mxu0 0.0
    %2806 = vmatprep.subr.mxu0 0.0
    %2807 = vmatpush1.msra.mxu0 0.0
    %2808 = vmatprep.subr.mxu0 0.0
    %2809 = vmatpush1.msra.mxu0 0.0
    %2810 = vmatprep.subr.mxu0 0.0
    %2811 = vmatpush1.msra.mxu0 0.0
    %2812 = vmatprep.mubr.f32.mxu0 0.0
    %2813 = vmatmul.mubr.f32.gmra.mrb[0].mxu0 %v2746
    %v2814 = vpop.f32.mrb[0].mxu0
    %v2815 = vadd.f32 %v2742, %v2814
    %v2816 = vpop.f32.mrb[0].mxu0
    %2817 = vdwg.mxu0
    %s2818 = scalar_lea.vmem %s7, 4
    %v2819 = vld [vmem:[%s2818] sm:$0x3]
    %v2821 = vsel %vm2350, %v2819, 0
    %2823 = vmatprep.subr.mxu0 0.0
    %2824 = vmatpush1.msra.mxu0 %v2347
    %2825 = vmatprep.subr.mxu0 0.0
    %2826 = vmatpush1.msra.mxu0 %v2348
    %2827 = vmatprep.subr.mxu0 0.0
    %2828 = vmatpush1.msra.mxu0 0.0
    %2829 = vmatprep.subr.mxu0 0.0
    %2830 = vmatpush1.msra.mxu0 0.0
    %2831 = vmatprep.subr.mxu0 0.0
    %2832 = vmatpush1.msra.mxu0 0.0
    %2833 = vmatprep.subr.mxu0 0.0
    %2834 = vmatpush1.msra.mxu0 0.0
    %2835 = vmatprep.subr.mxu0 0.0
    %2836 = vmatpush1.msra.mxu0 0.0
    %2837 = vmatprep.subr.mxu0 0.0
    %2838 = vmatpush1.msra.mxu0 0.0
    %2839 = vmatprep.subr.mxu0 0.0
    %2840 = vmatpush1.msra.mxu0 0.0
    %2841 = vmatprep.subr.mxu0 0.0
    %2842 = vmatpush1.msra.mxu0 0.0
    %2843 = vmatprep.subr.mxu0 0.0
    %2844 = vmatpush1.msra.mxu0 0.0
    %2845 = vmatprep.subr.mxu0 0.0
    %2846 = vmatpush1.msra.mxu0 0.0
    %2847 = vmatprep.subr.mxu0 0.0
    %2848 = vmatpush1.msra.mxu0 0.0
    %2849 = vmatprep.subr.mxu0 0.0
    %2850 = vmatpush1.msra.mxu0 0.0
    %2851 = vmatprep.subr.mxu0 0.0
    %2852 = vmatpush1.msra.mxu0 0.0
    %2853 = vmatprep.subr.mxu0 0.0
    %2854 = vmatpush1.msra.mxu0 0.0
    %2855 = vmatprep.subr.mxu0 0.0
    %2856 = vmatpush1.msra.mxu0 0.0
    %2857 = vmatprep.subr.mxu0 0.0
    %2858 = vmatpush1.msra.mxu0 0.0
    %2859 = vmatprep.subr.mxu0 0.0
    %2860 = vmatpush1.msra.mxu0 0.0
    %2861 = vmatprep.subr.mxu0 0.0
    %2862 = vmatpush1.msra.mxu0 0.0
    %2863 = vmatprep.subr.mxu0 0.0
    %2864 = vmatpush1.msra.mxu0 0.0
    %2865 = vmatprep.subr.mxu0 0.0
    %2866 = vmatpush1.msra.mxu0 0.0
    %2867 = vmatprep.subr.mxu0 0.0
    %2868 = vmatpush1.msra.mxu0 0.0
    %2869 = vmatprep.subr.mxu0 0.0
    %2870 = vmatpush1.msra.mxu0 0.0
    %2871 = vmatprep.subr.mxu0 0.0
    %2872 = vmatpush1.msra.mxu0 0.0
    %2873 = vmatprep.subr.mxu0 0.0
    %2874 = vmatpush1.msra.mxu0 0.0
    %2875 = vmatprep.subr.mxu0 0.0
    %2876 = vmatpush1.msra.mxu0 0.0
    %2877 = vmatprep.subr.mxu0 0.0
    %2878 = vmatpush1.msra.mxu0 0.0
    %2879 = vmatprep.subr.mxu0 0.0
    %2880 = vmatpush1.msra.mxu0 0.0
    %2881 = vmatprep.subr.mxu0 0.0
    %2882 = vmatpush1.msra.mxu0 0.0
    %2883 = vmatprep.subr.mxu0 0.0
    %2884 = vmatpush1.msra.mxu0 0.0
    %2885 = vmatprep.subr.mxu0 0.0
    %2886 = vmatpush1.msra.mxu0 0.0
    %2887 = vmatprep.mubr.f32.mxu0 0.0
    %2888 = vmatmul.mubr.f32.gmra.mrb[0].mxu0 %v2821
    %v2889 = vpop.f32.mrb[0].mxu0
    %v2890 = vadd.f32 0.0, %v2889
    %v2891 = vpop.f32.mrb[0].mxu0
    %2892 = vdwg.mxu0
    %s2893 = scalar_lea.vmem %s7, 12
    %v2894 = vld [vmem:[%s2893] sm:$0x3]
    %v2896 = vsel %vm2350, %v2894, 0
    %2898 = vmatprep.subr.mxu0 0.0
    %2899 = vmatpush1.msra.mxu0 %v2347
    %2900 = vmatprep.subr.mxu0 0.0
    %2901 = vmatpush1.msra.mxu0 %v2348
    %2902 = vmatprep.subr.mxu0 0.0
    %2903 = vmatpush1.msra.mxu0 0.0
    %2904 = vmatprep.subr.mxu0 0.0
    %2905 = vmatpush1.msra.mxu0 0.0
    %2906 = vmatprep.subr.mxu0 0.0
    %2907 = vmatpush1.msra.mxu0 0.0
    %2908 = vmatprep.subr.mxu0 0.0
    %2909 = vmatpush1.msra.mxu0 0.0
    %2910 = vmatprep.subr.mxu0 0.0
    %2911 = vmatpush1.msra.mxu0 0.0
    %2912 = vmatprep.subr.mxu0 0.0
    %2913 = vmatpush1.msra.mxu0 0.0
    %2914 = vmatprep.subr.mxu0 0.0
    %2915 = vmatpush1.msra.mxu0 0.0
    %2916 = vmatprep.subr.mxu0 0.0
    %2917 = vmatpush1.msra.mxu0 0.0
    %2918 = vmatprep.subr.mxu0 0.0
    %2919 = vmatpush1.msra.mxu0 0.0
    %2920 = vmatprep.subr.mxu0 0.0
    %2921 = vmatpush1.msra.mxu0 0.0
    %2922 = vmatprep.subr.mxu0 0.0
    %2923 = vmatpush1.msra.mxu0 0.0
    %2924 = vmatprep.subr.mxu0 0.0
    %2925 = vmatpush1.msra.mxu0 0.0
    %2926 = vmatprep.subr.mxu0 0.0
    %2927 = vmatpush1.msra.mxu0 0.0
    %2928 = vmatprep.subr.mxu0 0.0
    %2929 = vmatpush1.msra.mxu0 0.0
    %2930 = vmatprep.subr.mxu0 0.0
    %2931 = vmatpush1.msra.mxu0 0.0
    %2932 = vmatprep.subr.mxu0 0.0
    %2933 = vmatpush1.msra.mxu0 0.0
    %2934 = vmatprep.subr.mxu0 0.0
    %2935 = vmatpush1.msra.mxu0 0.0
    %2936 = vmatprep.subr.mxu0 0.0
    %2937 = vmatpush1.msra.mxu0 0.0
    %2938 = vmatprep.subr.mxu0 0.0
    %2939 = vmatpush1.msra.mxu0 0.0
    %2940 = vmatprep.subr.mxu0 0.0
    %2941 = vmatpush1.msra.mxu0 0.0
    %2942 = vmatprep.subr.mxu0 0.0
    %2943 = vmatpush1.msra.mxu0 0.0
    %2944 = vmatprep.subr.mxu0 0.0
    %2945 = vmatpush1.msra.mxu0 0.0
    %2946 = vmatprep.subr.mxu0 0.0
    %2947 = vmatpush1.msra.mxu0 0.0
    %2948 = vmatprep.subr.mxu0 0.0
    %2949 = vmatpush1.msra.mxu0 0.0
    %2950 = vmatprep.subr.mxu0 0.0
    %2951 = vmatpush1.msra.mxu0 0.0
    %2952 = vmatprep.subr.mxu0 0.0
    %2953 = vmatpush1.msra.mxu0 0.0
    %2954 = vmatprep.subr.mxu0 0.0
    %2955 = vmatpush1.msra.mxu0 0.0
    %2956 = vmatprep.subr.mxu0 0.0
    %2957 = vmatpush1.msra.mxu0 0.0
    %2958 = vmatprep.subr.mxu0 0.0
    %2959 = vmatpush1.msra.mxu0 0.0
    %2960 = vmatprep.subr.mxu0 0.0
    %2961 = vmatpush1.msra.mxu0 0.0
    %2962 = vmatprep.mubr.f32.mxu0 0.0
    %2963 = vmatmul.mubr.f32.gmra.mrb[0].mxu0 %v2896
    %v2964 = vpop.f32.mrb[0].mxu0
    %v2965 = vadd.f32 0.0, %v2964
    %v2966 = vpop.f32.mrb[0].mxu0
    %2967 = vdwg.mxu0
    %v2968 = vmax.f32 %v2890, %v2965
    %v2969 = vadd.f32 %v2968, %v2505
    %v2970 = vmax.f32 %v2969, 0.0
    %s2971 = scalar_lea.vmem %s9, 64
    %v2972 = vld [vmem:[%s2971] sm:$0xff]
    %v2973 = vld [vmem:[%s2971 + $0x8] sm:$0xff]
    %v2974 = vld [vmem:[%s2971 + $0x10] sm:$0xff]
    %v2975 = vld [vmem:[%s2971 + $0x18] sm:$0xff]
    %v2977 = vsel %vm2671, %v2970, 0
    %2979 = vmatprep.subr.mxu0 0.0
    %2980 = vmatpush1.msra.mxu0 %v2972
    %2981 = vmatprep.subr.mxu0 0.0
    %2982 = vmatpush1.msra.mxu0 %v2973
    %2983 = vmatprep.subr.mxu0 0.0
    %2984 = vmatpush1.msra.mxu0 %v2974
    %2985 = vmatprep.subr.mxu0 0.0
    %2986 = vmatpush1.msra.mxu0 %v2975
    %2987 = vmatprep.subr.mxu0 0.0
    %2988 = vmatpush1.msra.mxu0 0.0
    %2989 = vmatprep.subr.mxu0 0.0
    %2990 = vmatpush1.msra.mxu0 0.0
    %2991 = vmatprep.subr.mxu0 0.0
    %2992 = vmatpush1.msra.mxu0 0.0
    %2993 = vmatprep.subr.mxu0 0.0
    %2994 = vmatpush1.msra.mxu0 0.0
    %2995 = vmatprep.subr.mxu0 0.0
    %2996 = vmatpush1.msra.mxu0 0.0
    %2997 = vmatprep.subr.mxu0 0.0
    %2998 = vmatpush1.msra.mxu0 0.0
    %2999 = vmatprep.subr.mxu0 0.0
    %3000 = vmatpush1.msra.mxu0 0.0
    %3001 = vmatprep.subr.mxu0 0.0
    %3002 = vmatpush1.msra.mxu0 0.0
    %3003 = vmatprep.subr.mxu0 0.0
    %3004 = vmatpush1.msra.mxu0 0.0
    %3005 = vmatprep.subr.mxu0 0.0
    %3006 = vmatpush1.msra.mxu0 0.0
    %3007 = vmatprep.subr.mxu0 0.0
    %3008 = vmatpush1.msra.mxu0 0.0
    %3009 = vmatprep.subr.mxu0 0.0
    %3010 = vmatpush1.msra.mxu0 0.0
    %3011 = vmatprep.subr.mxu0 0.0
    %3012 = vmatpush1.msra.mxu0 0.0
    %3013 = vmatprep.subr.mxu0 0.0
    %3014 = vmatpush1.msra.mxu0 0.0
    %3015 = vmatprep.subr.mxu0 0.0
    %3016 = vmatpush1.msra.mxu0 0.0
    %3017 = vmatprep.subr.mxu0 0.0
    %3018 = vmatpush1.msra.mxu0 0.0
    %3019 = vmatprep.subr.mxu0 0.0
    %3020 = vmatpush1.msra.mxu0 0.0
    %3021 = vmatprep.subr.mxu0 0.0
    %3022 = vmatpush1.msra.mxu0 0.0
    %3023 = vmatprep.subr.mxu0 0.0
    %3024 = vmatpush1.msra.mxu0 0.0
    %3025 = vmatprep.subr.mxu0 0.0
    %3026 = vmatpush1.msra.mxu0 0.0
    %3027 = vmatprep.subr.mxu0 0.0
    %3028 = vmatpush1.msra.mxu0 0.0
    %3029 = vmatprep.subr.mxu0 0.0
    %3030 = vmatpush1.msra.mxu0 0.0
    %3031 = vmatprep.subr.mxu0 0.0
    %3032 = vmatpush1.msra.mxu0 0.0
    %3033 = vmatprep.subr.mxu0 0.0
    %3034 = vmatpush1.msra.mxu0 0.0
    %3035 = vmatprep.subr.mxu0 0.0
    %3036 = vmatpush1.msra.mxu0 0.0
    %3037 = vmatprep.subr.mxu0 0.0
    %3038 = vmatpush1.msra.mxu0 0.0
    %3039 = vmatprep.subr.mxu0 0.0
    %3040 = vmatpush1.msra.mxu0 0.0
    %3041 = vmatprep.subr.mxu0 0.0
    %3042 = vmatpush1.msra.mxu0 0.0
    %3043 = vmatprep.mubr.f32.mxu0 0.0
    %3044 = vmatmul.mubr.f32.gmra.mrb[0].mxu0 %v2977
    %v3045 = vpop.f32.mrb[0].mxu0
    %v3046 = vadd.f32 0.0, %v3045
    %v3047 = vpop.f32.mrb[0].mxu0
    %3048 = vdwg.mxu0
    %v3049 = vadd.f32 %v2815, %v3046
    %s3050 = scalar_lea.vmem %s7, 6
    %v3051 = vld [vmem:[%s3050] sm:$0x3]
    %v3053 = vsel %vm2350, %v3051, 0
    %3055 = vmatprep.subr.mxu0 0.0
    %3056 = vmatpush1.msra.mxu0 %v2347
    %3057 = vmatprep.subr.mxu0 0.0
    %3058 = vmatpush1.msra.mxu0 %v2348
    %3059 = vmatprep.subr.mxu0 0.0
    %3060 = vmatpush1.msra.mxu0 0.0
    %3061 = vmatprep.subr.mxu0 0.0
    %3062 = vmatpush1.msra.mxu0 0.0
    %3063 = vmatprep.subr.mxu0 0.0
    %3064 = vmatpush1.msra.mxu0 0.0
    %3065 = vmatprep.subr.mxu0 0.0
    %3066 = vmatpush1.msra.mxu0 0.0
    %3067 = vmatprep.subr.mxu0 0.0
    %3068 = vmatpush1.msra.mxu0 0.0
    %3069 = vmatprep.subr.mxu0 0.0
    %3070 = vmatpush1.msra.mxu0 0.0
    %3071 = vmatprep.subr.mxu0 0.0
    %3072 = vmatpush1.msra.mxu0 0.0
    %3073 = vmatprep.subr.mxu0 0.0
    %3074 = vmatpush1.msra.mxu0 0.0
    %3075 = vmatprep.subr.mxu0 0.0
    %3076 = vmatpush1.msra.mxu0 0.0
    %3077 = vmatprep.subr.mxu0 0.0
    %3078 = vmatpush1.msra.mxu0 0.0
    %3079 = vmatprep.subr.mxu0 0.0
    %3080 = vmatpush1.msra.mxu0 0.0
    %3081 = vmatprep.subr.mxu0 0.0
    %3082 = vmatpush1.msra.mxu0 0.0
    %3083 = vmatprep.subr.mxu0 0.0
    %3084 = vmatpush1.msra.mxu0 0.0
    %3085 = vmatprep.subr.mxu0 0.0
    %3086 = vmatpush1.msra.mxu0 0.0
    %3087 = vmatprep.subr.mxu0 0.0
    %3088 = vmatpush1.msra.mxu0 0.0
    %3089 = vmatprep.subr.mxu0 0.0
    %3090 = vmatpush1.msra.mxu0 0.0
    %3091 = vmatprep.subr.mxu0 0.0
    %3092 = vmatpush1.msra.mxu0 0.0
    %3093 = vmatprep.subr.mxu0 0.0
    %3094 = vmatpush1.msra.mxu0 0.0
    %3095 = vmatprep.subr.mxu0 0.0
    %3096 = vmatpush1.msra.mxu0 0.0
    %3097 = vmatprep.subr.mxu0 0.0
    %3098 = vmatpush1.msra.mxu0 0.0
    %3099 = vmatprep.subr.mxu0 0.0
    %3100 = vmatpush1.msra.mxu0 0.0
    %3101 = vmatprep.subr.mxu0 0.0
    %3102 = vmatpush1.msra.mxu0 0.0
    %3103 = vmatprep.subr.mxu0 0.0
    %3104 = vmatpush1.msra.mxu0 0.0
    %3105 = vmatprep.subr.mxu0 0.0
    %3106 = vmatpush1.msra.mxu0 0.0
    %3107 = vmatprep.subr.mxu0 0.0
    %3108 = vmatpush1.msra.mxu0 0.0
    %3109 = vmatprep.subr.mxu0 0.0
    %3110 = vmatpush1.msra.mxu0 0.0
    %3111 = vmatprep.subr.mxu0 0.0
    %3112 = vmatpush1.msra.mxu0 0.0
    %3113 = vmatprep.subr.mxu0 0.0
    %3114 = vmatpush1.msra.mxu0 0.0
    %3115 = vmatprep.subr.mxu0 0.0
    %3116 = vmatpush1.msra.mxu0 0.0
    %3117 = vmatprep.subr.mxu0 0.0
    %3118 = vmatpush1.msra.mxu0 0.0
    %3119 = vmatprep.mubr.f32.mxu0 0.0
    %3120 = vmatmul.mubr.f32.gmra.mrb[0].mxu0 %v3053
    %v3121 = vpop.f32.mrb[0].mxu0
    %v3122 = vadd.f32 0.0, %v3121
    %v3123 = vpop.f32.mrb[0].mxu0
    %3124 = vdwg.mxu0
    %s3125 = scalar_lea.vmem %s7, 14
    %v3126 = vld [vmem:[%s3125] sm:$0x3]
    %v3128 = vsel %vm2350, %v3126, 0
    %3130 = vmatprep.subr.mxu0 0.0
    %3131 = vmatpush1.msra.mxu0 %v2347
    %3132 = vmatprep.subr.mxu0 0.0
    %3133 = vmatpush1.msra.mxu0 %v2348
    %3134 = vmatprep.subr.mxu0 0.0
    %3135 = vmatpush1.msra.mxu0 0.0
    %3136 = vmatprep.subr.mxu0 0.0
    %3137 = vmatpush1.msra.mxu0 0.0
    %3138 = vmatprep.subr.mxu0 0.0
    %3139 = vmatpush1.msra.mxu0 0.0
    %3140 = vmatprep.subr.mxu0 0.0
    %3141 = vmatpush1.msra.mxu0 0.0
    %3142 = vmatprep.subr.mxu0 0.0
    %3143 = vmatpush1.msra.mxu0 0.0
    %3144 = vmatprep.subr.mxu0 0.0
    %3145 = vmatpush1.msra.mxu0 0.0
    %3146 = vmatprep.subr.mxu0 0.0
    %3147 = vmatpush1.msra.mxu0 0.0
    %3148 = vmatprep.subr.mxu0 0.0
    %3149 = vmatpush1.msra.mxu0 0.0
    %3150 = vmatprep.subr.mxu0 0.0
    %3151 = vmatpush1.msra.mxu0 0.0
    %3152 = vmatprep.subr.mxu0 0.0
    %3153 = vmatpush1.msra.mxu0 0.0
    %3154 = vmatprep.subr.mxu0 0.0
    %3155 = vmatpush1.msra.mxu0 0.0
    %3156 = vmatprep.subr.mxu0 0.0
    %3157 = vmatpush1.msra.mxu0 0.0
    %3158 = vmatprep.subr.mxu0 0.0
    %3159 = vmatpush1.msra.mxu0 0.0
    %3160 = vmatprep.subr.mxu0 0.0
    %3161 = vmatpush1.msra.mxu0 0.0
    %3162 = vmatprep.subr.mxu0 0.0
    %3163 = vmatpush1.msra.mxu0 0.0
    %3164 = vmatprep.subr.mxu0 0.0
    %3165 = vmatpush1.msra.mxu0 0.0
    %3166 = vmatprep.subr.mxu0 0.0
    %3167 = vmatpush1.msra.mxu0 0.0
    %3168 = vmatprep.subr.mxu0 0.0
    %3169 = vmatpush1.msra.mxu0 0.0
    %3170 = vmatprep.subr.mxu0 0.0
    %3171 = vmatpush1.msra.mxu0 0.0
    %3172 = vmatprep.subr.mxu0 0.0
    %3173 = vmatpush1.msra.mxu0 0.0
    %3174 = vmatprep.subr.mxu0 0.0
    %3175 = vmatpush1.msra.mxu0 0.0
    %3176 = vmatprep.subr.mxu0 0.0
    %3177 = vmatpush1.msra.mxu0 0.0
    %3178 = vmatprep.subr.mxu0 0.0
    %3179 = vmatpush1.msra.mxu0 0.0
    %3180 = vmatprep.subr.mxu0 0.0
    %3181 = vmatpush1.msra.mxu0 0.0
    %3182 = vmatprep.subr.mxu0 0.0
    %3183 = vmatpush1.msra.mxu0 0.0
    %3184 = vmatprep.subr.mxu0 0.0
    %3185 = vmatpush1.msra.mxu0 0.0
    %3186 = vmatprep.subr.mxu0 0.0
    %3187 = vmatpush1.msra.mxu0 0.0
    %3188 = vmatprep.subr.mxu0 0.0
    %3189 = vmatpush1.msra.mxu0 0.0
    %3190 = vmatprep.subr.mxu0 0.0
    %3191 = vmatpush1.msra.mxu0 0.0
    %3192 = vmatprep.subr.mxu0 0.0
    %3193 = vmatpush1.msra.mxu0 0.0
    %3194 = vmatprep.mubr.f32.mxu0 0.0
    %3195 = vmatmul.mubr.f32.gmra.mrb[0].mxu0 %v3128
    %v3196 = vpop.f32.mrb[0].mxu0
    %v3197 = vadd.f32 0.0, %v3196
    %v3198 = vpop.f32.mrb[0].mxu0
    %3199 = vdwg.mxu0
    %v3200 = vmax.f32 %v3122, %v3197
    %v3201 = vadd.f32 %v3200, %v2505
    %v3202 = vmax.f32 %v3201, 0.0
    %s3203 = scalar_lea.vmem %s9, 96
    %v3204 = vld [vmem:[%s3203] sm:$0xff]
    %v3205 = vld [vmem:[%s3203 + $0x8] sm:$0xff]
    %v3206 = vld [vmem:[%s3203 + $0x10] sm:$0xff]
    %v3207 = vld [vmem:[%s3203 + $0x18] sm:$0xff]
    %v3209 = vsel %vm2671, %v3202, 0
    %3211 = vmatprep.subr.mxu0 0.0
    %3212 = vmatpush1.msra.mxu0 %v3204
    %3213 = vmatprep.subr.mxu0 0.0
    %3214 = vmatpush1.msra.mxu0 %v3205
    %3215 = vmatprep.subr.mxu0 0.0
    %3216 = vmatpush1.msra.mxu0 %v3206
    %3217 = vmatprep.subr.mxu0 0.0
    %3218 = vmatpush1.msra.mxu0 %v3207
    %3219 = vmatprep.subr.mxu0 0.0
    %3220 = vmatpush1.msra.mxu0 0.0
    %3221 = vmatprep.subr.mxu0 0.0
    %3222 = vmatpush1.msra.mxu0 0.0
    %3223 = vmatprep.subr.mxu0 0.0
    %3224 = vmatpush1.msra.mxu0 0.0
    %3225 = vmatprep.subr.mxu0 0.0
    %3226 = vmatpush1.msra.mxu0 0.0
    %3227 = vmatprep.subr.mxu0 0.0
    %3228 = vmatpush1.msra.mxu0 0.0
    %3229 = vmatprep.subr.mxu0 0.0
    %3230 = vmatpush1.msra.mxu0 0.0
    %3231 = vmatprep.subr.mxu0 0.0
    %3232 = vmatpush1.msra.mxu0 0.0
    %3233 = vmatprep.subr.mxu0 0.0
    %3234 = vmatpush1.msra.mxu0 0.0
    %3235 = vmatprep.subr.mxu0 0.0
    %3236 = vmatpush1.msra.mxu0 0.0
    %3237 = vmatprep.subr.mxu0 0.0
    %3238 = vmatpush1.msra.mxu0 0.0
    %3239 = vmatprep.subr.mxu0 0.0
    %3240 = vmatpush1.msra.mxu0 0.0
    %3241 = vmatprep.subr.mxu0 0.0
    %3242 = vmatpush1.msra.mxu0 0.0
    %3243 = vmatprep.subr.mxu0 0.0
    %3244 = vmatpush1.msra.mxu0 0.0
    %3245 = vmatprep.subr.mxu0 0.0
    %3246 = vmatpush1.msra.mxu0 0.0
    %3247 = vmatprep.subr.mxu0 0.0
    %3248 = vmatpush1.msra.mxu0 0.0
    %3249 = vmatprep.subr.mxu0 0.0
    %3250 = vmatpush1.msra.mxu0 0.0
    %3251 = vmatprep.subr.mxu0 0.0
    %3252 = vmatpush1.msra.mxu0 0.0
    %3253 = vmatprep.subr.mxu0 0.0
    %3254 = vmatpush1.msra.mxu0 0.0
    %3255 = vmatprep.subr.mxu0 0.0
    %3256 = vmatpush1.msra.mxu0 0.0
    %3257 = vmatprep.subr.mxu0 0.0
    %3258 = vmatpush1.msra.mxu0 0.0
    %3259 = vmatprep.subr.mxu0 0.0
    %3260 = vmatpush1.msra.mxu0 0.0
    %3261 = vmatprep.subr.mxu0 0.0
    %3262 = vmatpush1.msra.mxu0 0.0
    %3263 = vmatprep.subr.mxu0 0.0
    %3264 = vmatpush1.msra.mxu0 0.0
    %3265 = vmatprep.subr.mxu0 0.0
    %3266 = vmatpush1.msra.mxu0 0.0
    %3267 = vmatprep.subr.mxu0 0.0
    %3268 = vmatpush1.msra.mxu0 0.0
    %3269 = vmatprep.subr.mxu0 0.0
    %3270 = vmatpush1.msra.mxu0 0.0
    %3271 = vmatprep.subr.mxu0 0.0
    %3272 = vmatpush1.msra.mxu0 0.0
    %3273 = vmatprep.subr.mxu0 0.0
    %3274 = vmatpush1.msra.mxu0 0.0
    %3275 = vmatprep.mubr.f32.mxu0 0.0
    %3276 = vmatmul.mubr.f32.gmra.mrb[0].mxu0 %v3209
    %v3277 = vpop.f32.mrb[0].mxu0
    %v3278 = vadd.f32 0.0, %v3277
    %v3279 = vpop.f32.mrb[0].mxu0
    %3280 = vdwg.mxu0
    %v3281 = vadd.f32 %v3049, %v3278
    %v3282 = vld [vmem:[%s10] sm:$0x1]
    %v3284 = vlaneseq
    %v3285 = vshrl.u32 %v3284, 7
    %v3286 = vsub.s32 0, %v3285
    %v3287 = vrot.slane %v3282, %v3286
    %v3289 = vadd.f32 %v3281, %v3287
    %v3290 = vmax.f32 %v3289, 0.0
    %v3291 = vld [vmem:[%s11] sm:$0xff]
    %v3292 = vld [vmem:[%s11 + $0x8] sm:$0xff]
    %v3293 = vld [vmem:[%s11 + $0x10] sm:$0xff]
    %v3294 = vld [vmem:[%s11 + $0x18] sm:$0xff]
    %v3295 = vld [vmem:[%s12] sm:$0x1]
    %v3297 = vlaneseq
    %v3298 = vshrl.u32 %v3297, 7
    %v3299 = vsub.s32 0, %v3298
    %v3300 = vrot.slane %v3295, %v3299
    %v3303 = vsel %vm2671, %v3290, 0
    %3305 = vmatprep.subr.mxu0 0.0
    %3306 = vmatpush1.msra.mxu0 %v3291
    %3307 = vmatprep.subr.mxu0 0.0
    %3308 = vmatpush1.msra.mxu0 %v3292
    %3309 = vmatprep.subr.mxu0 0.0
    %3310 = vmatpush1.msra.mxu0 %v3293
    %3311 = vmatprep.subr.mxu0 0.0
    %3312 = vmatpush1.msra.mxu0 %v3294
    %3313 = vmatprep.subr.mxu0 0.0
    %3314 = vmatpush1.msra.mxu0 0.0
    %3315 = vmatprep.subr.mxu0 0.0
    %3316 = vmatpush1.msra.mxu0 0.0
    %3317 = vmatprep.subr.mxu0 0.0
    %3318 = vmatpush1.msra.mxu0 0.0
    %3319 = vmatprep.subr.mxu0 0.0
    %3320 = vmatpush1.msra.mxu0 0.0
    %3321 = vmatprep.subr.mxu0 0.0
    %3322 = vmatpush1.msra.mxu0 0.0
    %3323 = vmatprep.subr.mxu0 0.0
    %3324 = vmatpush1.msra.mxu0 0.0
    %3325 = vmatprep.subr.mxu0 0.0
    %3326 = vmatpush1.msra.mxu0 0.0
    %3327 = vmatprep.subr.mxu0 0.0
    %3328 = vmatpush1.msra.mxu0 0.0
    %3329 = vmatprep.subr.mxu0 0.0
    %3330 = vmatpush1.msra.mxu0 0.0
    %3331 = vmatprep.subr.mxu0 0.0
    %3332 = vmatpush1.msra.mxu0 0.0
    %3333 = vmatprep.subr.mxu0 0.0
    %3334 = vmatpush1.msra.mxu0 0.0
    %3335 = vmatprep.subr.mxu0 0.0
    %3336 = vmatpush1.msra.mxu0 0.0
    %3337 = vmatprep.subr.mxu0 0.0
    %3338 = vmatpush1.msra.mxu0 0.0
    %3339 = vmatprep.subr.mxu0 0.0
    %3340 = vmatpush1.msra.mxu0 0.0
    %3341 = vmatprep.subr.mxu0 0.0
    %3342 = vmatpush1.msra.mxu0 0.0
    %3343 = vmatprep.subr.mxu0 0.0
    %3344 = vmatpush1.msra.mxu0 0.0
    %3345 = vmatprep.subr.mxu0 0.0
    %3346 = vmatpush1.msra.mxu0 0.0
    %3347 = vmatprep.subr.mxu0 0.0
    %3348 = vmatpush1.msra.mxu0 0.0
    %3349 = vmatprep.subr.mxu0 0.0
    %3350 = vmatpush1.msra.mxu0 0.0
    %3351 = vmatprep.subr.mxu0 0.0
    %3352 = vmatpush1.msra.mxu0 0.0
    %3353 = vmatprep.subr.mxu0 0.0
    %3354 = vmatpush1.msra.mxu0 0.0
    %3355 = vmatprep.subr.mxu0 0.0
    %3356 = vmatpush1.msra.mxu0 0.0
    %3357 = vmatprep.subr.mxu0 0.0
    %3358 = vmatpush1.msra.mxu0 0.0
    %3359 = vmatprep.subr.mxu0 0.0
    %3360 = vmatpush1.msra.mxu0 0.0
    %3361 = vmatprep.subr.mxu0 0.0
    %3362 = vmatpush1.msra.mxu0 0.0
    %3363 = vmatprep.subr.mxu0 0.0
    %3364 = vmatpush1.msra.mxu0 0.0
    %3365 = vmatprep.subr.mxu0 0.0
    %3366 = vmatpush1.msra.mxu0 0.0
    %3367 = vmatprep.subr.mxu0 0.0
    %3368 = vmatpush1.msra.mxu0 0.0
    %3369 = vmatprep.mubr.f32.mxu0 0.0
    %3370 = vmatmul.mubr.f32.gmra.mrb[0].mxu0 %v3303
    %v3371 = vpop.f32.mrb[0].mxu0
    %v3372 = vadd.f32 %v3300, %v3371
    %v3373 = vpop.f32.mrb[0].mxu0
    %3374 = vdwg.mxu0
    %v3375 = vmax.f32 %v3372, 0.0
    %v3376 = vld [vmem:[%s13] sm:$0xff]
    %v3377 = vld [vmem:[%s13 + $0x8] sm:$0xff]
    %v3378 = vld [vmem:[%s14] sm:$0x1]
    %v3380 = vlaneseq
    %v3381 = vshrl.u32 %v3380, 7
    %v3382 = vsub.s32 0, %v3381
    %v3383 = vrot.slane %v3378, %v3382
    %v3386 = vsel %vm2350, %v3375, 0
    %3388 = vmatprep.subr.mxu0 0.0
    %3389 = vmatpush1.msra.mxu0 %v3376
    %3390 = vmatprep.subr.mxu0 0.0
    %3391 = vmatpush1.msra.mxu0 %v3377
    %3392 = vmatprep.subr.mxu0 0.0
    %3393 = vmatpush1.msra.mxu0 0.0
    %3394 = vmatprep.subr.mxu0 0.0
    %3395 = vmatpush1.msra.mxu0 0.0
    %3396 = vmatprep.subr.mxu0 0.0
    %3397 = vmatpush1.msra.mxu0 0.0
    %3398 = vmatprep.subr.mxu0 0.0
    %3399 = vmatpush1.msra.mxu0 0.0
    %3400 = vmatprep.subr.mxu0 0.0
    %3401 = vmatpush1.msra.mxu0 0.0
    %3402 = vmatprep.subr.mxu0 0.0
    %3403 = vmatpush1.msra.mxu0 0.0
    %3404 = vmatprep.subr.mxu0 0.0
    %3405 = vmatpush1.msra.mxu0 0.0
    %3406 = vmatprep.subr.mxu0 0.0
    %3407 = vmatpush1.msra.mxu0 0.0
    %3408 = vmatprep.subr.mxu0 0.0
    %3409 = vmatpush1.msra.mxu0 0.0
    %3410 = vmatprep.subr.mxu0 0.0
    %3411 = vmatpush1.msra.mxu0 0.0
    %3412 = vmatprep.subr.mxu0 0.0
    %3413 = vmatpush1.msra.mxu0 0.0
    %3414 = vmatprep.subr.mxu0 0.0
    %3415 = vmatpush1.msra.mxu0 0.0
    %3416 = vmatprep.subr.mxu0 0.0
    %3417 = vmatpush1.msra.mxu0 0.0
    %3418 = vmatprep.subr.mxu0 0.0
    %3419 = vmatpush1.msra.mxu0 0.0
    %3420 = vmatprep.subr.mxu0 0.0
    %3421 = vmatpush1.msra.mxu0 0.0
    %3422 = vmatprep.subr.mxu0 0.0
    %3423 = vmatpush1.msra.mxu0 0.0
    %3424 = vmatprep.subr.mxu0 0.0
    %3425 = vmatpush1.msra.mxu0 0.0
    %3426 = vmatprep.subr.mxu0 0.0
    %3427 = vmatpush1.msra.mxu0 0.0
    %3428 = vmatprep.subr.mxu0 0.0
    %3429 = vmatpush1.msra.mxu0 0.0
    %3430 = vmatprep.subr.mxu0 0.0
    %3431 = vmatpush1.msra.mxu0 0.0
    %3432 = vmatprep.subr.mxu0 0.0
    %3433 = vmatpush1.msra.mxu0 0.0
    %3434 = vmatprep.subr.mxu0 0.0
    %3435 = vmatpush1.msra.mxu0 0.0
    %3436 = vmatprep.subr.mxu0 0.0
    %3437 = vmatpush1.msra.mxu0 0.0
    %3438 = vmatprep.subr.mxu0 0.0
    %3439 = vmatpush1.msra.mxu0 0.0
    %3440 = vmatprep.subr.mxu0 0.0
    %3441 = vmatpush1.msra.mxu0 0.0
    %3442 = vmatprep.subr.mxu0 0.0
    %3443 = vmatpush1.msra.mxu0 0.0
    %3444 = vmatprep.subr.mxu0 0.0
    %3445 = vmatpush1.msra.mxu0 0.0
    %3446 = vmatprep.subr.mxu0 0.0
    %3447 = vmatpush1.msra.mxu0 0.0
    %3448 = vmatprep.subr.mxu0 0.0
    %3449 = vmatpush1.msra.mxu0 0.0
    %3450 = vmatprep.subr.mxu0 0.0
    %3451 = vmatpush1.msra.mxu0 0.0
    %3452 = vmatprep.mubr.f32.mxu0 0.0
    %3453 = vmatmul.mubr.f32.gmra.mrb[0].mxu0 %v3386
    %v3454 = vpop.f32.mrb[0].mxu0
    %v3455 = vadd.f32 %v3383, %v3454
    %v3456 = vpop.f32.mrb[0].mxu0
    %3457 = vdwg.mxu0
    %vm3458 = vcmask 74752
    %v3459 = vsel %vm3458, %v3455, -inf
    %3460 = vmax.xlane.f32.xlu0 %v3459
    %v3461 = vpop.xlane.xlu0 %3460
    %v3462 = vsub.f32 %v3455, %v3461
    %v3463 = vmul.f32 %v3462, 1.442695
    %v3464 = vpow.pop %v3463
    %v3465 = vsel %vm3458, %v3464, 0.0
    %3466 = vadd.xlane.f32.xlu0 %v3465
    %v3467 = vpop.xlane.xlu0 %3466
    %v3468 = vlog2.pop %v3467
    %v3469 = vmul.f32 %v3468, 0.6931472
    %v3470 = vadd.f32 %v3469, %v3461
    %v3471 = vsub.f32 %v3455, %v3470
    %3472 = vst.msk [vmem:[#allocation2] sm:$0x3] %vm3458, %v3471
    // Predicated region
    $region62: #{convnet_forward.1} parent=1 // pred_check
      _
    $region63: #{convnet_forward.1} parent=1 // pred_check_branch
      %3474 = sbr.rel (0) target = $region65
    $region64: #{convnet_forward.1} parent=1 // pred_region
      %s3476 = ssub.s32 32, 32
      %3477 = vsyncadd [#allocation3], %s3476
      %s3479 = sshll.u32 [#allocation2], 4
      %s3480 = int_to_ptr.vmem [resolvable:$true] %s3479
      %3482 = dma.vmem_to_hbm [thread:$0]  %s3480, 32, %s15, [#allocation3]
    $region65: #{convnet_forward.1} parent=1 // pred_fallthru
      _
    // Predicated region
    $region66: #{convnet_forward.1} parent=1 // pred_check
      _
    $region67: #{convnet_forward.1} parent=1 // pred_check_branch
      %3484 = sbr.rel (0) target = $region69
    $region68: #{convnet_forward.1} parent=1 // pred_region
      %3485 = dma.done [#allocation3], 32
    $region69: #{convnet_forward.1} parent=1 // pred_fallthru
      _
    %3486 = vsyncpa [#allocation3], 1

</llo_original>
